<compile_context>
chip_gen: v6e
topology: v6e:2x2x1
jax: 0.10.0
libtpu: 0.0.40
codegen_flags: <defaults>
</compile_context>

<pallas_src>
import functools

import numpy as np
import jax
import jax.numpy as jnp
from jax.experimental import pallas as pl
from jax.experimental.pallas import tpu as pltpu

POOL_SIZES = (1, 2, 3, 6)
_LANE = 128


# ------------------------------------------------------------------ helpers
def _round_up(v, m):
    return ((v + m - 1) // m) * m


def _pick_hw_tile(total, align, target):
    """Largest multiple-of-`align` divisor of `total` that is <= target, else `total`."""
    if total <= target:
        return total
    start = (target // align) * align
    for cand in range(start, 0, -align):
        if total % cand == 0:
            return cand
    return total


def _vmem_limit_bytes(per_step_bytes):
    """Scoped-VMEM request sized from the chosen tiles, capped at 3/4 of physical
    VMEM on the current generation (64 MiB per core on v7x, 128 MiB v5e/v6e)."""
    try:
        phys = int(pltpu.get_tpu_info().vmem_capacity_bytes)
    except Exception:
        phys = 64 * 2 ** 20                      # conservative (v7x) fallback
    cap = (3 * phys) // 4
    return int(min(max(2 * per_step_bytes, 16 * 2 ** 20), cap))


def _maybe_single_buffered(block_shape, index_map):
    """Single-buffer a grid-resident operand (constant index_map); halves its VMEM
    footprint.  Falls back to a plain BlockSpec if pipeline_mode is unsupported."""
    if hasattr(pl, "Buffered"):
        try:
            return pl.BlockSpec(block_shape, index_map, pipeline_mode=pl.Buffered(1))
        except TypeError:
            pass
    return pl.BlockSpec(block_shape, index_map)


# ----------------------------------------------------- spatial operator build
def _adaptive_pool_1d(in_size, k):
    P = np.zeros((k, in_size), np.float32)
    for i in range(k):
        s = (i * in_size) // k
        e = -((-(i + 1) * in_size) // k)          # ceil((i+1)*in/k)
        P[i, s:e] = 1.0 / (e - s)
    return P


def _bilinear_1d(out_size, k):
    M = np.zeros((out_size, k), np.float32)
    if k == 1:
        M[:, 0] = 1.0
        return M
    if out_size == 1:
        M[0, 0] = 1.0
        return M
    for h in range(out_size):
        src = h * (k - 1) / (out_size - 1)        # align_corners=True (as in module)
        i0 = min(int(np.floor(src)), k - 2)
        f = src - i0
        M[h, i0] += 1.0 - f
        M[h, i0 + 1] += f
    return M


def _build_operators(H, W, Cout):
    """PoolT (HW, R), Up (HW, R) and block-diagonal Mask (R, 4*Cout).

    R is padded to a multiple of 128 so every lane dimension is unmasked; padded
    columns of PoolT / Up and padded rows of Mask are zero, so padded bins
    contribute exactly nothing (invariant kept end-to-end)."""
    HW = H * W
    sizes = [k * k for k in POOL_SIZES]
    offs = np.cumsum([0] + sizes)[:-1]
    R = max(_round_up(int(sum(sizes)), _LANE), _LANE)      # 50 -> 128
    CO4 = len(POOL_SIZES) * Cout
    PoolT = np.zeros((HW, R), np.float32)
    Up = np.zeros((HW, R), np.float32)
    Mask = np.zeros((R, CO4), np.float32)
    for b, k in enumerate(POOL_SIZES):
        o = int(offs[b])
        Ph, Pw = _adaptive_pool_1d(H, k), _adaptive_pool_1d(W, k)
        PoolT[:, o:o + k * k] = np.einsum('ih,jw->hwij', Ph, Pw).reshape(HW, k * k)
        Mh, Mw = _bilinear_1d(H, k), _bilinear_1d(W, k)
        Up[:, o:o + k * k] = np.einsum('hi,wj->hwij', Mh, Mw).reshape(HW, k * k)
        Mask[o:o + k * k, b * Cout:(b + 1) * Cout] = 1.0
    return PoolT, Up, Mask, R


def fold_batchnorm(Wc, gamma, beta, mean, var, eps=1e-5):
    """Fold eval-mode BatchNorm into the 1x1 conv weight + bias (per level)."""
    # TODO(synk): training-mode BN (running-stat updates) is not implemented.
    scale = np.asarray(gamma) / np.sqrt(np.asarray(var) + eps)            # (4, Cout)
    w_folded = (np.asarray(Wc) * scale[:, :, None]).astype(np.float32)    # (4, Cout, C)
    bias = (np.asarray(beta) - scale * np.asarray(mean)).astype(np.float32)
    return w_folded, bias


# ---------------------------------------------------------------- kernels
def _pool_accumulate(poolT_ref, x_ref, pooled_ref):
    @pl.when(pl.program_id(2) == 0)
    def _init():
        pooled_ref[...] = jnp.zeros_like(pooled_ref)

    # (T1, R)^T @ (T1, C) -> (R, C), accumulated across the HW ("arbitrary") axis.
    pooled_ref[0, 0] += jax.lax.dot_general(
        poolT_ref[...], x_ref[0],
        dimension_numbers=(((0,), (0,)), ((), ())),
        preferred_element_type=jnp.float32)


def _pool_copy_kernel(poolT_ref, x_ref, pooled_ref, xcopy_ref):
    """Phase 1 (fused path): accumulate the adaptive average pools AND write the
    x passthrough slab of the final concat output, so x is read exactly once."""
    _pool_accumulate(poolT_ref, x_ref, pooled_ref)
    xcopy_ref[0] = x_ref[0]


def _pool_kernel(poolT_ref, x_ref, pooled_ref):
    """Phase 1 (fallback path for C % 128 != 0): pooling only."""
    _pool_accumulate(poolT_ref, x_ref, pooled_ref)


def _upsample_feat_kernel(z_ref, up_ref, prev_ref, out_ref, *, tile):
    """Phase 2 (fused path): bilinear upsample of all four levels in ONE matmul,
    written into the feat column slab of the (aliased) concat buffer."""
    del prev_ref                     # aliased phase-1 output; x slab already written
    start = pl.multiple_of(pl.program_id(1) * tile, tile)
    up = up_ref[pl.ds(start, tile), :]
    out_ref[0] = jnp.dot(up, z_ref[0], preferred_element_type=jnp.float32)


def _upsample_concat_kernel(z_ref, up_ref, x_ref, out_ref, *, tile, C):
    """Phase 2 (fallback path): re-reads x and writes the full [x | feat] tile."""
    start = pl.multiple_of(pl.program_id(1) * tile, tile)
    up = up_ref[pl.ds(start, tile), :]
    out_ref[0, :, :C] = x_ref[0]
    out_ref[0, :, C:] = jnp.dot(up, z_ref[0], preferred_element_type=jnp.float32)


# ---------------------------------------------------------------- core
@functools.partial(jax.jit, static_argnames=("hw_tile", "n_splits", "allow_fused_copy"))
def _pyramid_pooling_core(x2, poolT, up, mask, wt_all, bias_all, *,
                          hw_tile=512, n_splits=2, allow_fused_copy=True):
    """x2: (N, HW, C) f32.  Returns (N, HW, C + 4*Cout) f32 = [x | feat1..feat4]."""
    N, HW, C = x2.shape
    R = poolT.shape[1]
    CO4 = wt_all.shape[1]

    T1 = _pick_hw_tile(HW, 8, hw_tile)
    T2 = _pick_hw_tile(HW, 8, hw_tile)
    n_tiles = HW // T1
    S = n_splits if (n_splits > 1 and n_tiles % n_splits == 0) else 1
    TPS = n_tiles // S                               # HW tiles per split

    # x can be written into the concat output from phase 1 only when the output
    # can be split into lane-aligned column slabs (always true at real PSPNet C).
    fuse_copy = allow_fused_copy and (C % _LANE == 0) and (CO4 == C)

    # -------------------- phase 1: adaptive average pooling (partial sums) ----
    grid1 = (S, N, TPS)
    in_specs1 = [
        pl.BlockSpec((T1, R), lambda s, n, t: (s * TPS + t, 0)),
        pl.BlockSpec((1, T1, C), lambda s, n, t: (n, s * TPS + t, 0)),
    ]
    pooled_spec = pl.BlockSpec((1, 1, R, C), lambda s, n, t: (n, s, 0, 0))
    pooled_shape = jax.ShapeDtypeStruct((N, S, R, C), jnp.float32)
    p1_step = (2 * T1 * R * 4 + 2 * T1 * C * 4 + 2 * R * C * 4
               + (2 * T1 * C * 4 if fuse_copy else 0))
    params1 = pltpu.CompilerParams(
        dimension_semantics=("parallel", "parallel", "arbitrary"),
        vmem_limit_bytes=_vmem_limit_bytes(p1_step))
    cost1 = pl.CostEstimate(
        flops=2 * N * HW * R * C, transcendentals=0,
        bytes_accessed=(N * HW * C * 4 * (2 if fuse_copy else 1)
                        + N * HW * R * 4 + N * S * R * C * 4))

    if fuse_copy:
        pooled_partial, out_buf = pl.pallas_call(
            _pool_copy_kernel,
            out_shape=(pooled_shape,
                       jax.ShapeDtypeStruct((N, HW, C + CO4), jnp.float32)),
            grid=grid1,
            in_specs=in_specs1,
            out_specs=(pooled_spec,
                       pl.BlockSpec((1, T1, C), lambda s, n, t: (n, s * TPS + t, 0))),
            compiler_params=params1,
            cost_estimate=cost1,
        )(poolT, x2)
    else:
        pooled_partial = pl.pallas_call(
            _pool_kernel,
            out_shape=pooled_shape,
            grid=grid1,
            in_specs=in_specs1,
            out_specs=pooled_spec,
            compiler_params=params1,
            cost_estimate=cost1,
        )(poolT, x2)
        out_buf = None

    # --------- folded 1x1 conv + BN bias + ReLU + mask (tiny -> plain XLA) ----
    pooled = jnp.sum(pooled_partial, axis=1)                        # (N, R, C)
    z = jnp.einsum('nrc,ck->nrk', pooled, wt_all,
                   precision=jax.lax.Precision.HIGHEST)             # (N, R, CO4)
    z = jnp.maximum(z + bias_all[None, None, :], 0.0) * mask[None, :, :]

    # -------------------- phase 2: bilinear upsample (+ concat) ---------------
    grid2 = (N, HW // T2)
    z_spec = pl.BlockSpec((1, R, CO4), lambda n, t: (n, 0, 0))
    up_spec = _maybe_single_buffered((HW, R), lambda n, t: (0, 0))  # VMEM-resident

    if fuse_copy:
        p2_step = HW * R * 4 + 2 * R * CO4 * 4 + 2 * T2 * CO4 * 4
        out = pl.pallas_call(
            functools.partial(_upsample_feat_kernel, tile=T2),
            out_shape=jax.ShapeDtypeStruct((N, HW, C + CO4), jnp.float32),
            grid=grid2,
            in_specs=[z_spec, up_spec, pl.BlockSpec(memory_space=pl.ANY)],
            out_specs=pl.BlockSpec((1, T2, CO4), lambda n, t: (n, t, 1)),
            input_output_aliases={2: 0},        # concat buffer: x slab kept in place
            compiler_params=pltpu.CompilerParams(
                dimension_semantics=("parallel", "parallel"),
                vmem_limit_bytes=_vmem_limit_bytes(p2_step)),
            cost_estimate=pl.CostEstimate(
                flops=2 * N * HW * R * CO4, transcendentals=0,
                bytes_accessed=HW * R * 4 + N * R * CO4 * 4 + N * HW * CO4 * 4),
        )(z, up, out_buf)
    else:
        p2_step = (HW * R * 4 + 2 * R * CO4 * 4
                   + 2 * T2 * (C + CO4) * 4 + 2 * T2 * C * 4)
        out = pl.pallas_call(
            functools.partial(_upsample_concat_kernel, tile=T2, C=C),
            out_shape=jax.ShapeDtypeStruct((N, HW, C + CO4), jnp.float32),
            grid=grid2,
            in_specs=[z_spec, up_spec,
                      pl.BlockSpec((1, T2, C), lambda n, t: (n, t, 0))],
            out_specs=pl.BlockSpec((1, T2, C + CO4), lambda n, t: (n, t, 0)),
            compiler_params=pltpu.CompilerParams(
                dimension_semantics=("parallel", "parallel"),
                vmem_limit_bytes=_vmem_limit_bytes(p2_step)),
            cost_estimate=pl.CostEstimate(
                flops=2 * N * HW * R * CO4, transcendentals=0,
                bytes_accessed=(HW * R * 4 + N * R * CO4 * 4
                                + N * HW * (2 * C + CO4) * 4)),
        )(z, up, x2)

    return out


# ---------------------------------------------------------------- wrappers
def pyramid_pooling_nhwc(x_nhwc, w_folded, bias_folded, *, hw_tile=512, n_splits=2):
    """Pyramid pooling on NHWC input: returns (N, H, W, C + 4*(C//4))."""
    N, H, W, C = x_nhwc.shape
    n_levels = len(POOL_SIZES)
    w_folded = np.asarray(w_folded, np.float32)                   # (4, Cout, C)
    Cout = w_folded.shape[1]
    PoolT, Up, Mask, _ = _build_operators(H, W, Cout)
    wt_all = np.concatenate([w_folded[b].T for b in range(n_levels)], axis=1)
    bias_all = np.asarray(bias_folded, np.float32).reshape(n_levels * Cout)

    x2 = x_nhwc.reshape(N, H * W, C).astype(jnp.float32)
    args = (x2, jnp.asarray(PoolT), jnp.asarray(Up), jnp.asarray(Mask),
            jnp.asarray(wt_all), jnp.asarray(bias_all))
    try:
        out2 = _pyramid_pooling_core(*args, hw_tile=hw_tile, n_splits=n_splits,
                                     allow_fused_copy=True)
    except Exception:
        # Safety net: fall back to the always-valid (x re-read) phase-2 layout.
        out2 = _pyramid_pooling_core(*args, hw_tile=hw_tile, n_splits=n_splits,
                                     allow_fused_copy=False)
    return out2.reshape(N, H, W, -1)


def pyramid_pooling_nchw(x_nchw, w_folded, bias_folded):
    """Matches the PyTorch module's NCHW interface.  NOTE: in a real NHWC model
    call pyramid_pooling_nhwc directly and skip these two transposes."""
    x_nhwc = jnp.transpose(x_nchw, (0, 2, 3, 1))
    out = pyramid_pooling_nhwc(x_nhwc, w_folded, bias_folded)
    return jnp.transpose(out, (0, 3, 1, 2))


# ---------------------------------------------------------------- reference
def ref_forward(x, w_folded, bias):
    """Direct per-pixel PSPNet pyramid-pooling semantics (numpy, f32)."""
    N, C, H, W = x.shape
    Cout = w_folded.shape[1]
    feats = [x.astype(np.float32)]
    for b, k in enumerate(POOL_SIZES):
        pooled = np.zeros((N, C, k, k), np.float32)
        for i in range(k):
            hs, he = (i * H) // k, -((-(i + 1) * H) // k)
            for j in range(k):
                ws, we = (j * W) // k, -((-(j + 1) * W) // k)
                pooled[:, :, i, j] = x[:, :, hs:he, ws:we].mean(axis=(2, 3))
        z = np.einsum('oc,ncij->noij', w_folded[b], pooled) \
            + bias[b][None, :, None, None]
        z = np.maximum(z, 0.0)
        if k == 1:
            feat = np.broadcast_to(z[:, :, 0:1, 0:1], (N, Cout, H, W)).astype(np.float32)
        else:
            feat = np.zeros((N, Cout, H, W), np.float32)
            for h in range(H):
                sy = h * (k - 1) / (H - 1) if H > 1 else 0.0
                y0 = min(int(np.floor(sy)), k - 2)
                fy = sy - y0
                for w in range(W):
                    sx = w * (k - 1) / (W - 1) if W > 1 else 0.0
                    x0 = min(int(np.floor(sx)), k - 2)
                    fx = sx - x0
                    feat[:, :, h, w] = (z[:, :, y0, x0] * (1 - fy) * (1 - fx)
                                        + z[:, :, y0, x0 + 1] * (1 - fy) * fx
                                        + z[:, :, y0 + 1, x0] * fy * (1 - fx)
                                        + z[:, :, y0 + 1, x0 + 1] * fy * fx)
        feats.append(feat)
    return np.concatenate(feats, axis=1)


if __name__ == "__main__":
    # Small-but-aligned test: C multiple of 128 exercises the fused (single-read)
    # path; HW/tile split of 2 exercises the dual-TensorCore phase-1 grid.
    N, C, H, W = 2, 128, 32, 32
    Cout = C // 4
    key = jax.random.PRNGKey(0)
    kx, kw = jax.random.split(key)
    x = jax.random.normal(kx, (N, C, H, W), dtype=jnp.float32)

    # deterministic synthetic parameters (4 branches of 1x1 conv + BatchNorm)
    Wc = np.asarray(jax.random.normal(kw, (4, Cout, C), dtype=jnp.float32)) * 0.1
    idx = np.arange(4 * Cout, dtype=np.float32).reshape(4, Cout)
    gamma = 1.0 + 0.05 * idx
    beta = 0.01 * idx
    mean = 0.02 * (idx - 3.0)
    var = 1.0 + 0.1 * idx
    w_folded, bias = fold_batchnorm(Wc, gamma, beta, mean, var, eps=1e-5)

    out = pyramid_pooling_nchw(x, w_folded, bias)
    out = jax.block_until_ready(out)

    ref = ref_forward(np.asarray(x, np.float32), w_folded, bias)

    assert out.shape == (N, C + 4 * Cout, H, W)
    err = np.abs(np.asarray(out) - ref).max()
    # All-f32 data path; observed error is ~1e-5.  Tolerance leaves margin for
    # per-generation MXU f32 pass differences.
    assert np.allclose(np.asarray(out), ref, rtol=1e-3, atol=1e-3), f"max err {err}"
    print("KERNEL_OK")
</pallas_src>

<mosaic_0001>
module attributes {stable_mosaic.version = 11 : i64} {
  func.func @_upsample_feat_kernel(%arg0: i32, %arg1: i32, %arg2: memref<1x128x128xf32, #tpu.memory_space<vmem>>, %arg3: memref<1024x128xf32, #tpu.memory_space<vmem>>, %arg4: memref<2x1024x256xf32, #tpu.memory_space<any>>, %arg5: memref<1x512x128xf32, #tpu.memory_space<vmem>>) attributes {dimension_semantics = [#tpu.dimension_semantics<parallel>, #tpu.dimension_semantics<parallel>], iteration_bounds = array<i64: 2, 2>, scalar_prefetch = 0 : i64, scratch_operands = 0 : i64, tpu.core_type = #tpu.core_type<tc>, window_params = [{transform_indices = @transform_0, window_bounds = array<i64: 1, 128, 128>}, {pipeline_mode = #tpu.pipeline_mode<synchronous>, transform_indices = @transform_1, window_bounds = array<i64: 1024, 128>}, {}, {transform_indices = @transform_3, window_bounds = array<i64: 1, 512, 128>}]} {
    %c512_i32 = arith.constant 512 : i32
    %0 = arith.muli %arg1, %c512_i32 : i32
    %1 = tpu.assume_multiple %0, 512 : i32
    %2 = arith.index_cast %1 : i32 to index
    %c0 = arith.constant 0 : index
    %3 = vector.load %arg3[%2, %c0] : memref<1024x128xf32, #tpu.memory_space<vmem>>, vector<512x128xf32>
    %c0_0 = arith.constant 0 : index
    %c0_1 = arith.constant 0 : index
    %c0_2 = arith.constant 0 : index
    %4 = vector.load %arg2[%c0_0, %c0_1, %c0_2] : memref<1x128x128xf32, #tpu.memory_space<vmem>>, vector<1x128x128xf32>
    %5 = vector.shape_cast %4 : vector<1x128x128xf32> to vector<128x128xf32>
    %cst = arith.constant dense<0.000000e+00> : vector<512x128xf32>
    %6 = tpu.matmul %3, %5, %cst {dimension_numbers = #tpu.dot_dimension_numbers<[1], [0], [0], [1], [0, 0, 1, 1], [], []>} : vector<512x128xf32>, vector<128x128xf32>, vector<512x128xf32> -> vector<512x128xf32>
    %c0_3 = arith.constant 0 : index
    %c0_4 = arith.constant 0 : index
    %c0_5 = arith.constant 0 : index
    %7 = vector.load %arg5[%c0_3, %c0_4, %c0_5] : memref<1x512x128xf32, #tpu.memory_space<vmem>>, vector<1x512x128xf32>
    %8 = vector.shape_cast %7 : vector<1x512x128xf32> to vector<512x128xf32>
    %9 = vector.shape_cast %6 : vector<512x128xf32> to vector<1x512x128xf32>
    tpu.vector_store %arg5[%c0_3, %c0_4, %c0_5], %9 {strides = array<i32>} : memref<1x512x128xf32, #tpu.memory_space<vmem>>, vector<1x512x128xf32>,
    return
  }
  func.func @transform_0(%arg0: i32, %arg1: i32) -> (i32, i32, i32) {
    %c0_i32 = arith.constant 0 : i32
    %c0_i32_0 = arith.constant 0 : i32
    %c0_i32_1 = arith.constant 0 : i32
    return %arg0, %c0_i32, %c0_i32_0 : i32, i32, i32
  }
  func.func @transform_1(%arg0: i32, %arg1: i32) -> (i32, i32) {
    %c0_i32 = arith.constant 0 : i32
    %c0_i32_0 = arith.constant 0 : i32
    %c0_i32_1 = arith.constant 0 : i32
    return %c0_i32, %c0_i32_0 : i32, i32
  }
  func.func @transform_3(%arg0: i32, %arg1: i32) -> (i32, i32, i32) {
    %c1_i32 = arith.constant 1 : i32
    %c0_i32 = arith.constant 0 : i32
    return %arg0, %arg1, %c1_i32 : i32, i32, i32
  }
}

module attributes {stable_mosaic.version = 11 : i64} {
  func.func @_pool_copy_kernel(%arg0: i32, %arg1: i32, %arg2: i32, %arg3: memref<512x128xf32, #tpu.memory_space<vmem>>, %arg4: memref<1x512x128xf32, #tpu.memory_space<vmem>>, %arg5: memref<1x1x128x128xf32, #tpu.memory_space<vmem>>, %arg6: memref<1x512x128xf32, #tpu.memory_space<vmem>>) attributes {dimension_semantics = [#tpu.dimension_semantics<parallel>, #tpu.dimension_semantics<parallel>, #tpu.dimension_semantics<arbitrary>], iteration_bounds = array<i64: 2, 2, 1>, scalar_prefetch = 0 : i64, scratch_operands = 0 : i64, tpu.core_type = #tpu.core_type<tc>, window_params = [{transform_indices = @transform_0, window_bounds = array<i64: 512, 128>}, {transform_indices = @transform_1, window_bounds = array<i64: 1, 512, 128>}, {transform_indices = @transform_2, window_bounds = array<i64: 1, 1, 128, 128>}, {transform_indices = @transform_3, window_bounds = array<i64: 1, 512, 128>}]} {
    %c0_i32 = arith.constant 0 : i32
    %0 = arith.cmpi eq, %arg2, %c0_i32 : i32
    %1 = arith.extui %0 : i1 to i32
    %c0_i32_0 = arith.constant 0 : i32
    %2 = arith.cmpi ne, %1, %c0_i32_0 : i32
    scf.if %2 {
      %cst_19 = arith.constant 0.000000e+00 : f32
      %18 = vector.broadcast %cst_19 : f32 to vector<1x1x128x128xf32>
      %c0_20 = arith.constant 0 : index
      %c0_21 = arith.constant 0 : index
      %c0_22 = arith.constant 0 : index
      %c0_23 = arith.constant 0 : index
      %19 = vector.load %arg5[%c0_20, %c0_21, %c0_22, %c0_23] : memref<1x1x128x128xf32, #tpu.memory_space<vmem>>, vector<1x1x128x128xf32>
      tpu.vector_store %arg5[%c0_20, %c0_21, %c0_22, %c0_23], %18 {strides = array<i32>} : memref<1x1x128x128xf32, #tpu.memory_space<vmem>>, vector<1x1x128x128xf32>,
    } else {
    }
    %c0 = arith.constant 0 : index
    %c0_1 = arith.constant 0 : index
    %c0_2 = arith.constant 0 : index
    %c0_3 = arith.constant 0 : index
    %3 = vector.load %arg5[%c0, %c0_1, %c0_2, %c0_3] : memref<1x1x128x128xf32, #tpu.memory_space<vmem>>, vector<1x1x128x128xf32>
    %4 = vector.shape_cast %3 : vector<1x1x128x128xf32> to vector<128x128xf32>
    %c0_4 = arith.constant 0 : index
    %c0_5 = arith.constant 0 : index
    %5 = vector.load %arg3[%c0_4, %c0_5] : memref<512x128xf32, #tpu.memory_space<vmem>>, vector<512x128xf32>
    %c0_6 = arith.constant 0 : index
    %c0_7 = arith.constant 0 : index
    %c0_8 = arith.constant 0 : index
    %6 = vector.load %arg4[%c0_6, %c0_7, %c0_8] : memref<1x512x128xf32, #tpu.memory_space<vmem>>, vector<1x512x128xf32>
    %7 = vector.shape_cast %6 : vector<1x512x128xf32> to vector<512x128xf32>
    %cst = arith.constant dense<0.000000e+00> : vector<128x128xf32>
    %8 = tpu.matmul %5, %7, %cst {dimension_numbers = #tpu.dot_dimension_numbers<[0], [0], [1], [1], [0, 1, 1, 1], [], []>} : vector<512x128xf32>, vector<512x128xf32>, vector<128x128xf32> -> vector<128x128xf32>
    %9 = arith.addf %4, %8 : vector<128x128xf32>
    %c0_9 = arith.constant 0 : index
    %c0_10 = arith.constant 0 : index
    %c0_11 = arith.constant 0 : index
    %c0_12 = arith.constant 0 : index
    %10 = vector.load %arg5[%c0_9, %c0_10, %c0_11, %c0_12] : memref<1x1x128x128xf32, #tpu.memory_space<vmem>>, vector<1x1x128x128xf32>
    %11 = vector.shape_cast %10 : vector<1x1x128x128xf32> to vector<128x128xf32>
    %12 = vector.shape_cast %9 : vector<128x128xf32> to vector<1x1x128x128xf32>
    tpu.vector_store %arg5[%c0_9, %c0_10, %c0_11, %c0_12], %12 {strides = array<i32>} : memref<1x1x128x128xf32, #tpu.memory_space<vmem>>, vector<1x1x128x128xf32>,
    %c0_13 = arith.constant 0 : index
    %c0_14 = arith.constant 0 : index
    %c0_15 = arith.constant 0 : index
    %13 = vector.load %arg4[%c0_13, %c0_14, %c0_15] : memref<1x512x128xf32, #tpu.memory_space<vmem>>, vector<1x512x128xf32>
    %14 = vector.shape_cast %13 : vector<1x512x128xf32> to vector<512x128xf32>
    %c0_16 = arith.constant 0 : index
    %c0_17 = arith.constant 0 : index
    %c0_18 = arith.constant 0 : index
    %15 = vector.load %arg6[%c0_16, %c0_17, %c0_18] : memref<1x512x128xf32, #tpu.memory_space<vmem>>, vector<1x512x128xf32>
    %16 = vector.shape_cast %15 : vector<1x512x128xf32> to vector<512x128xf32>
    %17 = vector.shape_cast %14 : vector<512x128xf32> to vector<1x512x128xf32>
    tpu.vector_store %arg6[%c0_16, %c0_17, %c0_18], %17 {strides = array<i32>} : memref<1x512x128xf32, #tpu.memory_space<vmem>>, vector<1x512x128xf32>,
    return
  }
  func.func @transform_0(%arg0: i32, %arg1: i32, %arg2: i32) -> (i32, i32) {
    %c1_i32 = arith.constant 1 : i32
    %0 = arith.muli %arg0, %c1_i32 : i32
    %1 = arith.addi %0, %arg2 : i32
    %c0_i32 = arith.constant 0 : i32
    %c0_i32_0 = arith.constant 0 : i32
    return %1, %c0_i32 : i32, i32
  }
  func.func @transform_1(%arg0: i32, %arg1: i32, %arg2: i32) -> (i32, i32, i32) {
    %c1_i32 = arith.constant 1 : i32
    %0 = arith.muli %arg0, %c1_i32 : i32
    %1 = arith.addi %0, %arg2 : i32
    %c0_i32 = arith.constant 0 : i32
    %c0_i32_0 = arith.constant 0 : i32
    return %arg1, %1, %c0_i32 : i32, i32, i32
  }
  func.func @transform_2(%arg0: i32, %arg1: i32, %arg2: i32) -> (i32, i32, i32, i32) {
    %c0_i32 = arith.constant 0 : i32
    %c0_i32_0 = arith.constant 0 : i32
    %c0_i32_1 = arith.constant 0 : i32
    return %arg1, %arg0, %c0_i32, %c0_i32_0 : i32, i32, i32, i32
  }
  func.func @transform_3(%arg0: i32, %arg1: i32, %arg2: i32) -> (i32, i32, i32) {
    %c1_i32 = arith.constant 1 : i32
    %0 = arith.muli %arg0, %c1_i32 : i32
    %1 = arith.addi %0, %arg2 : i32
    %c0_i32 = arith.constant 0 : i32
    %c0_i32_0 = arith.constant 0 : i32
    return %arg1, %1, %c0_i32 : i32, i32, i32
  }
}

module attributes {stable_mosaic.version = 11 : i64} {
  func.func @_pool_kernel(%arg0: i32, %arg1: i32, %arg2: i32, %arg3: memref<512x128xf32, #tpu.memory_space<vmem>>, %arg4: memref<1x512x128xf32, #tpu.memory_space<vmem>>, %arg5: memref<1x1x128x128xf32, #tpu.memory_space<vmem>>) attributes {dimension_semantics = [#tpu.dimension_semantics<parallel>, #tpu.dimension_semantics<parallel>, #tpu.dimension_semantics<arbitrary>], iteration_bounds = array<i64: 2, 2, 1>, scalar_prefetch = 0 : i64, scratch_operands = 0 : i64, tpu.core_type = #tpu.core_type<tc>, window_params = [{transform_indices = @transform_0, window_bounds = array<i64: 512, 128>}, {transform_indices = @transform_1, window_bounds = array<i64: 1, 512, 128>}, {transform_indices = @transform_2, window_bounds = array<i64: 1, 1, 128, 128>}]} {
    %c0_i32 = arith.constant 0 : i32
    %0 = arith.cmpi eq, %arg2, %c0_i32 : i32
    %1 = arith.extui %0 : i1 to i32
    %c0_i32_0 = arith.constant 0 : i32
    %2 = arith.cmpi ne, %1, %c0_i32_0 : i32
    scf.if %2 {
      %cst_13 = arith.constant 0.000000e+00 : f32
      %13 = vector.broadcast %cst_13 : f32 to vector<1x1x128x128xf32>
      %c0_14 = arith.constant 0 : index
      %c0_15 = arith.constant 0 : index
      %c0_16 = arith.constant 0 : index
      %c0_17 = arith.constant 0 : index
      %14 = vector.load %arg5[%c0_14, %c0_15, %c0_16, %c0_17] : memref<1x1x128x128xf32, #tpu.memory_space<vmem>>, vector<1x1x128x128xf32>
      tpu.vector_store %arg5[%c0_14, %c0_15, %c0_16, %c0_17], %13 {strides = array<i32>} : memref<1x1x128x128xf32, #tpu.memory_space<vmem>>, vector<1x1x128x128xf32>,
    } else {
    }
    %c0 = arith.constant 0 : index
    %c0_1 = arith.constant 0 : index
    %c0_2 = arith.constant 0 : index
    %c0_3 = arith.constant 0 : index
    %3 = vector.load %arg5[%c0, %c0_1, %c0_2, %c0_3] : memref<1x1x128x128xf32, #tpu.memory_space<vmem>>, vector<1x1x128x128xf32>
    %4 = vector.shape_cast %3 : vector<1x1x128x128xf32> to vector<128x128xf32>
    %c0_4 = arith.constant 0 : index
    %c0_5 = arith.constant 0 : index
    %5 = vector.load %arg3[%c0_4, %c0_5] : memref<512x128xf32, #tpu.memory_space<vmem>>, vector<512x128xf32>
    %c0_6 = arith.constant 0 : index
    %c0_7 = arith.constant 0 : index
    %c0_8 = arith.constant 0 : index
    %6 = vector.load %arg4[%c0_6, %c0_7, %c0_8] : memref<1x512x128xf32, #tpu.memory_space<vmem>>, vector<1x512x128xf32>
    %7 = vector.shape_cast %6 : vector<1x512x128xf32> to vector<512x128xf32>
    %cst = arith.constant dense<0.000000e+00> : vector<128x128xf32>
    %8 = tpu.matmul %5, %7, %cst {dimension_numbers = #tpu.dot_dimension_numbers<[0], [0], [1], [1], [0, 1, 1, 1], [], []>} : vector<512x128xf32>, vector<512x128xf32>, vector<128x128xf32> -> vector<128x128xf32>
    %9 = arith.addf %4, %8 : vector<128x128xf32>
    %c0_9 = arith.constant 0 : index
    %c0_10 = arith.constant 0 : index
    %c0_11 = arith.constant 0 : index
    %c0_12 = arith.constant 0 : index
    %10 = vector.load %arg5[%c0_9, %c0_10, %c0_11, %c0_12] : memref<1x1x128x128xf32, #tpu.memory_space<vmem>>, vector<1x1x128x128xf32>
    %11 = vector.shape_cast %10 : vector<1x1x128x128xf32> to vector<128x128xf32>
    %12 = vector.shape_cast %9 : vector<128x128xf32> to vector<1x1x128x128xf32>
    tpu.vector_store %arg5[%c0_9, %c0_10, %c0_11, %c0_12], %12 {strides = array<i32>} : memref<1x1x128x128xf32, #tpu.memory_space<vmem>>, vector<1x1x128x128xf32>,
    return
  }
  func.func @transform_0(%arg0: i32, %arg1: i32, %arg2: i32) -> (i32, i32) {
    %c1_i32 = arith.constant 1 : i32
    %0 = arith.muli %arg0, %c1_i32 : i32
    %1 = arith.addi %0, %arg2 : i32
    %c0_i32 = arith.constant 0 : i32
    %c0_i32_0 = arith.constant 0 : i32
    return %1, %c0_i32 : i32, i32
  }
  func.func @transform_1(%arg0: i32, %arg1: i32, %arg2: i32) -> (i32, i32, i32) {
    %c1_i32 = arith.constant 1 : i32
    %0 = arith.muli %arg0, %c1_i32 : i32
    %1 = arith.addi %0, %arg2 : i32
    %c0_i32 = arith.constant 0 : i32
    %c0_i32_0 = arith.constant 0 : i32
    return %arg1, %1, %c0_i32 : i32, i32, i32
  }
  func.func @transform_2(%arg0: i32, %arg1: i32, %arg2: i32) -> (i32, i32, i32, i32) {
    %c0_i32 = arith.constant 0 : i32
    %c0_i32_0 = arith.constant 0 : i32
    %c0_i32_1 = arith.constant 0 : i32
    return %arg1, %arg0, %c0_i32, %c0_i32_0 : i32, i32, i32, i32
  }
}

module attributes {stable_mosaic.version = 11 : i64} {
  func.func @_upsample_concat_kernel(%arg0: i32, %arg1: i32, %arg2: memref<1x128x128xf32, #tpu.memory_space<vmem>>, %arg3: memref<1024x128xf32, #tpu.memory_space<vmem>>, %arg4: memref<1x512x128xf32, #tpu.memory_space<vmem>>, %arg5: memref<1x512x256xf32, #tpu.memory_space<vmem>>) attributes {dimension_semantics = [#tpu.dimension_semantics<parallel>, #tpu.dimension_semantics<parallel>], iteration_bounds = array<i64: 2, 2>, scalar_prefetch = 0 : i64, scratch_operands = 0 : i64, tpu.core_type = #tpu.core_type<tc>, window_params = [{transform_indices = @transform_0, window_bounds = array<i64: 1, 128, 128>}, {pipeline_mode = #tpu.pipeline_mode<synchronous>, transform_indices = @transform_1, window_bounds = array<i64: 1024, 128>}, {transform_indices = @transform_2, window_bounds = array<i64: 1, 512, 128>}, {transform_indices = @transform_3, window_bounds = array<i64: 1, 512, 256>}]} {
    %c512_i32 = arith.constant 512 : i32
    %0 = arith.muli %arg1, %c512_i32 : i32
    %1 = tpu.assume_multiple %0, 512 : i32
    %2 = arith.index_cast %1 : i32 to index
    %c0 = arith.constant 0 : index
    %3 = vector.load %arg3[%2, %c0] : memref<1024x128xf32, #tpu.memory_space<vmem>>, vector<512x128xf32>
    %c0_0 = arith.constant 0 : index
    %c0_1 = arith.constant 0 : index
    %c0_2 = arith.constant 0 : index
    %4 = vector.load %arg4[%c0_0, %c0_1, %c0_2] : memref<1x512x128xf32, #tpu.memory_space<vmem>>, vector<1x512x128xf32>
    %5 = vector.shape_cast %4 : vector<1x512x128xf32> to vector<512x128xf32>
    %c0_3 = arith.constant 0 : index
    %c0_4 = arith.constant 0 : index
    %c0_5 = arith.constant 0 : index
    %6 = vector.load %arg5[%c0_3, %c0_4, %c0_5] : memref<1x512x256xf32, #tpu.memory_space<vmem>>, vector<1x512x128xf32>
    %7 = vector.shape_cast %6 : vector<1x512x128xf32> to vector<512x128xf32>
    %8 = vector.shape_cast %5 : vector<512x128xf32> to vector<1x512x128xf32>
    tpu.vector_store %arg5[%c0_3, %c0_4, %c0_5], %8 {strides = array<i32>} : memref<1x512x256xf32, #tpu.memory_space<vmem>>, vector<1x512x128xf32>,
    %c0_6 = arith.constant 0 : index
    %c0_7 = arith.constant 0 : index
    %c0_8 = arith.constant 0 : index
    %9 = vector.load %arg2[%c0_6, %c0_7, %c0_8] : memref<1x128x128xf32, #tpu.memory_space<vmem>>, vector<1x128x128xf32>
    %10 = vector.shape_cast %9 : vector<1x128x128xf32> to vector<128x128xf32>
    %cst = arith.constant dense<0.000000e+00> : vector<512x128xf32>
    %11 = tpu.matmul %3, %10, %cst {dimension_numbers = #tpu.dot_dimension_numbers<[1], [0], [0], [1], [0, 0, 1, 1], [], []>} : vector<512x128xf32>, vector<128x128xf32>, vector<512x128xf32> -> vector<512x128xf32>
    %c0_9 = arith.constant 0 : index
    %c0_10 = arith.constant 0 : index
    %c128 = arith.constant 128 : index
    %12 = vector.load %arg5[%c0_9, %c0_10, %c128] : memref<1x512x256xf32, #tpu.memory_space<vmem>>, vector<1x512x128xf32>
    %13 = vector.shape_cast %12 : vector<1x512x128xf32> to vector<512x128xf32>
    %14 = vector.shape_cast %11 : vector<512x128xf32> to vector<1x512x128xf32>
    tpu.vector_store %arg5[%c0_9, %c0_10, %c128], %14 {strides = array<i32>} : memref<1x512x256xf32, #tpu.memory_space<vmem>>, vector<1x512x128xf32>,
    return
  }
  func.func @transform_0(%arg0: i32, %arg1: i32) -> (i32, i32, i32) {
    %c0_i32 = arith.constant 0 : i32
    %c0_i32_0 = arith.constant 0 : i32
    %c0_i32_1 = arith.constant 0 : i32
    return %arg0, %c0_i32, %c0_i32_0 : i32, i32, i32
  }
  func.func @transform_1(%arg0: i32, %arg1: i32) -> (i32, i32) {
    %c0_i32 = arith.constant 0 : i32
    %c0_i32_0 = arith.constant 0 : i32
    %c0_i32_1 = arith.constant 0 : i32
    return %c0_i32, %c0_i32_0 : i32, i32
  }
  func.func @transform_2(%arg0: i32, %arg1: i32) -> (i32, i32, i32) {
    %c0_i32 = arith.constant 0 : i32
    %c0_i32_0 = arith.constant 0 : i32
    return %arg0, %arg1, %c0_i32 : i32, i32, i32
  }
  func.func @transform_3(%arg0: i32, %arg1: i32) -> (i32, i32, i32) {
    %c0_i32 = arith.constant 0 : i32
    %c0_i32_0 = arith.constant 0 : i32
    return %arg0, %arg1, %c0_i32 : i32, i32, i32
  }
}

</mosaic_0001>

<llo_original>
// kernel: _pyramid_pooling_core.3
$region0: #{_pyramid_pooling_core.3}
  #allocation0 [shape = 'u32[]', space=smem, size = 0x4, offset = 0x4, fixed_abs, tag = 'smem constant byte address 0x4 - core index']
  #allocation1 [shape = 'u32[144,128]{1,0:T(1,128)}', space=vmem, size = 0x12000, scoped, tag = 'internal scratch']
  %s0 = inlined_call_operand.vmem [shape: f32[2,128,128], index: 0, kind: input, shape index: {}]
  %s1 = inlined_call_operand.vmem [shape: f32[1024,128], index: 1, kind: input, shape index: {}]
  %s2 = inlined_call_operand.hbm [shape: f32[2,1024,256], index: 2, kind: input, shape index: {}, may-alias: {2,3}]
  %s3 = inlined_call_operand.hbm [shape: f32[2,1024,256], index: 3, kind: output, shape index: {}, may-alias: {2,3}]
  %s4 = sld [smem:[#allocation0]]
  $region41: #{_pyramid_pooling_core.3} parent=0
    _
  %s6 = ssub.s32 1, %s4
  %s7 = scalar_select 0, %s6, %s4
  $region1: #{_pyramid_pooling_core.3} parent=0
    #allocation2 [shape = 'u8[524288]{0}', space=vmem, size = 0x80000, scoped, tag = 'output window, operand 0']
    #allocation3 [shape = 's32[2]{0}', space=sflag, size = 0x8, scoped, tag = 'scoped memory for _pyramid_pooling_core.3']
    %8 = vsyncpa [#allocation3], 0
    %s9 = scalar_lea.sflag [#allocation3], 1
    %10 = vsyncpa %s9, 0
    loop: start=0, step=1, limit=6
    $region2: #{_pyramid_pooling_core.3} parent=1 // loop_pre_header
      _
    $region3: #{_pyramid_pooling_core.3} parent=1 // loop_header
      %s12 = sphi 0, %s16
      %p13 = scmp.ge.s32.totalorder %s12, 6
      %s19 = sphi 0, %s31
      %s20 = sphi 0, %s27
      %s21 = sphi 0, %s19
      %s22 = sphi 0, %s20
      %s23 = sphi 0, %s21
      %s24 = sphi 0, %s22
      %s34 = sphi 0, %s36
      %s37 = sphi 0, %s34
      %s38 = sphi 0, %s37
      %s54 = sphi 0, %s38
      %s58 = sphi 0, %s58
      %s60 = sphi 0, %s58
      %s61 = sphi 0, %s60
      %s75 = sphi 0, %s61
      %s83 = sphi 0, %s85
      %s86 = sphi 0, %s83
      %s87 = sphi 0, %s86
      %s103 = sphi 0, %s87
    $region4: #{_pyramid_pooling_core.3} parent=1 // loop_header_branch
      %15 = sbr.rel (%p13) target = $region8
    $region5: #{_pyramid_pooling_core.3} parent=1 // loop_body
      %s17 = ssub.s32 %s12, 1
      %s18 = ssub.s32 %s12, 2
      %s25 = sadd.s32 1, %s20
      %p26 = scmp.ge.s32.totalorder %s25, 2
      %s27 = scalar_select %p26, 0, %s25
      %s28 = sadd.s32 1, %s19
      %s29 = scalar_select %p26, %s28, %s19
      %p30 = scmp.ge.s32.totalorder %s29, 2
      %s31 = scalar_select %p30, 0, %s29
      %s32 = ssub.s32 %s19, %s31
      %p33 = scmp.eq.s32.totalorder %s32, 0
      %s35 = sadd.s32 %s34, 1
      %s36 = scalar_select %p33, %s34, %s35
      %p39 = pneg %p33
      %p40 = scmp.eq.s32.totalorder %s12, 3
      %p41 = por %p39, %p40
      %p42 = scmp.ne.s32.totalorder %s34, %s37
      %p43 = scmp.eq.s32.totalorder %s12, 0
      %p44 = por %p42, %p43
      %p45 = scmp.ne.s32.totalorder %s34, %s37
      %p46 = scmp.eq.s32.totalorder %s17, 3
      %p47 = por %p45, %p46
      %p48 = scmp.ne.s32.totalorder %s37, %s38
      %p49 = scmp.eq.s32.totalorder %s17, 0
      %p50 = por %p48, %p49
      %p51 = scmp.ne.s32.totalorder %s37, %s38
      %p52 = scmp.eq.s32.totalorder %s18, 3
      %p53 = por %p51, %p52
      %p55 = scmp.ne.s32.totalorder %s38, %s54
      %p56 = scmp.eq.s32.totalorder %s18, 0
      %p57 = por %p55, %p56
      %s59 = sadd.s32 %s58, 1
      %p62 = scmp.eq.s32.totalorder %s12, 3
      %p63 = scmp.ne.s32.totalorder %s58, %s60
      %p64 = scmp.eq.s32.totalorder %s12, 0
      %p65 = por %p63, %p64
      %p66 = scmp.ne.s32.totalorder %s58, %s60
      %p67 = scmp.eq.s32.totalorder %s17, 3
      %p68 = por %p66, %p67
      %p69 = scmp.ne.s32.totalorder %s60, %s61
      %p70 = scmp.eq.s32.totalorder %s17, 0
      %p71 = por %p69, %p70
      %p72 = scmp.ne.s32.totalorder %s60, %s61
      %p73 = scmp.eq.s32.totalorder %s18, 3
      %p74 = por %p72, %p73
      %p76 = scmp.ne.s32.totalorder %s61, %s75
      %p77 = scmp.eq.s32.totalorder %s18, 0
      %p78 = por %p76, %p77
      %s79 = ssub.s32 %s19, %s31
      %s80 = ssub.s32 %s20, %s27
      %s81 = sor.u32 %s79, %s80
      %p82 = scmp.eq.s32.totalorder %s81, 0
      %s84 = sadd.s32 %s83, 1
      %s85 = scalar_select %p82, %s83, %s84
      %p88 = pneg %p82
      %p89 = scmp.eq.s32.totalorder %s12, 3
      %p90 = por %p88, %p89
      %p91 = scmp.ne.s32.totalorder %s83, %s86
      %p92 = scmp.eq.s32.totalorder %s12, 0
      %p93 = por %p91, %p92
      %p94 = scmp.ne.s32.totalorder %s83, %s86
      %p95 = scmp.eq.s32.totalorder %s17, 3
      %p96 = por %p94, %p95
      %p97 = scmp.ne.s32.totalorder %s86, %s87
      %p98 = scmp.eq.s32.totalorder %s17, 0
      %p99 = por %p97, %p98
      %p100 = scmp.ne.s32.totalorder %s86, %s87
      %p101 = scmp.eq.s32.totalorder %s18, 3
      %p102 = por %p100, %p101
      %p104 = scmp.ne.s32.totalorder %s87, %s103
      %p105 = scmp.eq.s32.totalorder %s18, 0
      %p106 = por %p104, %p105
      %p107 = scmp.le.s32.totalorder 1, %s12
      %p108 = scmp.lt.s32.totalorder %s12, 5
      %p109 = pnand %p107, %p108
      %p110 = pneg %p109
      // Predicated region
      $region9: #{_pyramid_pooling_core.3} parent=5 // pred_check
        _
      $region10: #{_pyramid_pooling_core.3} parent=5 // pred_check_branch
        %112 = sbr.rel (%p109) target = $region12
      $region11: #{_pyramid_pooling_core.3} parent=5 // pred_region
        %s113 = ssub.s32 %s12, 1
        // Predicated region
        $region13: #{_pyramid_pooling_core.3} parent=11 // pred_check
          %p114 = pneg %p71
        $region14: #{_pyramid_pooling_core.3} parent=11 // pred_check_branch
          %116 = sbr.rel (%p114) target = $region16
        $region15: #{_pyramid_pooling_core.3} parent=11 // pred_region
          _
        $region16: #{_pyramid_pooling_core.3} parent=11 // pred_fallthru
          _
      $region12: #{_pyramid_pooling_core.3} parent=5 // pred_fallthru
        _
      %p117 = scmp.lt.s32.totalorder %s12, 4
      // Predicated region
      $region17: #{_pyramid_pooling_core.3} parent=5 // pred_check
        %p118 = pneg %p117
      $region18: #{_pyramid_pooling_core.3} parent=5 // pred_check_branch
        %120 = sbr.rel (%p118) target = $region20
      $region19: #{_pyramid_pooling_core.3} parent=5 // pred_region
        // Predicated region
        $region21: #{_pyramid_pooling_core.3} parent=19 // pred_check
          %p121 = pneg %p44
        $region22: #{_pyramid_pooling_core.3} parent=19 // pred_check_branch
          %123 = sbr.rel (%p121) target = $region24
        $region23: #{_pyramid_pooling_core.3} parent=19 // pred_region
          %p124 = scmp.lt.s32.totalorder %s19, 1
          %s125 = scalar_select %p124, %s19, 1
          %s126 = smul.addr %s125, 16
          %s127 = smul.addr %s126, 8
          %s128 = scalar_lea.vmem %s0, %s127
        $region24: #{_pyramid_pooling_core.3} parent=19 // pred_fallthru
          _
      $region20: #{_pyramid_pooling_core.3} parent=5 // pred_fallthru
        _
      %p129 = scmp.le.s32.totalorder 1, %s12
      %p130 = scmp.lt.s32.totalorder %s12, 5
      %p131 = pnand %p129, %p130
      %p132 = pneg %p131
      // Predicated region
      $region25: #{_pyramid_pooling_core.3} parent=5 // pred_check
        _
      $region26: #{_pyramid_pooling_core.3} parent=5 // pred_check_branch
        %134 = sbr.rel (%p131) target = $region28
      $region27: #{_pyramid_pooling_core.3} parent=5 // pred_region
        %s135 = ssub.s32 %s12, 1
        %p136 = scmp.lt.s32.totalorder %s21, 1
        %s137 = scalar_select %p136, %s21, 1
        %s138 = smul.addr %s137, 16
        %s139 = smul.addr %s138, 8
        %s140 = scalar_lea.vmem %s0, %s139
        %p141 = pneg %p50
        %p142 = pneg %p47
        %p143 = pneg %p71
        %p144 = pneg %p68
        %p145 = pneg %p99
        %p146 = pneg %p96
        %s147 = sand.u32 %s86, 1
        %s148 = scalar_lea.sflag [#allocation3], %s147
        %s149 = sand.u32 %s86, 1
        %s150 = smul.addr %s149, 512
        %s151 = scalar_lea.vmem [#allocation2], %s150
        %p152 = scmp.lt.s32.totalorder %s21, 1
        %s153 = scalar_select %p152, %s21, 1
        %s154 = smul.addr %s153, 16
        %s155 = smul.addr %s154, 8
        %s156 = scalar_lea.vmem %s0, %s155
        %s157 = smul.u32 64, %s22
        %s158 = smul.u32 %s22, 512
        %s159 = scalar_lea.vmem %s1, %s158
        %v160 = vld [vmem:[%s159] sm:$0xff]
        %v161 = vld [vmem:[%s159 + $0x8] sm:$0xff]
        %v162 = vld [vmem:[%s159 + $0x10] sm:$0xff]
        %v163 = vld [vmem:[%s159 + $0x18] sm:$0xff]
        %v164 = vld [vmem:[%s159 + $0x20] sm:$0xff]
        %v165 = vld [vmem:[%s159 + $0x28] sm:$0xff]
        %v166 = vld [vmem:[%s159 + $0x30] sm:$0xff]
        %v167 = vld [vmem:[%s159 + $0x38] sm:$0xff]
        %v168 = vld [vmem:[%s159 + $0x40] sm:$0xff]
        %v169 = vld [vmem:[%s159 + $0x48] sm:$0xff]
        %v170 = vld [vmem:[%s159 + $0x50] sm:$0xff]
        %v171 = vld [vmem:[%s159 + $0x58] sm:$0xff]
        %v172 = vld [vmem:[%s159 + $0x60] sm:$0xff]
        %v173 = vld [vmem:[%s159 + $0x68] sm:$0xff]
        %v174 = vld [vmem:[%s159 + $0x70] sm:$0xff]
        %v175 = vld [vmem:[%s159 + $0x78] sm:$0xff]
        %v176 = vld [vmem:[%s159 + $0x80] sm:$0xff]
        %v177 = vld [vmem:[%s159 + $0x88] sm:$0xff]
        %v178 = vld [vmem:[%s159 + $0x90] sm:$0xff]
        %v179 = vld [vmem:[%s159 + $0x98] sm:$0xff]
        %v180 = vld [vmem:[%s159 + $0xa0] sm:$0xff]
        %v181 = vld [vmem:[%s159 + $0xa8] sm:$0xff]
        %v182 = vld [vmem:[%s159 + $0xb0] sm:$0xff]
        %v183 = vld [vmem:[%s159 + $0xb8] sm:$0xff]
        %v184 = vld [vmem:[%s159 + $0xc0] sm:$0xff]
        %v185 = vld [vmem:[%s159 + $0xc8] sm:$0xff]
        %v186 = vld [vmem:[%s159 + $0xd0] sm:$0xff]
        %v187 = vld [vmem:[%s159 + $0xd8] sm:$0xff]
        %v188 = vld [vmem:[%s159 + $0xe0] sm:$0xff]
        %v189 = vld [vmem:[%s159 + $0xe8] sm:$0xff]
        %v190 = vld [vmem:[%s159 + $0xf0] sm:$0xff]
        %v191 = vld [vmem:[%s159 + $0xf8] sm:$0xff]
        %v192 = vld [vmem:[%s159 + $0x100] sm:$0xff]
        %v193 = vld [vmem:[%s159 + $0x108] sm:$0xff]
        %v194 = vld [vmem:[%s159 + $0x110] sm:$0xff]
        %v195 = vld [vmem:[%s159 + $0x118] sm:$0xff]
        %v196 = vld [vmem:[%s159 + $0x120] sm:$0xff]
        %v197 = vld [vmem:[%s159 + $0x128] sm:$0xff]
        %v198 = vld [vmem:[%s159 + $0x130] sm:$0xff]
        %v199 = vld [vmem:[%s159 + $0x138] sm:$0xff]
        %v200 = vld [vmem:[%s159 + $0x140] sm:$0xff]
        %v201 = vld [vmem:[%s159 + $0x148] sm:$0xff]
        %v202 = vld [vmem:[%s159 + $0x150] sm:$0xff]
        %v203 = vld [vmem:[%s159 + $0x158] sm:$0xff]
        %v204 = vld [vmem:[%s159 + $0x160] sm:$0xff]
        %v205 = vld [vmem:[%s159 + $0x168] sm:$0xff]
        %v206 = vld [vmem:[%s159 + $0x170] sm:$0xff]
        %v207 = vld [vmem:[%s159 + $0x178] sm:$0xff]
        %v208 = vld [vmem:[%s159 + $0x180] sm:$0xff]
        %v209 = vld [vmem:[%s159 + $0x188] sm:$0xff]
        %v210 = vld [vmem:[%s159 + $0x190] sm:$0xff]
        %v211 = vld [vmem:[%s159 + $0x198] sm:$0xff]
        %v212 = vld [vmem:[%s159 + $0x1a0] sm:$0xff]
        %v213 = vld [vmem:[%s159 + $0x1a8] sm:$0xff]
        %v214 = vld [vmem:[%s159 + $0x1b0] sm:$0xff]
        %v215 = vld [vmem:[%s159 + $0x1b8] sm:$0xff]
        %v216 = vld [vmem:[%s159 + $0x1c0] sm:$0xff]
        %v217 = vld [vmem:[%s159 + $0x1c8] sm:$0xff]
        %v218 = vld [vmem:[%s159 + $0x1d0] sm:$0xff]
        %v219 = vld [vmem:[%s159 + $0x1d8] sm:$0xff]
        %v220 = vld [vmem:[%s159 + $0x1e0] sm:$0xff]
        %v221 = vld [vmem:[%s159 + $0x1e8] sm:$0xff]
        %v222 = vld [vmem:[%s159 + $0x1f0] sm:$0xff]
        %v223 = vld [vmem:[%s159 + $0x1f8] sm:$0xff]
        %v224 = vld [vmem:[%s156] sm:$0xff]
        %v225 = vld [vmem:[%s156 + $0x8] sm:$0xff]
        %v226 = vld [vmem:[%s156 + $0x10] sm:$0xff]
        %v227 = vld [vmem:[%s156 + $0x18] sm:$0xff]
        %v228 = vld [vmem:[%s156 + $0x20] sm:$0xff]
        %v229 = vld [vmem:[%s156 + $0x28] sm:$0xff]
        %v230 = vld [vmem:[%s156 + $0x30] sm:$0xff]
        %v231 = vld [vmem:[%s156 + $0x38] sm:$0xff]
        %v232 = vld [vmem:[%s156 + $0x40] sm:$0xff]
        %v233 = vld [vmem:[%s156 + $0x48] sm:$0xff]
        %v234 = vld [vmem:[%s156 + $0x50] sm:$0xff]
        %v235 = vld [vmem:[%s156 + $0x58] sm:$0xff]
        %v236 = vld [vmem:[%s156 + $0x60] sm:$0xff]
        %v237 = vld [vmem:[%s156 + $0x68] sm:$0xff]
        %v238 = vld [vmem:[%s156 + $0x70] sm:$0xff]
        %v239 = vld [vmem:[%s156 + $0x78] sm:$0xff]
        %240 = vmatprep.subr.mxu0 0.0
        %241 = vmatpush1.msra.mxu0 %v239
        %242 = vmatprep.subr.mxu0 0.0
        %243 = vmatpush1.msra.mxu0 %v238
        %244 = vmatprep.subr.mxu0 0.0
        %245 = vmatpush1.msra.mxu0 %v237
        %246 = vmatprep.subr.mxu0 0.0
        %247 = vmatpush1.msra.mxu0 %v236
        %248 = vmatprep.subr.mxu0 0.0
        %249 = vmatpush1.msra.mxu0 %v235
        %250 = vmatprep.subr.mxu0 0.0
        %251 = vmatpush1.msra.mxu0 %v234
        %252 = vmatprep.subr.mxu0 0.0
        %253 = vmatpush1.msra.mxu0 %v233
        %254 = vmatprep.subr.mxu0 0.0
        %255 = vmatpush1.msra.mxu0 %v232
        %256 = vmatprep.subr.mxu0 0.0
        %257 = vmatpush1.msra.mxu0 %v231
        %258 = vmatprep.subr.mxu0 0.0
        %259 = vmatpush1.msra.mxu0 %v230
        %260 = vmatprep.subr.mxu0 0.0
        %261 = vmatpush1.msra.mxu0 %v229
        %262 = vmatprep.subr.mxu0 0.0
        %263 = vmatpush1.msra.mxu0 %v228
        %264 = vmatprep.subr.mxu0 0.0
        %265 = vmatpush1.msra.mxu0 %v227
        %266 = vmatprep.subr.mxu0 0.0
        %267 = vmatpush1.msra.mxu0 %v226
        %268 = vmatprep.subr.mxu0 0.0
        %269 = vmatpush1.msra.mxu0 %v225
        %270 = vmatprep.subr.mxu0 0.0
        %271 = vmatpush1.msra.mxu0 %v224
        %272 = vmatprep.subr.mxu0 0.0
        %273 = vmatpush2.msra.mxu0 0.0
        %274 = vmatprep.subr.mxu0 0.0
        %275 = vmatpush2.msra.mxu0 0.0
        %276 = vmatprep.subr.mxu0 0.0
        %277 = vmatpush2.msra.mxu0 0.0
        %278 = vmatprep.subr.mxu0 0.0
        %279 = vmatpush2.msra.mxu0 0.0
        %280 = vmatprep.subr.mxu0 0.0
        %281 = vmatpush2.msra.mxu0 0.0
        %282 = vmatprep.subr.mxu0 0.0
        %283 = vmatpush2.msra.mxu0 0.0
        %284 = vmatprep.subr.mxu0 0.0
        %285 = vmatpush2.msra.mxu0 0.0
        %286 = vmatprep.subr.mxu0 0.0
        %287 = vmatpush2.msra.mxu0 0.0
        %288 = vmatprep.subr.mxu0 0.0
        %289 = vmatpush2.msra.mxu0 0.0
        %290 = vmatprep.subr.mxu0 0.0
        %291 = vmatpush2.msra.mxu0 0.0
        %292 = vmatprep.subr.mxu0 0.0
        %293 = vmatpush2.msra.mxu0 0.0
        %294 = vmatprep.subr.mxu0 0.0
        %295 = vmatpush2.msra.mxu0 0.0
        %296 = vmatprep.subr.mxu0 0.0
        %297 = vmatpush2.msra.mxu0 0.0
        %298 = vmatprep.subr.mxu0 0.0
        %299 = vmatpush2.msra.mxu0 0.0
        %300 = vmatprep.subr.mxu0 0.0
        %301 = vmatpush2.msra.mxu0 0.0
        %302 = vmatprep.subr.mxu0 0.0
        %303 = vmatpush2.msra.mxu0 0.0
        %304 = vmatprep.mubr.f32.mxu0 0.0
        %305 = vmatmul.mubr.f32.gmra.mxu0 %v160
        %v306 = vpop.f32.mrf.mxu0
        %v307 = vadd.f32 0.0, %v306
        %v308 = vpop.f32.mrf.mxu0
        %309 = vmatprep.mubr.f32.mxu0 0.0
        %310 = vmatmul.mubr.f32.gmra.mxu0 %v161
        %v311 = vpop.f32.mrf.mxu0
        %v312 = vadd.f32 0.0, %v311
        %v313 = vpop.f32.mrf.mxu0
        %314 = vmatprep.mubr.f32.mxu0 0.0
        %315 = vmatmul.mubr.f32.gmra.mxu0 %v162
        %v316 = vpop.f32.mrf.mxu0
        %v317 = vadd.f32 0.0, %v316
        %v318 = vpop.f32.mrf.mxu0
        %319 = vmatprep.mubr.f32.mxu0 0.0
        %320 = vmatmul.mubr.f32.gmra.mxu0 %v163
        %v321 = vpop.f32.mrf.mxu0
        %v322 = vadd.f32 0.0, %v321
        %v323 = vpop.f32.mrf.mxu0
        %324 = vmatprep.mubr.f32.mxu0 0.0
        %325 = vmatmul.mubr.f32.gmra.mxu0 %v164
        %v326 = vpop.f32.mrf.mxu0
        %v327 = vadd.f32 0.0, %v326
        %v328 = vpop.f32.mrf.mxu0
        %329 = vmatprep.mubr.f32.mxu0 0.0
        %330 = vmatmul.mubr.f32.gmra.mxu0 %v165
        %v331 = vpop.f32.mrf.mxu0
        %v332 = vadd.f32 0.0, %v331
        %v333 = vpop.f32.mrf.mxu0
        %334 = vmatprep.mubr.f32.mxu0 0.0
        %335 = vmatmul.mubr.f32.gmra.mxu0 %v166
        %v336 = vpop.f32.mrf.mxu0
        %v337 = vadd.f32 0.0, %v336
        %v338 = vpop.f32.mrf.mxu0
        %339 = vmatprep.mubr.f32.mxu0 0.0
        %340 = vmatmul.mubr.f32.gmra.mxu0 %v167
        %v341 = vpop.f32.mrf.mxu0
        %v342 = vadd.f32 0.0, %v341
        %v343 = vpop.f32.mrf.mxu0
        %344 = vmatprep.mubr.f32.mxu0 0.0
        %345 = vmatmul.mubr.f32.gmra.mxu0 %v168
        %v346 = vpop.f32.mrf.mxu0
        %v347 = vadd.f32 0.0, %v346
        %v348 = vpop.f32.mrf.mxu0
        %349 = vmatprep.mubr.f32.mxu0 0.0
        %350 = vmatmul.mubr.f32.gmra.mxu0 %v169
        %v351 = vpop.f32.mrf.mxu0
        %v352 = vadd.f32 0.0, %v351
        %v353 = vpop.f32.mrf.mxu0
        %354 = vmatprep.mubr.f32.mxu0 0.0
        %355 = vmatmul.mubr.f32.gmra.mxu0 %v170
        %v356 = vpop.f32.mrf.mxu0
        %v357 = vadd.f32 0.0, %v356
        %v358 = vpop.f32.mrf.mxu0
        %359 = vmatprep.mubr.f32.mxu0 0.0
        %360 = vmatmul.mubr.f32.gmra.mxu0 %v171
        %v361 = vpop.f32.mrf.mxu0
        %v362 = vadd.f32 0.0, %v361
        %v363 = vpop.f32.mrf.mxu0
        %364 = vmatprep.mubr.f32.mxu0 0.0
        %365 = vmatmul.mubr.f32.gmra.mxu0 %v172
        %v366 = vpop.f32.mrf.mxu0
        %v367 = vadd.f32 0.0, %v366
        %v368 = vpop.f32.mrf.mxu0
        %369 = vmatprep.mubr.f32.mxu0 0.0
        %370 = vmatmul.mubr.f32.gmra.mxu0 %v173
        %v371 = vpop.f32.mrf.mxu0
        %v372 = vadd.f32 0.0, %v371
        %v373 = vpop.f32.mrf.mxu0
        %374 = vmatprep.mubr.f32.mxu0 0.0
        %375 = vmatmul.mubr.f32.gmra.mxu0 %v174
        %v376 = vpop.f32.mrf.mxu0
        %v377 = vadd.f32 0.0, %v376
        %v378 = vpop.f32.mrf.mxu0
        %379 = vmatprep.mubr.f32.mxu0 0.0
        %380 = vmatmul.mubr.f32.gmra.mxu0 %v175
        %v381 = vpop.f32.mrf.mxu0
        %v382 = vadd.f32 0.0, %v381
        %v383 = vpop.f32.mrf.mxu0
        %384 = vmatprep.mubr.f32.mxu0 0.0
        %385 = vmatmul.mubr.f32.gmra.mxu0 %v176
        %v386 = vpop.f32.mrf.mxu0
        %v387 = vadd.f32 0.0, %v386
        %v388 = vpop.f32.mrf.mxu0
        %389 = vmatprep.mubr.f32.mxu0 0.0
        %390 = vmatmul.mubr.f32.gmra.mxu0 %v177
        %v391 = vpop.f32.mrf.mxu0
        %v392 = vadd.f32 0.0, %v391
        %v393 = vpop.f32.mrf.mxu0
        %394 = vmatprep.mubr.f32.mxu0 0.0
        %395 = vmatmul.mubr.f32.gmra.mxu0 %v178
        %v396 = vpop.f32.mrf.mxu0
        %v397 = vadd.f32 0.0, %v396
        %v398 = vpop.f32.mrf.mxu0
        %399 = vmatprep.mubr.f32.mxu0 0.0
        %400 = vmatmul.mubr.f32.gmra.mxu0 %v179
        %v401 = vpop.f32.mrf.mxu0
        %v402 = vadd.f32 0.0, %v401
        %v403 = vpop.f32.mrf.mxu0
        %404 = vmatprep.mubr.f32.mxu0 0.0
        %405 = vmatmul.mubr.f32.gmra.mxu0 %v180
        %v406 = vpop.f32.mrf.mxu0
        %v407 = vadd.f32 0.0, %v406
        %v408 = vpop.f32.mrf.mxu0
        %409 = vmatprep.mubr.f32.mxu0 0.0
        %410 = vmatmul.mubr.f32.gmra.mxu0 %v181
        %v411 = vpop.f32.mrf.mxu0
        %v412 = vadd.f32 0.0, %v411
        %v413 = vpop.f32.mrf.mxu0
        %414 = vmatprep.mubr.f32.mxu0 0.0
        %415 = vmatmul.mubr.f32.gmra.mxu0 %v182
        %v416 = vpop.f32.mrf.mxu0
        %v417 = vadd.f32 0.0, %v416
        %v418 = vpop.f32.mrf.mxu0
        %419 = vmatprep.mubr.f32.mxu0 0.0
        %420 = vmatmul.mubr.f32.gmra.mxu0 %v183
        %v421 = vpop.f32.mrf.mxu0
        %v422 = vadd.f32 0.0, %v421
        %v423 = vpop.f32.mrf.mxu0
        %424 = vmatprep.mubr.f32.mxu0 0.0
        %425 = vmatmul.mubr.f32.gmra.mxu0 %v184
        %v426 = vpop.f32.mrf.mxu0
        %v427 = vadd.f32 0.0, %v426
        %v428 = vpop.f32.mrf.mxu0
        %429 = vmatprep.mubr.f32.mxu0 0.0
        %430 = vmatmul.mubr.f32.gmra.mxu0 %v185
        %v431 = vpop.f32.mrf.mxu0
        %v432 = vadd.f32 0.0, %v431
        %v433 = vpop.f32.mrf.mxu0
        %434 = vmatprep.mubr.f32.mxu0 0.0
        %435 = vmatmul.mubr.f32.gmra.mxu0 %v186
        %v436 = vpop.f32.mrf.mxu0
        %v437 = vadd.f32 0.0, %v436
        %v438 = vpop.f32.mrf.mxu0
        %439 = vmatprep.mubr.f32.mxu0 0.0
        %440 = vmatmul.mubr.f32.gmra.mxu0 %v187
        %v441 = vpop.f32.mrf.mxu0
        %v442 = vadd.f32 0.0, %v441
        %v443 = vpop.f32.mrf.mxu0
        %444 = vmatprep.mubr.f32.mxu0 0.0
        %445 = vmatmul.mubr.f32.gmra.mxu0 %v188
        %v446 = vpop.f32.mrf.mxu0
        %v447 = vadd.f32 0.0, %v446
        %v448 = vpop.f32.mrf.mxu0
        %449 = vmatprep.mubr.f32.mxu0 0.0
        %450 = vmatmul.mubr.f32.gmra.mxu0 %v189
        %v451 = vpop.f32.mrf.mxu0
        %v452 = vadd.f32 0.0, %v451
        %v453 = vpop.f32.mrf.mxu0
        %454 = vmatprep.mubr.f32.mxu0 0.0
        %455 = vmatmul.mubr.f32.gmra.mxu0 %v190
        %v456 = vpop.f32.mrf.mxu0
        %v457 = vadd.f32 0.0, %v456
        %v458 = vpop.f32.mrf.mxu0
        %459 = vmatprep.mubr.f32.mxu0 0.0
        %460 = vmatmul.mubr.f32.gmra.mxu0 %v191
        %v461 = vpop.f32.mrf.mxu0
        %v462 = vadd.f32 0.0, %v461
        %v463 = vpop.f32.mrf.mxu0
        %464 = vmatprep.mubr.f32.mxu0 0.0
        %465 = vmatmul.mubr.f32.gmra.mxu0 %v192
        %v466 = vpop.f32.mrf.mxu0
        %v467 = vadd.f32 0.0, %v466
        %v468 = vpop.f32.mrf.mxu0
        %469 = vmatprep.mubr.f32.mxu0 0.0
        %470 = vmatmul.mubr.f32.gmra.mxu0 %v193
        %v471 = vpop.f32.mrf.mxu0
        %v472 = vadd.f32 0.0, %v471
        %v473 = vpop.f32.mrf.mxu0
        %474 = vmatprep.mubr.f32.mxu0 0.0
        %475 = vmatmul.mubr.f32.gmra.mxu0 %v194
        %v476 = vpop.f32.mrf.mxu0
        %v477 = vadd.f32 0.0, %v476
        %v478 = vpop.f32.mrf.mxu0
        %479 = vmatprep.mubr.f32.mxu0 0.0
        %480 = vmatmul.mubr.f32.gmra.mxu0 %v195
        %v481 = vpop.f32.mrf.mxu0
        %v482 = vadd.f32 0.0, %v481
        %v483 = vpop.f32.mrf.mxu0
        %484 = vmatprep.mubr.f32.mxu0 0.0
        %485 = vmatmul.mubr.f32.gmra.mxu0 %v196
        %v486 = vpop.f32.mrf.mxu0
        %v487 = vadd.f32 0.0, %v486
        %v488 = vpop.f32.mrf.mxu0
        %489 = vmatprep.mubr.f32.mxu0 0.0
        %490 = vmatmul.mubr.f32.gmra.mxu0 %v197
        %v491 = vpop.f32.mrf.mxu0
        %v492 = vadd.f32 0.0, %v491
        %v493 = vpop.f32.mrf.mxu0
        %494 = vmatprep.mubr.f32.mxu0 0.0
        %495 = vmatmul.mubr.f32.gmra.mxu0 %v198
        %v496 = vpop.f32.mrf.mxu0
        %v497 = vadd.f32 0.0, %v496
        %v498 = vpop.f32.mrf.mxu0
        %499 = vmatprep.mubr.f32.mxu0 0.0
        %500 = vmatmul.mubr.f32.gmra.mxu0 %v199
        %v501 = vpop.f32.mrf.mxu0
        %v502 = vadd.f32 0.0, %v501
        %v503 = vpop.f32.mrf.mxu0
        %504 = vmatprep.mubr.f32.mxu0 0.0
        %505 = vmatmul.mubr.f32.gmra.mxu0 %v200
        %v506 = vpop.f32.mrf.mxu0
        %v507 = vadd.f32 0.0, %v506
        %v508 = vpop.f32.mrf.mxu0
        %509 = vmatprep.mubr.f32.mxu0 0.0
        %510 = vmatmul.mubr.f32.gmra.mxu0 %v201
        %v511 = vpop.f32.mrf.mxu0
        %v512 = vadd.f32 0.0, %v511
        %v513 = vpop.f32.mrf.mxu0
        %514 = vmatprep.mubr.f32.mxu0 0.0
        %515 = vmatmul.mubr.f32.gmra.mxu0 %v202
        %v516 = vpop.f32.mrf.mxu0
        %v517 = vadd.f32 0.0, %v516
        %v518 = vpop.f32.mrf.mxu0
        %519 = vmatprep.mubr.f32.mxu0 0.0
        %520 = vmatmul.mubr.f32.gmra.mxu0 %v203
        %v521 = vpop.f32.mrf.mxu0
        %v522 = vadd.f32 0.0, %v521
        %v523 = vpop.f32.mrf.mxu0
        %524 = vmatprep.mubr.f32.mxu0 0.0
        %525 = vmatmul.mubr.f32.gmra.mxu0 %v204
        %v526 = vpop.f32.mrf.mxu0
        %v527 = vadd.f32 0.0, %v526
        %v528 = vpop.f32.mrf.mxu0
        %529 = vmatprep.mubr.f32.mxu0 0.0
        %530 = vmatmul.mubr.f32.gmra.mxu0 %v205
        %v531 = vpop.f32.mrf.mxu0
        %v532 = vadd.f32 0.0, %v531
        %v533 = vpop.f32.mrf.mxu0
        %534 = vmatprep.mubr.f32.mxu0 0.0
        %535 = vmatmul.mubr.f32.gmra.mxu0 %v206
        %v536 = vpop.f32.mrf.mxu0
        %v537 = vadd.f32 0.0, %v536
        %v538 = vpop.f32.mrf.mxu0
        %539 = vmatprep.mubr.f32.mxu0 0.0
        %540 = vmatmul.mubr.f32.gmra.mxu0 %v207
        %v541 = vpop.f32.mrf.mxu0
        %v542 = vadd.f32 0.0, %v541
        %v543 = vpop.f32.mrf.mxu0
        %544 = vmatprep.mubr.f32.mxu0 0.0
        %545 = vmatmul.mubr.f32.gmra.mxu0 %v208
        %v546 = vpop.f32.mrf.mxu0
        %v547 = vadd.f32 0.0, %v546
        %v548 = vpop.f32.mrf.mxu0
        %549 = vmatprep.mubr.f32.mxu0 0.0
        %550 = vmatmul.mubr.f32.gmra.mxu0 %v209
        %v551 = vpop.f32.mrf.mxu0
        %v552 = vadd.f32 0.0, %v551
        %v553 = vpop.f32.mrf.mxu0
        %554 = vmatprep.mubr.f32.mxu0 0.0
        %555 = vmatmul.mubr.f32.gmra.mxu0 %v210
        %v556 = vpop.f32.mrf.mxu0
        %v557 = vadd.f32 0.0, %v556
        %v558 = vpop.f32.mrf.mxu0
        %559 = vmatprep.mubr.f32.mxu0 0.0
        %560 = vmatmul.mubr.f32.gmra.mxu0 %v211
        %v561 = vpop.f32.mrf.mxu0
        %v562 = vadd.f32 0.0, %v561
        %v563 = vpop.f32.mrf.mxu0
        %564 = vmatprep.mubr.f32.mxu0 0.0
        %565 = vmatmul.mubr.f32.gmra.mxu0 %v212
        %v566 = vpop.f32.mrf.mxu0
        %v567 = vadd.f32 0.0, %v566
        %v568 = vpop.f32.mrf.mxu0
        %569 = vmatprep.mubr.f32.mxu0 0.0
        %570 = vmatmul.mubr.f32.gmra.mxu0 %v213
        %v571 = vpop.f32.mrf.mxu0
        %v572 = vadd.f32 0.0, %v571
        %v573 = vpop.f32.mrf.mxu0
        %574 = vmatprep.mubr.f32.mxu0 0.0
        %575 = vmatmul.mubr.f32.gmra.mxu0 %v214
        %v576 = vpop.f32.mrf.mxu0
        %v577 = vadd.f32 0.0, %v576
        %v578 = vpop.f32.mrf.mxu0
        %579 = vmatprep.mubr.f32.mxu0 0.0
        %580 = vmatmul.mubr.f32.gmra.mxu0 %v215
        %v581 = vpop.f32.mrf.mxu0
        %v582 = vadd.f32 0.0, %v581
        %v583 = vpop.f32.mrf.mxu0
        %584 = vmatprep.mubr.f32.mxu0 0.0
        %585 = vmatmul.mubr.f32.gmra.mxu0 %v216
        %v586 = vpop.f32.mrf.mxu0
        %v587 = vadd.f32 0.0, %v586
        %v588 = vpop.f32.mrf.mxu0
        %589 = vmatprep.mubr.f32.mxu0 0.0
        %590 = vmatmul.mubr.f32.gmra.mxu0 %v217
        %v591 = vpop.f32.mrf.mxu0
        %v592 = vadd.f32 0.0, %v591
        %v593 = vpop.f32.mrf.mxu0
        %594 = vmatprep.mubr.f32.mxu0 0.0
        %595 = vmatmul.mubr.f32.gmra.mxu0 %v218
        %v596 = vpop.f32.mrf.mxu0
        %v597 = vadd.f32 0.0, %v596
        %v598 = vpop.f32.mrf.mxu0
        %599 = vmatprep.mubr.f32.mxu0 0.0
        %600 = vmatmul.mubr.f32.gmra.mxu0 %v219
        %v601 = vpop.f32.mrf.mxu0
        %v602 = vadd.f32 0.0, %v601
        %v603 = vpop.f32.mrf.mxu0
        %604 = vmatprep.mubr.f32.mxu0 0.0
        %605 = vmatmul.mubr.f32.gmra.mxu0 %v220
        %v606 = vpop.f32.mrf.mxu0
        %v607 = vadd.f32 0.0, %v606
        %v608 = vpop.f32.mrf.mxu0
        %609 = vmatprep.mubr.f32.mxu0 0.0
        %610 = vmatmul.mubr.f32.gmra.mxu0 %v221
        %v611 = vpop.f32.mrf.mxu0
        %v612 = vadd.f32 0.0, %v611
        %v613 = vpop.f32.mrf.mxu0
        %614 = vmatprep.mubr.f32.mxu0 0.0
        %615 = vmatmul.mubr.f32.gmra.mxu0 %v222
        %v616 = vpop.f32.mrf.mxu0
        %v617 = vadd.f32 0.0, %v616
        %v618 = vpop.f32.mrf.mxu0
        %619 = vmatprep.mubr.f32.mxu0 0.0
        %620 = vmatmul.mubr.f32.gmra.mxu0 %v223
        %v621 = vpop.f32.mrf.mxu0
        %v622 = vadd.f32 0.0, %v621
        %v623 = vpop.f32.mrf.mxu0
        %624 = vdwg.mxu0
        %625 = vst [vmem:[%s151] sm:$0xff] %v307
        %626 = vst [vmem:[%s151 + $0x8] sm:$0xff] %v312
        %627 = vst [vmem:[%s151 + $0x10] sm:$0xff] %v317
        %628 = vst [vmem:[%s151 + $0x18] sm:$0xff] %v322
        %629 = vst [vmem:[%s151 + $0x20] sm:$0xff] %v327
        %630 = vst [vmem:[%s151 + $0x28] sm:$0xff] %v332
        %631 = vst [vmem:[%s151 + $0x30] sm:$0xff] %v337
        %632 = vst [vmem:[%s151 + $0x38] sm:$0xff] %v342
        %633 = vst [vmem:[%s151 + $0x40] sm:$0xff] %v347
        %634 = vst [vmem:[%s151 + $0x48] sm:$0xff] %v352
        %635 = vst [vmem:[%s151 + $0x50] sm:$0xff] %v357
        %636 = vst [vmem:[%s151 + $0x58] sm:$0xff] %v362
        %637 = vst [vmem:[%s151 + $0x60] sm:$0xff] %v367
        %638 = vst [vmem:[%s151 + $0x68] sm:$0xff] %v372
        %639 = vst [vmem:[%s151 + $0x70] sm:$0xff] %v377
        %640 = vst [vmem:[%s151 + $0x78] sm:$0xff] %v382
        %641 = vst [vmem:[%s151 + $0x80] sm:$0xff] %v387
        %642 = vst [vmem:[%s151 + $0x88] sm:$0xff] %v392
        %643 = vst [vmem:[%s151 + $0x90] sm:$0xff] %v397
        %644 = vst [vmem:[%s151 + $0x98] sm:$0xff] %v402
        %645 = vst [vmem:[%s151 + $0xa0] sm:$0xff] %v407
        %646 = vst [vmem:[%s151 + $0xa8] sm:$0xff] %v412
        %647 = vst [vmem:[%s151 + $0xb0] sm:$0xff] %v417
        %648 = vst [vmem:[%s151 + $0xb8] sm:$0xff] %v422
        %649 = vst [vmem:[%s151 + $0xc0] sm:$0xff] %v427
        %650 = vst [vmem:[%s151 + $0xc8] sm:$0xff] %v432
        %651 = vst [vmem:[%s151 + $0xd0] sm:$0xff] %v437
        %652 = vst [vmem:[%s151 + $0xd8] sm:$0xff] %v442
        %653 = vst [vmem:[%s151 + $0xe0] sm:$0xff] %v447
        %654 = vst [vmem:[%s151 + $0xe8] sm:$0xff] %v452
        %655 = vst [vmem:[%s151 + $0xf0] sm:$0xff] %v457
        %656 = vst [vmem:[%s151 + $0xf8] sm:$0xff] %v462
        %657 = vst [vmem:[%s151 + $0x100] sm:$0xff] %v467
        %658 = vst [vmem:[%s151 + $0x108] sm:$0xff] %v472
        %659 = vst [vmem:[%s151 + $0x110] sm:$0xff] %v477
        %660 = vst [vmem:[%s151 + $0x118] sm:$0xff] %v482
        %661 = vst [vmem:[%s151 + $0x120] sm:$0xff] %v487
        %662 = vst [vmem:[%s151 + $0x128] sm:$0xff] %v492
        %663 = vst [vmem:[%s151 + $0x130] sm:$0xff] %v497
        %664 = vst [vmem:[%s151 + $0x138] sm:$0xff] %v502
        %665 = vst [vmem:[%s151 + $0x140] sm:$0xff] %v507
        %666 = vst [vmem:[%s151 + $0x148] sm:$0xff] %v512
        %667 = vst [vmem:[%s151 + $0x150] sm:$0xff] %v517
        %668 = vst [vmem:[%s151 + $0x158] sm:$0xff] %v522
        %669 = vst [vmem:[%s151 + $0x160] sm:$0xff] %v527
        %670 = vst [vmem:[%s151 + $0x168] sm:$0xff] %v532
        %671 = vst [vmem:[%s151 + $0x170] sm:$0xff] %v537
        %672 = vst [vmem:[%s151 + $0x178] sm:$0xff] %v542
        %673 = vst [vmem:[%s151 + $0x180] sm:$0xff] %v547
        %674 = vst [vmem:[%s151 + $0x188] sm:$0xff] %v552
        %675 = vst [vmem:[%s151 + $0x190] sm:$0xff] %v557
        %676 = vst [vmem:[%s151 + $0x198] sm:$0xff] %v562
        %677 = vst [vmem:[%s151 + $0x1a0] sm:$0xff] %v567
        %678 = vst [vmem:[%s151 + $0x1a8] sm:$0xff] %v572
        %679 = vst [vmem:[%s151 + $0x1b0] sm:$0xff] %v577
        %680 = vst [vmem:[%s151 + $0x1b8] sm:$0xff] %v582
        %681 = vst [vmem:[%s151 + $0x1c0] sm:$0xff] %v587
        %682 = vst [vmem:[%s151 + $0x1c8] sm:$0xff] %v592
        %683 = vst [vmem:[%s151 + $0x1d0] sm:$0xff] %v597
        %684 = vst [vmem:[%s151 + $0x1d8] sm:$0xff] %v602
        %685 = vst [vmem:[%s151 + $0x1e0] sm:$0xff] %v607
        %686 = vst [vmem:[%s151 + $0x1e8] sm:$0xff] %v612
        %687 = vst [vmem:[%s151 + $0x1f0] sm:$0xff] %v617
        %688 = vst [vmem:[%s151 + $0x1f8] sm:$0xff] %v622
        %s689 = sand.u32 %s86, 1
        %s690 = scalar_lea.sflag [#allocation3], %s689
        %s691 = sand.u32 %s86, 1
        %s692 = smul.addr %s691, 512
        %s693 = scalar_lea.vmem [#allocation2], %s692
        // Predicated region
        $region29: #{_pyramid_pooling_core.3} parent=27 // pred_check
          %p694 = pneg %p96
        $region30: #{_pyramid_pooling_core.3} parent=27 // pred_check_branch
          %696 = sbr.rel (%p694) target = $region32
        $region31: #{_pyramid_pooling_core.3} parent=27 // pred_region
          %s697 = smul.u32 64, %s22
          %s699 = ssub.s32 8192, 8192
          %700 = vsyncadd %s690, %s699
          %s701 = smul.addr %s697, 2
          %s702 = sadd.s32 1, %s701
          %s703 = smul.addr %s21, 256
          %s704 = sadd.s32 %s702, %s703
          %s705 = smul.addr %s704, 128
          %s706 = scalar_lea.hbm %s3, %s705
          %s707 = sshll.u32 %s693, 4
          %s708 = int_to_ptr.vmem [resolvable:$true] %s707
          %713 = dma.vmem_to_hbm [thread:$0]  %s708, 8192, %s706, %s690, 128, 256, 8
        $region32: #{_pyramid_pooling_core.3} parent=27 // pred_fallthru
          _
      $region28: #{_pyramid_pooling_core.3} parent=5 // pred_fallthru
        _
      %p714 = scmp.le.s32.totalorder 2, %s12
      // Predicated region
      $region33: #{_pyramid_pooling_core.3} parent=5 // pred_check
        %p715 = pneg %p714
      $region34: #{_pyramid_pooling_core.3} parent=5 // pred_check_branch
        %717 = sbr.rel (%p715) target = $region36
      $region35: #{_pyramid_pooling_core.3} parent=5 // pred_region
        %s718 = ssub.s32 %s12, 2
        // Predicated region
        $region37: #{_pyramid_pooling_core.3} parent=35 // pred_check
          %p719 = pneg %p102
        $region38: #{_pyramid_pooling_core.3} parent=35 // pred_check_branch
          %721 = sbr.rel (%p719) target = $region40
        $region39: #{_pyramid_pooling_core.3} parent=35 // pred_region
          %s722 = sand.u32 %s87, 1
          %s723 = scalar_lea.sflag [#allocation3], %s722
          %s724 = sand.u32 %s87, 1
          %s725 = smul.addr %s724, 512
          %s726 = scalar_lea.vmem [#allocation2], %s725
          %727 = dma.done %s723, 8192
        $region40: #{_pyramid_pooling_core.3} parent=35 // pred_fallthru
          _
      $region36: #{_pyramid_pooling_core.3} parent=5 // pred_fallthru
        _
    $region6: #{_pyramid_pooling_core.3} parent=1 // loop_footer
      %s16 = sadd.s32 1, %s12
    $region7: #{_pyramid_pooling_core.3} parent=1 // loop_footer_branch
      %11 = sbr.rel target = $region3
    $region8: #{_pyramid_pooling_core.3} parent=1 // loop_exit
      _
    %728 = vsyncpa [#allocation3], 1
    %s729 = scalar_lea.sflag [#allocation3], 1
    %730 = vsyncpa %s729, 1

// kernel: _pyramid_pooling_core.2
$region0: #{_pyramid_pooling_core.2}
  #allocation0 [shape = 'u32[]', space=smem, size = 0x4, offset = 0x4, fixed_abs, tag = 'smem constant byte address 0x4 - core index']
  #allocation1 [shape = 'u32[144,128]{1,0:T(1,128)}', space=vmem, size = 0x12000, scoped, tag = 'internal scratch']
  %s0 = inlined_call_operand.hbm [shape: f32[1024,128], index: 0, kind: input, shape index: {}]
  %s1 = inlined_call_operand.hbm [shape: f32[2,1024,128], index: 1, kind: input, shape index: {}]
  %s2 = inlined_call_operand.vmem [shape: f32[2,2,128,128], index: 2, kind: output, shape index: {0}]
  %s3 = inlined_call_operand.hbm [shape: f32[2,1024,256], index: 3, kind: output, shape index: {1}]
  %4 = xla_tuple %s2, %s3
  %s5 = sld [smem:[#allocation0]]
  $region61: #{_pyramid_pooling_core.2} parent=0
    _
  %s7 = ssub.s32 1, %s5
  %s8 = scalar_select 0, %s7, %s5
  $region1: #{_pyramid_pooling_core.2} parent=0
    #allocation2 [shape = 'u8[524288]{0}', space=vmem, size = 0x80000, scoped, tag = 'input window, operand 0']
    #allocation3 [shape = 's32[2]{0}', space=sflag, size = 0x8, scoped, tag = 'scoped memory for _pyramid_pooling_core.2']
    #allocation4 [shape = 's32[2]{0}', space=sflag, size = 0x8, scoped, tag = 'scoped memory for _pyramid_pooling_core.2']
    #allocation5 [shape = 'u8[524288]{0}', space=vmem, size = 0x80000, scoped, tag = 'input window, operand 1']
    #allocation6 [shape = 's32[2]{0}', space=sflag, size = 0x8, scoped, tag = 'scoped memory for _pyramid_pooling_core.2']
    #allocation7 [shape = 'u8[524288]{0}', space=vmem, size = 0x80000, scoped, tag = 'output window, operand 1']
    %9 = vsyncpa [#allocation3], 0
    %s10 = scalar_lea.sflag [#allocation3], 1
    %11 = vsyncpa %s10, 0
    %12 = vsyncpa [#allocation6], 0
    %s13 = scalar_lea.sflag [#allocation6], 1
    %14 = vsyncpa %s13, 0
    %15 = vsyncpa [#allocation4], 0
    %s16 = scalar_lea.sflag [#allocation4], 1
    %17 = vsyncpa %s16, 0
    loop: start=0, step=1, limit=6
    $region2: #{_pyramid_pooling_core.2} parent=1 // loop_pre_header
      _
    $region3: #{_pyramid_pooling_core.2} parent=1 // loop_header
      %s19 = sphi 0, %s23
      %p20 = scmp.ge.s32.totalorder %s19, 6
      %s26 = sphi 0, %s45
      %s27 = sphi 0, %s41
      %s28 = sphi 0, %s37
      %s29 = sphi 0, %s26
      %s30 = sphi 0, %s27
      %s31 = sphi 0, %s28
      %s32 = sphi 0, %s29
      %s33 = sphi 0, %s30
      %s34 = sphi 0, %s31
      %s50 = sphi 0, %s52
      %s53 = sphi 0, %s50
      %s54 = sphi 0, %s53
      %s70 = sphi 0, %s54
      %s80 = sphi 0, %s82
      %s83 = sphi 0, %s80
      %s84 = sphi 0, %s83
      %s100 = sphi 0, %s84
      %s108 = sphi 0, %s110
      %s111 = sphi 0, %s108
      %s112 = sphi 0, %s111
      %s128 = sphi 0, %s112
      %s138 = sphi 0, %s140
      %s141 = sphi 0, %s138
      %s142 = sphi 0, %s141
      %s158 = sphi 0, %s142
    $region4: #{_pyramid_pooling_core.2} parent=1 // loop_header_branch
      %22 = sbr.rel (%p20) target = $region8
    $region5: #{_pyramid_pooling_core.2} parent=1 // loop_body
      %s24 = ssub.s32 %s19, 1
      %s25 = ssub.s32 %s19, 2
      %s35 = sadd.s32 1, %s28
      %p36 = scmp.ge.s32.totalorder %s35, 1
      %s37 = scalar_select %p36, 0, %s35
      %s38 = sadd.s32 1, %s27
      %s39 = scalar_select %p36, %s38, %s27
      %p40 = scmp.ge.s32.totalorder %s39, 2
      %s41 = scalar_select %p40, 0, %s39
      %s42 = sadd.s32 1, %s26
      %s43 = scalar_select %p40, %s42, %s26
      %p44 = scmp.ge.s32.totalorder %s43, 2
      %s45 = scalar_select %p44, 0, %s43
      %s46 = sadd.s32 %s26, %s28
      %s47 = sadd.s32 %s45, %s37
      %s48 = ssub.s32 %s46, %s47
      %p49 = scmp.eq.s32.totalorder %s48, 0
      %s51 = sadd.s32 %s50, 1
      %s52 = scalar_select %p49, %s50, %s51
      %p55 = pneg %p49
      %p56 = scmp.eq.s32.totalorder %s19, 3
      %p57 = por %p55, %p56
      %p58 = scmp.ne.s32.totalorder %s50, %s53
      %p59 = scmp.eq.s32.totalorder %s19, 0
      %p60 = por %p58, %p59
      %p61 = scmp.ne.s32.totalorder %s50, %s53
      %p62 = scmp.eq.s32.totalorder %s24, 3
      %p63 = por %p61, %p62
      %p64 = scmp.ne.s32.totalorder %s53, %s54
      %p65 = scmp.eq.s32.totalorder %s24, 0
      %p66 = por %p64, %p65
      %p67 = scmp.ne.s32.totalorder %s53, %s54
      %p68 = scmp.eq.s32.totalorder %s25, 3
      %p69 = por %p67, %p68
      %p71 = scmp.ne.s32.totalorder %s54, %s70
      %p72 = scmp.eq.s32.totalorder %s25, 0
      %p73 = por %p71, %p72
      %s74 = sadd.s32 %s26, %s28
      %s75 = sadd.s32 %s45, %s37
      %s76 = ssub.s32 %s27, %s41
      %s77 = ssub.s32 %s74, %s75
      %s78 = sor.u32 %s76, %s77
      %p79 = scmp.eq.s32.totalorder %s78, 0
      %s81 = sadd.s32 %s80, 1
      %s82 = scalar_select %p79, %s80, %s81
      %p85 = pneg %p79
      %p86 = scmp.eq.s32.totalorder %s19, 3
      %p87 = por %p85, %p86
      %p88 = scmp.ne.s32.totalorder %s80, %s83
      %p89 = scmp.eq.s32.totalorder %s19, 0
      %p90 = por %p88, %p89
      %p91 = scmp.ne.s32.totalorder %s80, %s83
      %p92 = scmp.eq.s32.totalorder %s24, 3
      %p93 = por %p91, %p92
      %p94 = scmp.ne.s32.totalorder %s83, %s84
      %p95 = scmp.eq.s32.totalorder %s24, 0
      %p96 = por %p94, %p95
      %p97 = scmp.ne.s32.totalorder %s83, %s84
      %p98 = scmp.eq.s32.totalorder %s25, 3
      %p99 = por %p97, %p98
      %p101 = scmp.ne.s32.totalorder %s84, %s100
      %p102 = scmp.eq.s32.totalorder %s25, 0
      %p103 = por %p101, %p102
      %s104 = ssub.s32 %s27, %s41
      %s105 = ssub.s32 %s26, %s45
      %s106 = sor.u32 %s104, %s105
      %p107 = scmp.eq.s32.totalorder %s106, 0
      %s109 = sadd.s32 %s108, 1
      %s110 = scalar_select %p107, %s108, %s109
      %p113 = pneg %p107
      %p114 = scmp.eq.s32.totalorder %s19, 3
      %p115 = por %p113, %p114
      %p116 = scmp.ne.s32.totalorder %s108, %s111
      %p117 = scmp.eq.s32.totalorder %s19, 0
      %p118 = por %p116, %p117
      %p119 = scmp.ne.s32.totalorder %s108, %s111
      %p120 = scmp.eq.s32.totalorder %s24, 3
      %p121 = por %p119, %p120
      %p122 = scmp.ne.s32.totalorder %s111, %s112
      %p123 = scmp.eq.s32.totalorder %s24, 0
      %p124 = por %p122, %p123
      %p125 = scmp.ne.s32.totalorder %s111, %s112
      %p126 = scmp.eq.s32.totalorder %s25, 3
      %p127 = por %p125, %p126
      %p129 = scmp.ne.s32.totalorder %s112, %s128
      %p130 = scmp.eq.s32.totalorder %s25, 0
      %p131 = por %p129, %p130
      %s132 = sadd.s32 %s26, %s28
      %s133 = sadd.s32 %s45, %s37
      %s134 = ssub.s32 %s27, %s41
      %s135 = ssub.s32 %s132, %s133
      %s136 = sor.u32 %s134, %s135
      %p137 = scmp.eq.s32.totalorder %s136, 0
      %s139 = sadd.s32 %s138, 1
      %s140 = scalar_select %p137, %s138, %s139
      %p143 = pneg %p137
      %p144 = scmp.eq.s32.totalorder %s19, 3
      %p145 = por %p143, %p144
      %p146 = scmp.ne.s32.totalorder %s138, %s141
      %p147 = scmp.eq.s32.totalorder %s19, 0
      %p148 = por %p146, %p147
      %p149 = scmp.ne.s32.totalorder %s138, %s141
      %p150 = scmp.eq.s32.totalorder %s24, 3
      %p151 = por %p149, %p150
      %p152 = scmp.ne.s32.totalorder %s141, %s142
      %p153 = scmp.eq.s32.totalorder %s24, 0
      %p154 = por %p152, %p153
      %p155 = scmp.ne.s32.totalorder %s141, %s142
      %p156 = scmp.eq.s32.totalorder %s25, 3
      %p157 = por %p155, %p156
      %p159 = scmp.ne.s32.totalorder %s142, %s158
      %p160 = scmp.eq.s32.totalorder %s25, 0
      %p161 = por %p159, %p160
      %p162 = scmp.le.s32.totalorder 1, %s19
      %p163 = scmp.lt.s32.totalorder %s19, 5
      %p164 = pnand %p162, %p163
      %p165 = pneg %p164
      // Predicated region
      $region9: #{_pyramid_pooling_core.2} parent=5 // pred_check
        _
      $region10: #{_pyramid_pooling_core.2} parent=5 // pred_check_branch
        %167 = sbr.rel (%p164) target = $region12
      $region11: #{_pyramid_pooling_core.2} parent=5 // pred_region
        %s168 = ssub.s32 %s19, 1
      $region12: #{_pyramid_pooling_core.2} parent=5 // pred_fallthru
        _
      %p169 = scmp.lt.s32.totalorder %s19, 4
      // Predicated region
      $region13: #{_pyramid_pooling_core.2} parent=5 // pred_check
        %p170 = pneg %p169
      $region14: #{_pyramid_pooling_core.2} parent=5 // pred_check_branch
        %172 = sbr.rel (%p170) target = $region16
      $region15: #{_pyramid_pooling_core.2} parent=5 // pred_region
        // Predicated region
        $region17: #{_pyramid_pooling_core.2} parent=15 // pred_check
          %p173 = pneg %p60
        $region18: #{_pyramid_pooling_core.2} parent=15 // pred_check_branch
          %175 = sbr.rel (%p173) target = $region20
        $region19: #{_pyramid_pooling_core.2} parent=15 // pred_region
          %s176 = sand.u32 %s50, 1
          %s177 = scalar_lea.sflag [#allocation3], %s176
          %s178 = sand.u32 %s50, 1
          %s179 = smul.addr %s178, 512
          %s180 = scalar_lea.vmem [#allocation2], %s179
          %s181 = sadd.s32 %s26, %s28
          %s182 = smul.u32 64, %s181
          %s184 = ssub.s32 8192, 8192
          %185 = vsyncadd %s177, %s184
          %s186 = smul.addr %s182, 128
          %s187 = scalar_lea.hbm %s0, %s186
          %s188 = sshll.u32 %s180, 4
          %s189 = int_to_ptr.vmem [resolvable:$true] %s188
          %194 = dma.hbm_to_vmem [thread:$0]  %s187, 8192, %s189, %s177, 128, 128, 8
        $region20: #{_pyramid_pooling_core.2} parent=15 // pred_fallthru
          _
        // Predicated region
        $region21: #{_pyramid_pooling_core.2} parent=15 // pred_check
          %p195 = pneg %p90
        $region22: #{_pyramid_pooling_core.2} parent=15 // pred_check_branch
          %197 = sbr.rel (%p195) target = $region24
        $region23: #{_pyramid_pooling_core.2} parent=15 // pred_region
          %s198 = sand.u32 %s80, 1
          %s199 = scalar_lea.sflag [#allocation6], %s198
          %s200 = sand.u32 %s80, 1
          %s201 = smul.addr %s200, 512
          %s202 = scalar_lea.vmem [#allocation5], %s201
          %s203 = sadd.s32 %s26, %s28
          %s204 = smul.u32 64, %s203
          %s206 = ssub.s32 8192, 8192
          %207 = vsyncadd %s199, %s206
          %s208 = smul.addr %s27, 128
          %s209 = sadd.s32 %s204, %s208
          %s210 = smul.addr %s209, 128
          %s211 = scalar_lea.hbm %s1, %s210
          %s212 = sshll.u32 %s202, 4
          %s213 = int_to_ptr.vmem [resolvable:$true] %s212
          %218 = dma.hbm_to_vmem [thread:$0]  %s211, 8192, %s213, %s199, 128, 128, 8
        $region24: #{_pyramid_pooling_core.2} parent=15 // pred_fallthru
          _
      $region16: #{_pyramid_pooling_core.2} parent=5 // pred_fallthru
        _
      %p219 = scmp.le.s32.totalorder 1, %s19
      %p220 = scmp.lt.s32.totalorder %s19, 5
      %p221 = pnand %p219, %p220
      %p222 = pneg %p221
      // Predicated region
      $region25: #{_pyramid_pooling_core.2} parent=5 // pred_check
        _
      $region26: #{_pyramid_pooling_core.2} parent=5 // pred_check_branch
        %224 = sbr.rel (%p221) target = $region28
      $region27: #{_pyramid_pooling_core.2} parent=5 // pred_region
        %s225 = ssub.s32 %s19, 1
        %s226 = sand.u32 %s53, 1
        %s227 = scalar_lea.sflag [#allocation3], %s226
        %s228 = sand.u32 %s53, 1
        %s229 = smul.addr %s228, 512
        %s230 = scalar_lea.vmem [#allocation2], %s229
        // Predicated region
        $region29: #{_pyramid_pooling_core.2} parent=27 // pred_check
          %p231 = pneg %p66
        $region30: #{_pyramid_pooling_core.2} parent=27 // pred_check_branch
          %233 = sbr.rel (%p231) target = $region32
        $region31: #{_pyramid_pooling_core.2} parent=27 // pred_region
          %234 = dma.done %s227, 8192
        $region32: #{_pyramid_pooling_core.2} parent=27 // pred_fallthru
          _
        %s235 = sand.u32 %s83, 1
        %s236 = scalar_lea.sflag [#allocation6], %s235
        %s237 = sand.u32 %s83, 1
        %s238 = smul.addr %s237, 512
        %s239 = scalar_lea.vmem [#allocation5], %s238
        // Predicated region
        $region33: #{_pyramid_pooling_core.2} parent=27 // pred_check
          %p240 = pneg %p96
        $region34: #{_pyramid_pooling_core.2} parent=27 // pred_check_branch
          %242 = sbr.rel (%p240) target = $region36
        $region35: #{_pyramid_pooling_core.2} parent=27 // pred_region
          %243 = dma.done %s236, 8192
        $region36: #{_pyramid_pooling_core.2} parent=27 // pred_fallthru
          _
        %s244 = sand.u32 %s53, 1
        %s245 = scalar_lea.sflag [#allocation3], %s244
        %s246 = sand.u32 %s53, 1
        %s247 = smul.addr %s246, 512
        %s248 = scalar_lea.vmem [#allocation2], %s247
        %p249 = pneg %p66
        %p250 = pneg %p63
        %s251 = sand.u32 %s83, 1
        %s252 = scalar_lea.sflag [#allocation6], %s251
        %s253 = sand.u32 %s83, 1
        %s254 = smul.addr %s253, 512
        %s255 = scalar_lea.vmem [#allocation5], %s254
        %p256 = pneg %p96
        %p257 = pneg %p93
        %p258 = pneg %p124
        %p259 = pneg %p121
        %p260 = scmp.lt.s32.totalorder %s30, 1
        %s261 = scalar_select %p260, %s30, 1
        %p262 = scmp.lt.s32.totalorder %s29, 1
        %s263 = scalar_select %p262, %s29, 1
        %s264 = smul.addr %s263, 16
        %s265 = smul.addr %s261, 32
        %s266 = sadd.s32 %s264, %s265
        %s267 = smul.addr %s266, 8
        %s268 = scalar_lea.vmem %s2, %s267
        %p269 = pneg %p154
        %p270 = pneg %p151
        %s271 = sand.u32 %s141, 1
        %s272 = scalar_lea.sflag [#allocation4], %s271
        %s273 = sand.u32 %s141, 1
        %s274 = smul.addr %s273, 512
        %s275 = scalar_lea.vmem [#allocation7], %s274
        %s276 = sadd.s32 %s29, %s31
        %s277 = smul.u32 64, %s276
        %s278 = sadd.s32 %s29, %s31
        %s279 = smul.u32 64, %s278
        %p280 = scmp.lt.s32.totalorder %s30, 1
        %s281 = scalar_select %p280, %s30, 1
        %p282 = scmp.lt.s32.totalorder %s29, 1
        %s283 = scalar_select %p282, %s29, 1
        %s284 = smul.addr %s283, 16
        %s285 = smul.addr %s281, 32
        %s286 = sadd.s32 %s284, %s285
        %s287 = smul.addr %s286, 8
        %s288 = scalar_lea.vmem %s2, %s287
        %s289 = sadd.s32 %s29, %s31
        %s290 = smul.u32 64, %s289
        %p291 = scmp.eq.s32.totalorder %s31, 0
        // Predicated region
        $region37: #{_pyramid_pooling_core.2} parent=27 // pred_check
          %p292 = pneg %p291
        $region38: #{_pyramid_pooling_core.2} parent=27 // pred_check_branch
          %294 = sbr.rel (%p292) target = $region40
        $region39: #{_pyramid_pooling_core.2} parent=27 // pred_region
          %295 = vst [vmem:[%s288] sm:$0xff] 0.0
          %296 = vst [vmem:[%s288 + $0x8] sm:$0xff] 0.0
          %297 = vst [vmem:[%s288 + $0x10] sm:$0xff] 0.0
          %298 = vst [vmem:[%s288 + $0x18] sm:$0xff] 0.0
          %299 = vst [vmem:[%s288 + $0x20] sm:$0xff] 0.0
          %300 = vst [vmem:[%s288 + $0x28] sm:$0xff] 0.0
          %301 = vst [vmem:[%s288 + $0x30] sm:$0xff] 0.0
          %302 = vst [vmem:[%s288 + $0x38] sm:$0xff] 0.0
          %303 = vst [vmem:[%s288 + $0x40] sm:$0xff] 0.0
          %304 = vst [vmem:[%s288 + $0x48] sm:$0xff] 0.0
          %305 = vst [vmem:[%s288 + $0x50] sm:$0xff] 0.0
          %306 = vst [vmem:[%s288 + $0x58] sm:$0xff] 0.0
          %307 = vst [vmem:[%s288 + $0x60] sm:$0xff] 0.0
          %308 = vst [vmem:[%s288 + $0x68] sm:$0xff] 0.0
          %309 = vst [vmem:[%s288 + $0x70] sm:$0xff] 0.0
          %310 = vst [vmem:[%s288 + $0x78] sm:$0xff] 0.0
        $region40: #{_pyramid_pooling_core.2} parent=27 // pred_fallthru
          _
        %v311 = vld [vmem:[%s288] sm:$0xff]
        %v312 = vld [vmem:[%s288 + $0x8] sm:$0xff]
        %v313 = vld [vmem:[%s288 + $0x10] sm:$0xff]
        %v314 = vld [vmem:[%s288 + $0x18] sm:$0xff]
        %v315 = vld [vmem:[%s288 + $0x20] sm:$0xff]
        %v316 = vld [vmem:[%s288 + $0x28] sm:$0xff]
        %v317 = vld [vmem:[%s288 + $0x30] sm:$0xff]
        %v318 = vld [vmem:[%s288 + $0x38] sm:$0xff]
        %v319 = vld [vmem:[%s288 + $0x40] sm:$0xff]
        %v320 = vld [vmem:[%s288 + $0x48] sm:$0xff]
        %v321 = vld [vmem:[%s288 + $0x50] sm:$0xff]
        %v322 = vld [vmem:[%s288 + $0x58] sm:$0xff]
        %v323 = vld [vmem:[%s288 + $0x60] sm:$0xff]
        %v324 = vld [vmem:[%s288 + $0x68] sm:$0xff]
        %v325 = vld [vmem:[%s288 + $0x70] sm:$0xff]
        %v326 = vld [vmem:[%s288 + $0x78] sm:$0xff]
        %v327 = vld [vmem:[%s230] sm:$0xff]
        %v328 = vld [vmem:[%s230 + $0x8] sm:$0xff]
        %v329 = vld [vmem:[%s230 + $0x10] sm:$0xff]
        %v330 = vld [vmem:[%s230 + $0x18] sm:$0xff]
        %v331 = vld [vmem:[%s230 + $0x20] sm:$0xff]
        %v332 = vld [vmem:[%s230 + $0x28] sm:$0xff]
        %v333 = vld [vmem:[%s230 + $0x30] sm:$0xff]
        %v334 = vld [vmem:[%s230 + $0x38] sm:$0xff]
        %v335 = vld [vmem:[%s230 + $0x40] sm:$0xff]
        %v336 = vld [vmem:[%s230 + $0x48] sm:$0xff]
        %v337 = vld [vmem:[%s230 + $0x50] sm:$0xff]
        %v338 = vld [vmem:[%s230 + $0x58] sm:$0xff]
        %v339 = vld [vmem:[%s230 + $0x60] sm:$0xff]
        %v340 = vld [vmem:[%s230 + $0x68] sm:$0xff]
        %v341 = vld [vmem:[%s230 + $0x70] sm:$0xff]
        %v342 = vld [vmem:[%s230 + $0x78] sm:$0xff]
        %v343 = vld [vmem:[%s230 + $0x80] sm:$0xff]
        %v344 = vld [vmem:[%s230 + $0x88] sm:$0xff]
        %v345 = vld [vmem:[%s230 + $0x90] sm:$0xff]
        %v346 = vld [vmem:[%s230 + $0x98] sm:$0xff]
        %v347 = vld [vmem:[%s230 + $0xa0] sm:$0xff]
        %v348 = vld [vmem:[%s230 + $0xa8] sm:$0xff]
        %v349 = vld [vmem:[%s230 + $0xb0] sm:$0xff]
        %v350 = vld [vmem:[%s230 + $0xb8] sm:$0xff]
        %v351 = vld [vmem:[%s230 + $0xc0] sm:$0xff]
        %v352 = vld [vmem:[%s230 + $0xc8] sm:$0xff]
        %v353 = vld [vmem:[%s230 + $0xd0] sm:$0xff]
        %v354 = vld [vmem:[%s230 + $0xd8] sm:$0xff]
        %v355 = vld [vmem:[%s230 + $0xe0] sm:$0xff]
        %v356 = vld [vmem:[%s230 + $0xe8] sm:$0xff]
        %v357 = vld [vmem:[%s230 + $0xf0] sm:$0xff]
        %v358 = vld [vmem:[%s230 + $0xf8] sm:$0xff]
        %v359 = vld [vmem:[%s230 + $0x100] sm:$0xff]
        %v360 = vld [vmem:[%s230 + $0x108] sm:$0xff]
        %v361 = vld [vmem:[%s230 + $0x110] sm:$0xff]
        %v362 = vld [vmem:[%s230 + $0x118] sm:$0xff]
        %v363 = vld [vmem:[%s230 + $0x120] sm:$0xff]
        %v364 = vld [vmem:[%s230 + $0x128] sm:$0xff]
        %v365 = vld [vmem:[%s230 + $0x130] sm:$0xff]
        %v366 = vld [vmem:[%s230 + $0x138] sm:$0xff]
        %v367 = vld [vmem:[%s230 + $0x140] sm:$0xff]
        %v368 = vld [vmem:[%s230 + $0x148] sm:$0xff]
        %v369 = vld [vmem:[%s230 + $0x150] sm:$0xff]
        %v370 = vld [vmem:[%s230 + $0x158] sm:$0xff]
        %v371 = vld [vmem:[%s230 + $0x160] sm:$0xff]
        %v372 = vld [vmem:[%s230 + $0x168] sm:$0xff]
        %v373 = vld [vmem:[%s230 + $0x170] sm:$0xff]
        %v374 = vld [vmem:[%s230 + $0x178] sm:$0xff]
        %v375 = vld [vmem:[%s230 + $0x180] sm:$0xff]
        %v376 = vld [vmem:[%s230 + $0x188] sm:$0xff]
        %v377 = vld [vmem:[%s230 + $0x190] sm:$0xff]
        %v378 = vld [vmem:[%s230 + $0x198] sm:$0xff]
        %v379 = vld [vmem:[%s230 + $0x1a0] sm:$0xff]
        %v380 = vld [vmem:[%s230 + $0x1a8] sm:$0xff]
        %v381 = vld [vmem:[%s230 + $0x1b0] sm:$0xff]
        %v382 = vld [vmem:[%s230 + $0x1b8] sm:$0xff]
        %v383 = vld [vmem:[%s230 + $0x1c0] sm:$0xff]
        %v384 = vld [vmem:[%s230 + $0x1c8] sm:$0xff]
        %v385 = vld [vmem:[%s230 + $0x1d0] sm:$0xff]
        %v386 = vld [vmem:[%s230 + $0x1d8] sm:$0xff]
        %v387 = vld [vmem:[%s230 + $0x1e0] sm:$0xff]
        %v388 = vld [vmem:[%s230 + $0x1e8] sm:$0xff]
        %v389 = vld [vmem:[%s230 + $0x1f0] sm:$0xff]
        %v390 = vld [vmem:[%s230 + $0x1f8] sm:$0xff]
        %v391 = vld [vmem:[%s239] sm:$0xff]
        %v392 = vld [vmem:[%s239 + $0x8] sm:$0xff]
        %v393 = vld [vmem:[%s239 + $0x10] sm:$0xff]
        %v394 = vld [vmem:[%s239 + $0x18] sm:$0xff]
        %v395 = vld [vmem:[%s239 + $0x20] sm:$0xff]
        %v396 = vld [vmem:[%s239 + $0x28] sm:$0xff]
        %v397 = vld [vmem:[%s239 + $0x30] sm:$0xff]
        %v398 = vld [vmem:[%s239 + $0x38] sm:$0xff]
        %v399 = vld [vmem:[%s239 + $0x40] sm:$0xff]
        %v400 = vld [vmem:[%s239 + $0x48] sm:$0xff]
        %v401 = vld [vmem:[%s239 + $0x50] sm:$0xff]
        %v402 = vld [vmem:[%s239 + $0x58] sm:$0xff]
        %v403 = vld [vmem:[%s239 + $0x60] sm:$0xff]
        %v404 = vld [vmem:[%s239 + $0x68] sm:$0xff]
        %v405 = vld [vmem:[%s239 + $0x70] sm:$0xff]
        %v406 = vld [vmem:[%s239 + $0x78] sm:$0xff]
        %v407 = vld [vmem:[%s239 + $0x80] sm:$0xff]
        %v408 = vld [vmem:[%s239 + $0x88] sm:$0xff]
        %v409 = vld [vmem:[%s239 + $0x90] sm:$0xff]
        %v410 = vld [vmem:[%s239 + $0x98] sm:$0xff]
        %v411 = vld [vmem:[%s239 + $0xa0] sm:$0xff]
        %v412 = vld [vmem:[%s239 + $0xa8] sm:$0xff]
        %v413 = vld [vmem:[%s239 + $0xb0] sm:$0xff]
        %v414 = vld [vmem:[%s239 + $0xb8] sm:$0xff]
        %v415 = vld [vmem:[%s239 + $0xc0] sm:$0xff]
        %v416 = vld [vmem:[%s239 + $0xc8] sm:$0xff]
        %v417 = vld [vmem:[%s239 + $0xd0] sm:$0xff]
        %v418 = vld [vmem:[%s239 + $0xd8] sm:$0xff]
        %v419 = vld [vmem:[%s239 + $0xe0] sm:$0xff]
        %v420 = vld [vmem:[%s239 + $0xe8] sm:$0xff]
        %v421 = vld [vmem:[%s239 + $0xf0] sm:$0xff]
        %v422 = vld [vmem:[%s239 + $0xf8] sm:$0xff]
        %v423 = vld [vmem:[%s239 + $0x100] sm:$0xff]
        %v424 = vld [vmem:[%s239 + $0x108] sm:$0xff]
        %v425 = vld [vmem:[%s239 + $0x110] sm:$0xff]
        %v426 = vld [vmem:[%s239 + $0x118] sm:$0xff]
        %v427 = vld [vmem:[%s239 + $0x120] sm:$0xff]
        %v428 = vld [vmem:[%s239 + $0x128] sm:$0xff]
        %v429 = vld [vmem:[%s239 + $0x130] sm:$0xff]
        %v430 = vld [vmem:[%s239 + $0x138] sm:$0xff]
        %v431 = vld [vmem:[%s239 + $0x140] sm:$0xff]
        %v432 = vld [vmem:[%s239 + $0x148] sm:$0xff]
        %v433 = vld [vmem:[%s239 + $0x150] sm:$0xff]
        %v434 = vld [vmem:[%s239 + $0x158] sm:$0xff]
        %v435 = vld [vmem:[%s239 + $0x160] sm:$0xff]
        %v436 = vld [vmem:[%s239 + $0x168] sm:$0xff]
        %v437 = vld [vmem:[%s239 + $0x170] sm:$0xff]
        %v438 = vld [vmem:[%s239 + $0x178] sm:$0xff]
        %v439 = vld [vmem:[%s239 + $0x180] sm:$0xff]
        %v440 = vld [vmem:[%s239 + $0x188] sm:$0xff]
        %v441 = vld [vmem:[%s239 + $0x190] sm:$0xff]
        %v442 = vld [vmem:[%s239 + $0x198] sm:$0xff]
        %v443 = vld [vmem:[%s239 + $0x1a0] sm:$0xff]
        %v444 = vld [vmem:[%s239 + $0x1a8] sm:$0xff]
        %v445 = vld [vmem:[%s239 + $0x1b0] sm:$0xff]
        %v446 = vld [vmem:[%s239 + $0x1b8] sm:$0xff]
        %v447 = vld [vmem:[%s239 + $0x1c0] sm:$0xff]
        %v448 = vld [vmem:[%s239 + $0x1c8] sm:$0xff]
        %v449 = vld [vmem:[%s239 + $0x1d0] sm:$0xff]
        %v450 = vld [vmem:[%s239 + $0x1d8] sm:$0xff]
        %v451 = vld [vmem:[%s239 + $0x1e0] sm:$0xff]
        %v452 = vld [vmem:[%s239 + $0x1e8] sm:$0xff]
        %v453 = vld [vmem:[%s239 + $0x1f0] sm:$0xff]
        %v454 = vld [vmem:[%s239 + $0x1f8] sm:$0xff]
        %455 = vxpose.xlu0.b32.start [1/16] %v327, 128
        %456 = vxpose.xlu0.b32.cont [2/16] %v328, 128
        %457 = vxpose.xlu0.b32.cont [3/16] %v329, 128
        %458 = vxpose.xlu0.b32.cont [4/16] %v330, 128
        %459 = vxpose.xlu0.b32.cont [5/16] %v331, 128
        %460 = vxpose.xlu0.b32.cont [6/16] %v332, 128
        %461 = vxpose.xlu0.b32.cont [7/16] %v333, 128
        %462 = vxpose.xlu0.b32.cont [8/16] %v334, 128
        %463 = vxpose.xlu0.b32.cont [9/16] %v335, 128
        %464 = vxpose.xlu0.b32.cont [10/16] %v336, 128
        %465 = vxpose.xlu0.b32.cont [11/16] %v337, 128
        %466 = vxpose.xlu0.b32.cont [12/16] %v338, 128
        %467 = vxpose.xlu0.b32.cont [13/16] %v339, 128
        %468 = vxpose.xlu0.b32.cont [14/16] %v340, 128
        %469 = vxpose.xlu0.b32.cont [15/16] %v341, 128
        %470 = vxpose.xlu0.b32.end [16/16] %v342, 128
        %v471 = vpop.trf.xlu0
        %v472 = vpop.trf.xlu0
        %v473 = vpop.trf.xlu0
        %v474 = vpop.trf.xlu0
        %v475 = vpop.trf.xlu0
        %v476 = vpop.trf.xlu0
        %v477 = vpop.trf.xlu0
        %v478 = vpop.trf.xlu0
        %v479 = vpop.trf.xlu0
        %v480 = vpop.trf.xlu0
        %v481 = vpop.trf.xlu0
        %v482 = vpop.trf.xlu0
        %v483 = vpop.trf.xlu0
        %v484 = vpop.trf.xlu0
        %v485 = vpop.trf.xlu0
        %v486 = vpop.trf.xlu0
        %487 = vxpose.xlu0.b32.start [1/16] %v343, 128
        %488 = vxpose.xlu0.b32.cont [2/16] %v344, 128
        %489 = vxpose.xlu0.b32.cont [3/16] %v345, 128
        %490 = vxpose.xlu0.b32.cont [4/16] %v346, 128
        %491 = vxpose.xlu0.b32.cont [5/16] %v347, 128
        %492 = vxpose.xlu0.b32.cont [6/16] %v348, 128
        %493 = vxpose.xlu0.b32.cont [7/16] %v349, 128
        %494 = vxpose.xlu0.b32.cont [8/16] %v350, 128
        %495 = vxpose.xlu0.b32.cont [9/16] %v351, 128
        %496 = vxpose.xlu0.b32.cont [10/16] %v352, 128
        %497 = vxpose.xlu0.b32.cont [11/16] %v353, 128
        %498 = vxpose.xlu0.b32.cont [12/16] %v354, 128
        %499 = vxpose.xlu0.b32.cont [13/16] %v355, 128
        %500 = vxpose.xlu0.b32.cont [14/16] %v356, 128
        %501 = vxpose.xlu0.b32.cont [15/16] %v357, 128
        %502 = vxpose.xlu0.b32.end [16/16] %v358, 128
        %v503 = vpop.trf.xlu0
        %v504 = vpop.trf.xlu0
        %v505 = vpop.trf.xlu0
        %v506 = vpop.trf.xlu0
        %v507 = vpop.trf.xlu0
        %v508 = vpop.trf.xlu0
        %v509 = vpop.trf.xlu0
        %v510 = vpop.trf.xlu0
        %v511 = vpop.trf.xlu0
        %v512 = vpop.trf.xlu0
        %v513 = vpop.trf.xlu0
        %v514 = vpop.trf.xlu0
        %v515 = vpop.trf.xlu0
        %v516 = vpop.trf.xlu0
        %v517 = vpop.trf.xlu0
        %v518 = vpop.trf.xlu0
        %519 = vxpose.xlu0.b32.start [1/16] %v359, 128
        %520 = vxpose.xlu0.b32.cont [2/16] %v360, 128
        %521 = vxpose.xlu0.b32.cont [3/16] %v361, 128
        %522 = vxpose.xlu0.b32.cont [4/16] %v362, 128
        %523 = vxpose.xlu0.b32.cont [5/16] %v363, 128
        %524 = vxpose.xlu0.b32.cont [6/16] %v364, 128
        %525 = vxpose.xlu0.b32.cont [7/16] %v365, 128
        %526 = vxpose.xlu0.b32.cont [8/16] %v366, 128
        %527 = vxpose.xlu0.b32.cont [9/16] %v367, 128
        %528 = vxpose.xlu0.b32.cont [10/16] %v368, 128
        %529 = vxpose.xlu0.b32.cont [11/16] %v369, 128
        %530 = vxpose.xlu0.b32.cont [12/16] %v370, 128
        %531 = vxpose.xlu0.b32.cont [13/16] %v371, 128
        %532 = vxpose.xlu0.b32.cont [14/16] %v372, 128
        %533 = vxpose.xlu0.b32.cont [15/16] %v373, 128
        %534 = vxpose.xlu0.b32.end [16/16] %v374, 128
        %v535 = vpop.trf.xlu0
        %v536 = vpop.trf.xlu0
        %v537 = vpop.trf.xlu0
        %v538 = vpop.trf.xlu0
        %v539 = vpop.trf.xlu0
        %v540 = vpop.trf.xlu0
        %v541 = vpop.trf.xlu0
        %v542 = vpop.trf.xlu0
        %v543 = vpop.trf.xlu0
        %v544 = vpop.trf.xlu0
        %v545 = vpop.trf.xlu0
        %v546 = vpop.trf.xlu0
        %v547 = vpop.trf.xlu0
        %v548 = vpop.trf.xlu0
        %v549 = vpop.trf.xlu0
        %v550 = vpop.trf.xlu0
        %551 = vxpose.xlu0.b32.start [1/16] %v375, 128
        %552 = vxpose.xlu0.b32.cont [2/16] %v376, 128
        %553 = vxpose.xlu0.b32.cont [3/16] %v377, 128
        %554 = vxpose.xlu0.b32.cont [4/16] %v378, 128
        %555 = vxpose.xlu0.b32.cont [5/16] %v379, 128
        %556 = vxpose.xlu0.b32.cont [6/16] %v380, 128
        %557 = vxpose.xlu0.b32.cont [7/16] %v381, 128
        %558 = vxpose.xlu0.b32.cont [8/16] %v382, 128
        %559 = vxpose.xlu0.b32.cont [9/16] %v383, 128
        %560 = vxpose.xlu0.b32.cont [10/16] %v384, 128
        %561 = vxpose.xlu0.b32.cont [11/16] %v385, 128
        %562 = vxpose.xlu0.b32.cont [12/16] %v386, 128
        %563 = vxpose.xlu0.b32.cont [13/16] %v387, 128
        %564 = vxpose.xlu0.b32.cont [14/16] %v388, 128
        %565 = vxpose.xlu0.b32.cont [15/16] %v389, 128
        %566 = vxpose.xlu0.b32.end [16/16] %v390, 128
        %v567 = vpop.trf.xlu0
        %v568 = vpop.trf.xlu0
        %v569 = vpop.trf.xlu0
        %v570 = vpop.trf.xlu0
        %v571 = vpop.trf.xlu0
        %v572 = vpop.trf.xlu0
        %v573 = vpop.trf.xlu0
        %v574 = vpop.trf.xlu0
        %v575 = vpop.trf.xlu0
        %v576 = vpop.trf.xlu0
        %v577 = vpop.trf.xlu0
        %v578 = vpop.trf.xlu0
        %v579 = vpop.trf.xlu0
        %v580 = vpop.trf.xlu0
        %v581 = vpop.trf.xlu0
        %v582 = vpop.trf.xlu0
        %583 = vmatprep.subr.mxu0 0.0
        %584 = vmatpush1.msra.mxu0 %v406
        %585 = vmatprep.subr.mxu0 0.0
        %586 = vmatpush1.msra.mxu0 %v405
        %587 = vmatprep.subr.mxu0 0.0
        %588 = vmatpush1.msra.mxu0 %v404
        %589 = vmatprep.subr.mxu0 0.0
        %590 = vmatpush1.msra.mxu0 %v403
        %591 = vmatprep.subr.mxu0 0.0
        %592 = vmatpush1.msra.mxu0 %v402
        %593 = vmatprep.subr.mxu0 0.0
        %594 = vmatpush1.msra.mxu0 %v401
        %595 = vmatprep.subr.mxu0 0.0
        %596 = vmatpush1.msra.mxu0 %v400
        %597 = vmatprep.subr.mxu0 0.0
        %598 = vmatpush1.msra.mxu0 %v399
        %599 = vmatprep.subr.mxu0 0.0
        %600 = vmatpush1.msra.mxu0 %v398
        %601 = vmatprep.subr.mxu0 0.0
        %602 = vmatpush1.msra.mxu0 %v397
        %603 = vmatprep.subr.mxu0 0.0
        %604 = vmatpush1.msra.mxu0 %v396
        %605 = vmatprep.subr.mxu0 0.0
        %606 = vmatpush1.msra.mxu0 %v395
        %607 = vmatprep.subr.mxu0 0.0
        %608 = vmatpush1.msra.mxu0 %v394
        %609 = vmatprep.subr.mxu0 0.0
        %610 = vmatpush1.msra.mxu0 %v393
        %611 = vmatprep.subr.mxu0 0.0
        %612 = vmatpush1.msra.mxu0 %v392
        %613 = vmatprep.subr.mxu0 0.0
        %614 = vmatpush1.msra.mxu0 %v391
        %615 = vmatprep.subr.mxu0 0.0
        %616 = vmatpush2.msra.mxu0 %v422
        %617 = vmatprep.subr.mxu0 0.0
        %618 = vmatpush2.msra.mxu0 %v421
        %619 = vmatprep.subr.mxu0 0.0
        %620 = vmatpush2.msra.mxu0 %v420
        %621 = vmatprep.subr.mxu0 0.0
        %622 = vmatpush2.msra.mxu0 %v419
        %623 = vmatprep.subr.mxu0 0.0
        %624 = vmatpush2.msra.mxu0 %v418
        %625 = vmatprep.subr.mxu0 0.0
        %626 = vmatpush2.msra.mxu0 %v417
        %627 = vmatprep.subr.mxu0 0.0
        %628 = vmatpush2.msra.mxu0 %v416
        %629 = vmatprep.subr.mxu0 0.0
        %630 = vmatpush2.msra.mxu0 %v415
        %631 = vmatprep.subr.mxu0 0.0
        %632 = vmatpush2.msra.mxu0 %v414
        %633 = vmatprep.subr.mxu0 0.0
        %634 = vmatpush2.msra.mxu0 %v413
        %635 = vmatprep.subr.mxu0 0.0
        %636 = vmatpush2.msra.mxu0 %v412
        %637 = vmatprep.subr.mxu0 0.0
        %638 = vmatpush2.msra.mxu0 %v411
        %639 = vmatprep.subr.mxu0 0.0
        %640 = vmatpush2.msra.mxu0 %v410
        %641 = vmatprep.subr.mxu0 0.0
        %642 = vmatpush2.msra.mxu0 %v409
        %643 = vmatprep.subr.mxu0 0.0
        %644 = vmatpush2.msra.mxu0 %v408
        %645 = vmatprep.subr.mxu0 0.0
        %646 = vmatpush2.msra.mxu0 %v407
        %647 = vmatprep.mubr.f32.mxu0 %v503
        %648 = vmatmul.mubr.f32.gmra.mxu0 %v471
        %v649 = vpop.f32.mrf.mxu0
        %v650 = vadd.f32 0.0, %v649
        %v651 = vpop.f32.mrf.mxu0
        %652 = vmatprep.mubr.f32.mxu0 %v504
        %653 = vmatmul.mubr.f32.gmra.mxu0 %v472
        %v654 = vpop.f32.mrf.mxu0
        %v655 = vadd.f32 0.0, %v654
        %v656 = vpop.f32.mrf.mxu0
        %657 = vmatprep.mubr.f32.mxu0 %v505
        %658 = vmatmul.mubr.f32.gmra.mxu0 %v473
        %v659 = vpop.f32.mrf.mxu0
        %v660 = vadd.f32 0.0, %v659
        %v661 = vpop.f32.mrf.mxu0
        %662 = vmatprep.mubr.f32.mxu0 %v506
        %663 = vmatmul.mubr.f32.gmra.mxu0 %v474
        %v664 = vpop.f32.mrf.mxu0
        %v665 = vadd.f32 0.0, %v664
        %v666 = vpop.f32.mrf.mxu0
        %667 = vmatprep.mubr.f32.mxu0 %v507
        %668 = vmatmul.mubr.f32.gmra.mxu0 %v475
        %v669 = vpop.f32.mrf.mxu0
        %v670 = vadd.f32 0.0, %v669
        %v671 = vpop.f32.mrf.mxu0
        %672 = vmatprep.mubr.f32.mxu0 %v508
        %673 = vmatmul.mubr.f32.gmra.mxu0 %v476
        %v674 = vpop.f32.mrf.mxu0
        %v675 = vadd.f32 0.0, %v674
        %v676 = vpop.f32.mrf.mxu0
        %677 = vmatprep.mubr.f32.mxu0 %v509
        %678 = vmatmul.mubr.f32.gmra.mxu0 %v477
        %v679 = vpop.f32.mrf.mxu0
        %v680 = vadd.f32 0.0, %v679
        %v681 = vpop.f32.mrf.mxu0
        %682 = vmatprep.mubr.f32.mxu0 %v510
        %683 = vmatmul.mubr.f32.gmra.mxu0 %v478
        %v684 = vpop.f32.mrf.mxu0
        %v685 = vadd.f32 0.0, %v684
        %v686 = vpop.f32.mrf.mxu0
        %687 = vmatprep.mubr.f32.mxu0 %v511
        %688 = vmatmul.mubr.f32.gmra.mxu0 %v479
        %v689 = vpop.f32.mrf.mxu0
        %v690 = vadd.f32 0.0, %v689
        %v691 = vpop.f32.mrf.mxu0
        %692 = vmatprep.mubr.f32.mxu0 %v512
        %693 = vmatmul.mubr.f32.gmra.mxu0 %v480
        %v694 = vpop.f32.mrf.mxu0
        %v695 = vadd.f32 0.0, %v694
        %v696 = vpop.f32.mrf.mxu0
        %697 = vmatprep.mubr.f32.mxu0 %v513
        %698 = vmatmul.mubr.f32.gmra.mxu0 %v481
        %v699 = vpop.f32.mrf.mxu0
        %v700 = vadd.f32 0.0, %v699
        %v701 = vpop.f32.mrf.mxu0
        %702 = vmatprep.mubr.f32.mxu0 %v514
        %703 = vmatmul.mubr.f32.gmra.mxu0 %v482
        %v704 = vpop.f32.mrf.mxu0
        %v705 = vadd.f32 0.0, %v704
        %v706 = vpop.f32.mrf.mxu0
        %707 = vmatprep.mubr.f32.mxu0 %v515
        %708 = vmatmul.mubr.f32.gmra.mxu0 %v483
        %v709 = vpop.f32.mrf.mxu0
        %v710 = vadd.f32 0.0, %v709
        %v711 = vpop.f32.mrf.mxu0
        %712 = vmatprep.mubr.f32.mxu0 %v516
        %713 = vmatmul.mubr.f32.gmra.mxu0 %v484
        %v714 = vpop.f32.mrf.mxu0
        %v715 = vadd.f32 0.0, %v714
        %v716 = vpop.f32.mrf.mxu0
        %717 = vmatprep.mubr.f32.mxu0 %v517
        %718 = vmatmul.mubr.f32.gmra.mxu0 %v485
        %v719 = vpop.f32.mrf.mxu0
        %v720 = vadd.f32 0.0, %v719
        %v721 = vpop.f32.mrf.mxu0
        %722 = vmatprep.mubr.f32.mxu0 %v518
        %723 = vmatmul.mubr.f32.gmra.mxu0 %v486
        %v724 = vpop.f32.mrf.mxu0
        %v725 = vadd.f32 0.0, %v724
        %v726 = vpop.f32.mrf.mxu0
        %727 = vdwg.mxu0
        %728 = vmatprep.subr.mxu0 0.0
        %729 = vmatpush1.msra.mxu0 %v438
        %730 = vmatprep.subr.mxu0 0.0
        %731 = vmatpush1.msra.mxu0 %v437
        %732 = vmatprep.subr.mxu0 0.0
        %733 = vmatpush1.msra.mxu0 %v436
        %734 = vmatprep.subr.mxu0 0.0
        %735 = vmatpush1.msra.mxu0 %v435
        %736 = vmatprep.subr.mxu0 0.0
        %737 = vmatpush1.msra.mxu0 %v434
        %738 = vmatprep.subr.mxu0 0.0
        %739 = vmatpush1.msra.mxu0 %v433
        %740 = vmatprep.subr.mxu0 0.0
        %741 = vmatpush1.msra.mxu0 %v432
        %742 = vmatprep.subr.mxu0 0.0
        %743 = vmatpush1.msra.mxu0 %v431
        %744 = vmatprep.subr.mxu0 0.0
        %745 = vmatpush1.msra.mxu0 %v430
        %746 = vmatprep.subr.mxu0 0.0
        %747 = vmatpush1.msra.mxu0 %v429
        %748 = vmatprep.subr.mxu0 0.0
        %749 = vmatpush1.msra.mxu0 %v428
        %750 = vmatprep.subr.mxu0 0.0
        %751 = vmatpush1.msra.mxu0 %v427
        %752 = vmatprep.subr.mxu0 0.0
        %753 = vmatpush1.msra.mxu0 %v426
        %754 = vmatprep.subr.mxu0 0.0
        %755 = vmatpush1.msra.mxu0 %v425
        %756 = vmatprep.subr.mxu0 0.0
        %757 = vmatpush1.msra.mxu0 %v424
        %758 = vmatprep.subr.mxu0 0.0
        %759 = vmatpush1.msra.mxu0 %v423
        %760 = vmatprep.subr.mxu0 0.0
        %761 = vmatpush2.msra.mxu0 %v454
        %762 = vmatprep.subr.mxu0 0.0
        %763 = vmatpush2.msra.mxu0 %v453
        %764 = vmatprep.subr.mxu0 0.0
        %765 = vmatpush2.msra.mxu0 %v452
        %766 = vmatprep.subr.mxu0 0.0
        %767 = vmatpush2.msra.mxu0 %v451
        %768 = vmatprep.subr.mxu0 0.0
        %769 = vmatpush2.msra.mxu0 %v450
        %770 = vmatprep.subr.mxu0 0.0
        %771 = vmatpush2.msra.mxu0 %v449
        %772 = vmatprep.subr.mxu0 0.0
        %773 = vmatpush2.msra.mxu0 %v448
        %774 = vmatprep.subr.mxu0 0.0
        %775 = vmatpush2.msra.mxu0 %v447
        %776 = vmatprep.subr.mxu0 0.0
        %777 = vmatpush2.msra.mxu0 %v446
        %778 = vmatprep.subr.mxu0 0.0
        %779 = vmatpush2.msra.mxu0 %v445
        %780 = vmatprep.subr.mxu0 0.0
        %781 = vmatpush2.msra.mxu0 %v444
        %782 = vmatprep.subr.mxu0 0.0
        %783 = vmatpush2.msra.mxu0 %v443
        %784 = vmatprep.subr.mxu0 0.0
        %785 = vmatpush2.msra.mxu0 %v442
        %786 = vmatprep.subr.mxu0 0.0
        %787 = vmatpush2.msra.mxu0 %v441
        %788 = vmatprep.subr.mxu0 0.0
        %789 = vmatpush2.msra.mxu0 %v440
        %790 = vmatprep.subr.mxu0 0.0
        %791 = vmatpush2.msra.mxu0 %v439
        %792 = vmatprep.mubr.f32.mxu0 %v567
        %793 = vmatmul.mubr.f32.gmra.mxu0 %v535
        %v794 = vpop.f32.mrf.mxu0
        %v795 = vadd.f32 %v650, %v794
        %v796 = vpop.f32.mrf.mxu0
        %797 = vmatprep.mubr.f32.mxu0 %v568
        %798 = vmatmul.mubr.f32.gmra.mxu0 %v536
        %v799 = vpop.f32.mrf.mxu0
        %v800 = vadd.f32 %v655, %v799
        %v801 = vpop.f32.mrf.mxu0
        %802 = vmatprep.mubr.f32.mxu0 %v569
        %803 = vmatmul.mubr.f32.gmra.mxu0 %v537
        %v804 = vpop.f32.mrf.mxu0
        %v805 = vadd.f32 %v660, %v804
        %v806 = vpop.f32.mrf.mxu0
        %807 = vmatprep.mubr.f32.mxu0 %v570
        %808 = vmatmul.mubr.f32.gmra.mxu0 %v538
        %v809 = vpop.f32.mrf.mxu0
        %v810 = vadd.f32 %v665, %v809
        %v811 = vpop.f32.mrf.mxu0
        %812 = vmatprep.mubr.f32.mxu0 %v571
        %813 = vmatmul.mubr.f32.gmra.mxu0 %v539
        %v814 = vpop.f32.mrf.mxu0
        %v815 = vadd.f32 %v670, %v814
        %v816 = vpop.f32.mrf.mxu0
        %817 = vmatprep.mubr.f32.mxu0 %v572
        %818 = vmatmul.mubr.f32.gmra.mxu0 %v540
        %v819 = vpop.f32.mrf.mxu0
        %v820 = vadd.f32 %v675, %v819
        %v821 = vpop.f32.mrf.mxu0
        %822 = vmatprep.mubr.f32.mxu0 %v573
        %823 = vmatmul.mubr.f32.gmra.mxu0 %v541
        %v824 = vpop.f32.mrf.mxu0
        %v825 = vadd.f32 %v680, %v824
        %v826 = vpop.f32.mrf.mxu0
        %827 = vmatprep.mubr.f32.mxu0 %v574
        %828 = vmatmul.mubr.f32.gmra.mxu0 %v542
        %v829 = vpop.f32.mrf.mxu0
        %v830 = vadd.f32 %v685, %v829
        %v831 = vpop.f32.mrf.mxu0
        %832 = vmatprep.mubr.f32.mxu0 %v575
        %833 = vmatmul.mubr.f32.gmra.mxu0 %v543
        %v834 = vpop.f32.mrf.mxu0
        %v835 = vadd.f32 %v690, %v834
        %v836 = vpop.f32.mrf.mxu0
        %837 = vmatprep.mubr.f32.mxu0 %v576
        %838 = vmatmul.mubr.f32.gmra.mxu0 %v544
        %v839 = vpop.f32.mrf.mxu0
        %v840 = vadd.f32 %v695, %v839
        %v841 = vpop.f32.mrf.mxu0
        %842 = vmatprep.mubr.f32.mxu0 %v577
        %843 = vmatmul.mubr.f32.gmra.mxu0 %v545
        %v844 = vpop.f32.mrf.mxu0
        %v845 = vadd.f32 %v700, %v844
        %v846 = vpop.f32.mrf.mxu0
        %847 = vmatprep.mubr.f32.mxu0 %v578
        %848 = vmatmul.mubr.f32.gmra.mxu0 %v546
        %v849 = vpop.f32.mrf.mxu0
        %v850 = vadd.f32 %v705, %v849
        %v851 = vpop.f32.mrf.mxu0
        %852 = vmatprep.mubr.f32.mxu0 %v579
        %853 = vmatmul.mubr.f32.gmra.mxu0 %v547
        %v854 = vpop.f32.mrf.mxu0
        %v855 = vadd.f32 %v710, %v854
        %v856 = vpop.f32.mrf.mxu0
        %857 = vmatprep.mubr.f32.mxu0 %v580
        %858 = vmatmul.mubr.f32.gmra.mxu0 %v548
        %v859 = vpop.f32.mrf.mxu0
        %v860 = vadd.f32 %v715, %v859
        %v861 = vpop.f32.mrf.mxu0
        %862 = vmatprep.mubr.f32.mxu0 %v581
        %863 = vmatmul.mubr.f32.gmra.mxu0 %v549
        %v864 = vpop.f32.mrf.mxu0
        %v865 = vadd.f32 %v720, %v864
        %v866 = vpop.f32.mrf.mxu0
        %867 = vmatprep.mubr.f32.mxu0 %v582
        %868 = vmatmul.mubr.f32.gmra.mxu0 %v550
        %v869 = vpop.f32.mrf.mxu0
        %v870 = vadd.f32 %v725, %v869
        %v871 = vpop.f32.mrf.mxu0
        %872 = vdwg.mxu0
        %v873 = vadd.f32 %v311, %v795
        %v874 = vadd.f32 %v312, %v800
        %v875 = vadd.f32 %v313, %v805
        %v876 = vadd.f32 %v314, %v810
        %v877 = vadd.f32 %v315, %v815
        %v878 = vadd.f32 %v316, %v820
        %v879 = vadd.f32 %v317, %v825
        %v880 = vadd.f32 %v318, %v830
        %v881 = vadd.f32 %v319, %v835
        %v882 = vadd.f32 %v320, %v840
        %v883 = vadd.f32 %v321, %v845
        %v884 = vadd.f32 %v322, %v850
        %v885 = vadd.f32 %v323, %v855
        %v886 = vadd.f32 %v324, %v860
        %v887 = vadd.f32 %v325, %v865
        %v888 = vadd.f32 %v326, %v870
        %889 = vst [vmem:[%s288] sm:$0xff] %v873
        %890 = vst [vmem:[%s288 + $0x8] sm:$0xff] %v874
        %891 = vst [vmem:[%s288 + $0x10] sm:$0xff] %v875
        %892 = vst [vmem:[%s288 + $0x18] sm:$0xff] %v876
        %893 = vst [vmem:[%s288 + $0x20] sm:$0xff] %v877
        %894 = vst [vmem:[%s288 + $0x28] sm:$0xff] %v878
        %895 = vst [vmem:[%s288 + $0x30] sm:$0xff] %v879
        %896 = vst [vmem:[%s288 + $0x38] sm:$0xff] %v880
        %897 = vst [vmem:[%s288 + $0x40] sm:$0xff] %v881
        %898 = vst [vmem:[%s288 + $0x48] sm:$0xff] %v882
        %899 = vst [vmem:[%s288 + $0x50] sm:$0xff] %v883
        %900 = vst [vmem:[%s288 + $0x58] sm:$0xff] %v884
        %901 = vst [vmem:[%s288 + $0x60] sm:$0xff] %v885
        %902 = vst [vmem:[%s288 + $0x68] sm:$0xff] %v886
        %903 = vst [vmem:[%s288 + $0x70] sm:$0xff] %v887
        %904 = vst [vmem:[%s288 + $0x78] sm:$0xff] %v888
        %v905 = vld [vmem:[%s239] sm:$0xff]
        %v906 = vld [vmem:[%s239 + $0x8] sm:$0xff]
        %v907 = vld [vmem:[%s239 + $0x10] sm:$0xff]
        %v908 = vld [vmem:[%s239 + $0x18] sm:$0xff]
        %v909 = vld [vmem:[%s239 + $0x20] sm:$0xff]
        %v910 = vld [vmem:[%s239 + $0x28] sm:$0xff]
        %v911 = vld [vmem:[%s239 + $0x30] sm:$0xff]
        %v912 = vld [vmem:[%s239 + $0x38] sm:$0xff]
        %v913 = vld [vmem:[%s239 + $0x40] sm:$0xff]
        %v914 = vld [vmem:[%s239 + $0x48] sm:$0xff]
        %v915 = vld [vmem:[%s239 + $0x50] sm:$0xff]
        %v916 = vld [vmem:[%s239 + $0x58] sm:$0xff]
        %v917 = vld [vmem:[%s239 + $0x60] sm:$0xff]
        %v918 = vld [vmem:[%s239 + $0x68] sm:$0xff]
        %v919 = vld [vmem:[%s239 + $0x70] sm:$0xff]
        %v920 = vld [vmem:[%s239 + $0x78] sm:$0xff]
        %v921 = vld [vmem:[%s239 + $0x80] sm:$0xff]
        %v922 = vld [vmem:[%s239 + $0x88] sm:$0xff]
        %v923 = vld [vmem:[%s239 + $0x90] sm:$0xff]
        %v924 = vld [vmem:[%s239 + $0x98] sm:$0xff]
        %v925 = vld [vmem:[%s239 + $0xa0] sm:$0xff]
        %v926 = vld [vmem:[%s239 + $0xa8] sm:$0xff]
        %v927 = vld [vmem:[%s239 + $0xb0] sm:$0xff]
        %v928 = vld [vmem:[%s239 + $0xb8] sm:$0xff]
        %v929 = vld [vmem:[%s239 + $0xc0] sm:$0xff]
        %v930 = vld [vmem:[%s239 + $0xc8] sm:$0xff]
        %v931 = vld [vmem:[%s239 + $0xd0] sm:$0xff]
        %v932 = vld [vmem:[%s239 + $0xd8] sm:$0xff]
        %v933 = vld [vmem:[%s239 + $0xe0] sm:$0xff]
        %v934 = vld [vmem:[%s239 + $0xe8] sm:$0xff]
        %v935 = vld [vmem:[%s239 + $0xf0] sm:$0xff]
        %v936 = vld [vmem:[%s239 + $0xf8] sm:$0xff]
        %v937 = vld [vmem:[%s239 + $0x100] sm:$0xff]
        %v938 = vld [vmem:[%s239 + $0x108] sm:$0xff]
        %v939 = vld [vmem:[%s239 + $0x110] sm:$0xff]
        %v940 = vld [vmem:[%s239 + $0x118] sm:$0xff]
        %v941 = vld [vmem:[%s239 + $0x120] sm:$0xff]
        %v942 = vld [vmem:[%s239 + $0x128] sm:$0xff]
        %v943 = vld [vmem:[%s239 + $0x130] sm:$0xff]
        %v944 = vld [vmem:[%s239 + $0x138] sm:$0xff]
        %v945 = vld [vmem:[%s239 + $0x140] sm:$0xff]
        %v946 = vld [vmem:[%s239 + $0x148] sm:$0xff]
        %v947 = vld [vmem:[%s239 + $0x150] sm:$0xff]
        %v948 = vld [vmem:[%s239 + $0x158] sm:$0xff]
        %v949 = vld [vmem:[%s239 + $0x160] sm:$0xff]
        %v950 = vld [vmem:[%s239 + $0x168] sm:$0xff]
        %v951 = vld [vmem:[%s239 + $0x170] sm:$0xff]
        %v952 = vld [vmem:[%s239 + $0x178] sm:$0xff]
        %v953 = vld [vmem:[%s239 + $0x180] sm:$0xff]
        %v954 = vld [vmem:[%s239 + $0x188] sm:$0xff]
        %v955 = vld [vmem:[%s239 + $0x190] sm:$0xff]
        %v956 = vld [vmem:[%s239 + $0x198] sm:$0xff]
        %v957 = vld [vmem:[%s239 + $0x1a0] sm:$0xff]
        %v958 = vld [vmem:[%s239 + $0x1a8] sm:$0xff]
        %v959 = vld [vmem:[%s239 + $0x1b0] sm:$0xff]
        %v960 = vld [vmem:[%s239 + $0x1b8] sm:$0xff]
        %v961 = vld [vmem:[%s239 + $0x1c0] sm:$0xff]
        %v962 = vld [vmem:[%s239 + $0x1c8] sm:$0xff]
        %v963 = vld [vmem:[%s239 + $0x1d0] sm:$0xff]
        %v964 = vld [vmem:[%s239 + $0x1d8] sm:$0xff]
        %v965 = vld [vmem:[%s239 + $0x1e0] sm:$0xff]
        %v966 = vld [vmem:[%s239 + $0x1e8] sm:$0xff]
        %v967 = vld [vmem:[%s239 + $0x1f0] sm:$0xff]
        %v968 = vld [vmem:[%s239 + $0x1f8] sm:$0xff]
        %969 = vst [vmem:[%s275] sm:$0xff] %v905
        %970 = vst [vmem:[%s275 + $0x8] sm:$0xff] %v906
        %971 = vst [vmem:[%s275 + $0x10] sm:$0xff] %v907
        %972 = vst [vmem:[%s275 + $0x18] sm:$0xff] %v908
        %973 = vst [vmem:[%s275 + $0x20] sm:$0xff] %v909
        %974 = vst [vmem:[%s275 + $0x28] sm:$0xff] %v910
        %975 = vst [vmem:[%s275 + $0x30] sm:$0xff] %v911
        %976 = vst [vmem:[%s275 + $0x38] sm:$0xff] %v912
        %977 = vst [vmem:[%s275 + $0x40] sm:$0xff] %v913
        %978 = vst [vmem:[%s275 + $0x48] sm:$0xff] %v914
        %979 = vst [vmem:[%s275 + $0x50] sm:$0xff] %v915
        %980 = vst [vmem:[%s275 + $0x58] sm:$0xff] %v916
        %981 = vst [vmem:[%s275 + $0x60] sm:$0xff] %v917
        %982 = vst [vmem:[%s275 + $0x68] sm:$0xff] %v918
        %983 = vst [vmem:[%s275 + $0x70] sm:$0xff] %v919
        %984 = vst [vmem:[%s275 + $0x78] sm:$0xff] %v920
        %985 = vst [vmem:[%s275 + $0x80] sm:$0xff] %v921
        %986 = vst [vmem:[%s275 + $0x88] sm:$0xff] %v922
        %987 = vst [vmem:[%s275 + $0x90] sm:$0xff] %v923
        %988 = vst [vmem:[%s275 + $0x98] sm:$0xff] %v924
        %989 = vst [vmem:[%s275 + $0xa0] sm:$0xff] %v925
        %990 = vst [vmem:[%s275 + $0xa8] sm:$0xff] %v926
        %991 = vst [vmem:[%s275 + $0xb0] sm:$0xff] %v927
        %992 = vst [vmem:[%s275 + $0xb8] sm:$0xff] %v928
        %993 = vst [vmem:[%s275 + $0xc0] sm:$0xff] %v929
        %994 = vst [vmem:[%s275 + $0xc8] sm:$0xff] %v930
        %995 = vst [vmem:[%s275 + $0xd0] sm:$0xff] %v931
        %996 = vst [vmem:[%s275 + $0xd8] sm:$0xff] %v932
        %997 = vst [vmem:[%s275 + $0xe0] sm:$0xff] %v933
        %998 = vst [vmem:[%s275 + $0xe8] sm:$0xff] %v934
        %999 = vst [vmem:[%s275 + $0xf0] sm:$0xff] %v935
        %1000 = vst [vmem:[%s275 + $0xf8] sm:$0xff] %v936
        %1001 = vst [vmem:[%s275 + $0x100] sm:$0xff] %v937
        %1002 = vst [vmem:[%s275 + $0x108] sm:$0xff] %v938
        %1003 = vst [vmem:[%s275 + $0x110] sm:$0xff] %v939
        %1004 = vst [vmem:[%s275 + $0x118] sm:$0xff] %v940
        %1005 = vst [vmem:[%s275 + $0x120] sm:$0xff] %v941
        %1006 = vst [vmem:[%s275 + $0x128] sm:$0xff] %v942
        %1007 = vst [vmem:[%s275 + $0x130] sm:$0xff] %v943
        %1008 = vst [vmem:[%s275 + $0x138] sm:$0xff] %v944
        %1009 = vst [vmem:[%s275 + $0x140] sm:$0xff] %v945
        %1010 = vst [vmem:[%s275 + $0x148] sm:$0xff] %v946
        %1011 = vst [vmem:[%s275 + $0x150] sm:$0xff] %v947
        %1012 = vst [vmem:[%s275 + $0x158] sm:$0xff] %v948
        %1013 = vst [vmem:[%s275 + $0x160] sm:$0xff] %v949
        %1014 = vst [vmem:[%s275 + $0x168] sm:$0xff] %v950
        %1015 = vst [vmem:[%s275 + $0x170] sm:$0xff] %v951
        %1016 = vst [vmem:[%s275 + $0x178] sm:$0xff] %v952
        %1017 = vst [vmem:[%s275 + $0x180] sm:$0xff] %v953
        %1018 = vst [vmem:[%s275 + $0x188] sm:$0xff] %v954
        %1019 = vst [vmem:[%s275 + $0x190] sm:$0xff] %v955
        %1020 = vst [vmem:[%s275 + $0x198] sm:$0xff] %v956
        %1021 = vst [vmem:[%s275 + $0x1a0] sm:$0xff] %v957
        %1022 = vst [vmem:[%s275 + $0x1a8] sm:$0xff] %v958
        %1023 = vst [vmem:[%s275 + $0x1b0] sm:$0xff] %v959
        %1024 = vst [vmem:[%s275 + $0x1b8] sm:$0xff] %v960
        %1025 = vst [vmem:[%s275 + $0x1c0] sm:$0xff] %v961
        %1026 = vst [vmem:[%s275 + $0x1c8] sm:$0xff] %v962
        %1027 = vst [vmem:[%s275 + $0x1d0] sm:$0xff] %v963
        %1028 = vst [vmem:[%s275 + $0x1d8] sm:$0xff] %v964
        %1029 = vst [vmem:[%s275 + $0x1e0] sm:$0xff] %v965
        %1030 = vst [vmem:[%s275 + $0x1e8] sm:$0xff] %v966
        %1031 = vst [vmem:[%s275 + $0x1f0] sm:$0xff] %v967
        %1032 = vst [vmem:[%s275 + $0x1f8] sm:$0xff] %v968
        %p1033 = scmp.lt.s32.totalorder %s30, 1
        %s1034 = scalar_select %p1033, %s30, 1
        %p1035 = scmp.lt.s32.totalorder %s29, 1
        %s1036 = scalar_select %p1035, %s29, 1
        %s1037 = smul.addr %s1036, 16
        %s1038 = smul.addr %s1034, 32
        %s1039 = sadd.s32 %s1037, %s1038
        %s1040 = smul.addr %s1039, 8
        %s1041 = scalar_lea.vmem %s2, %s1040
        %s1042 = sand.u32 %s141, 1
        %s1043 = scalar_lea.sflag [#allocation4], %s1042
        %s1044 = sand.u32 %s141, 1
        %s1045 = smul.addr %s1044, 512
        %s1046 = scalar_lea.vmem [#allocation7], %s1045
        // Predicated region
        $region41: #{_pyramid_pooling_core.2} parent=27 // pred_check
          %p1047 = pneg %p121
        $region42: #{_pyramid_pooling_core.2} parent=27 // pred_check_branch
          %1049 = sbr.rel (%p1047) target = $region44
        $region43: #{_pyramid_pooling_core.2} parent=27 // pred_region
          _
        $region44: #{_pyramid_pooling_core.2} parent=27 // pred_fallthru
          _
        // Predicated region
        $region45: #{_pyramid_pooling_core.2} parent=27 // pred_check
          %p1050 = pneg %p151
        $region46: #{_pyramid_pooling_core.2} parent=27 // pred_check_branch
          %1052 = sbr.rel (%p1050) target = $region48
        $region47: #{_pyramid_pooling_core.2} parent=27 // pred_region
          %s1053 = sadd.s32 %s29, %s31
          %s1054 = smul.u32 64, %s1053
          %s1056 = ssub.s32 8192, 8192
          %1057 = vsyncadd %s1043, %s1056
          %s1058 = smul.addr %s1054, 2
          %s1059 = smul.addr %s30, 256
          %s1060 = sadd.s32 %s1058, %s1059
          %s1061 = smul.addr %s1060, 128
          %s1062 = scalar_lea.hbm %s3, %s1061
          %s1063 = sshll.u32 %s1046, 4
          %s1064 = int_to_ptr.vmem [resolvable:$true] %s1063
          %1069 = dma.vmem_to_hbm [thread:$0]  %s1064, 8192, %s1062, %s1043, 128, 256, 8
        $region48: #{_pyramid_pooling_core.2} parent=27 // pred_fallthru
          _
      $region28: #{_pyramid_pooling_core.2} parent=5 // pred_fallthru
        _
      %p1070 = scmp.le.s32.totalorder 2, %s19
      // Predicated region
      $region49: #{_pyramid_pooling_core.2} parent=5 // pred_check
        %p1071 = pneg %p1070
      $region50: #{_pyramid_pooling_core.2} parent=5 // pred_check_branch
        %1073 = sbr.rel (%p1071) target = $region52
      $region51: #{_pyramid_pooling_core.2} parent=5 // pred_region
        %s1074 = ssub.s32 %s19, 2
        // Predicated region
        $region53: #{_pyramid_pooling_core.2} parent=51 // pred_check
          %p1075 = pneg %p127
        $region54: #{_pyramid_pooling_core.2} parent=51 // pred_check_branch
          %1077 = sbr.rel (%p1075) target = $region56
        $region55: #{_pyramid_pooling_core.2} parent=51 // pred_region
          %p1078 = scmp.lt.s32.totalorder %s33, 1
          %s1079 = scalar_select %p1078, %s33, 1
          %p1080 = scmp.lt.s32.totalorder %s32, 1
          %s1081 = scalar_select %p1080, %s32, 1
          %s1082 = smul.addr %s1081, 16
          %s1083 = smul.addr %s1079, 32
          %s1084 = sadd.s32 %s1082, %s1083
          %s1085 = smul.addr %s1084, 8
          %s1086 = scalar_lea.vmem %s2, %s1085
        $region56: #{_pyramid_pooling_core.2} parent=51 // pred_fallthru
          _
        // Predicated region
        $region57: #{_pyramid_pooling_core.2} parent=51 // pred_check
          %p1087 = pneg %p157
        $region58: #{_pyramid_pooling_core.2} parent=51 // pred_check_branch
          %1089 = sbr.rel (%p1087) target = $region60
        $region59: #{_pyramid_pooling_core.2} parent=51 // pred_region
          %s1090 = sand.u32 %s142, 1
          %s1091 = scalar_lea.sflag [#allocation4], %s1090
          %s1092 = sand.u32 %s142, 1
          %s1093 = smul.addr %s1092, 512
          %s1094 = scalar_lea.vmem [#allocation7], %s1093
          %1095 = dma.done %s1091, 8192
        $region60: #{_pyramid_pooling_core.2} parent=51 // pred_fallthru
          _
      $region52: #{_pyramid_pooling_core.2} parent=5 // pred_fallthru
        _
    $region6: #{_pyramid_pooling_core.2} parent=1 // loop_footer
      %s23 = sadd.s32 1, %s19
    $region7: #{_pyramid_pooling_core.2} parent=1 // loop_footer_branch
      %18 = sbr.rel target = $region3
    $region8: #{_pyramid_pooling_core.2} parent=1 // loop_exit
      _
    %1096 = vsyncpa [#allocation3], 1
    %s1097 = scalar_lea.sflag [#allocation3], 1
    %1098 = vsyncpa %s1097, 1
    %1099 = vsyncpa [#allocation6], 1
    %s1100 = scalar_lea.sflag [#allocation6], 1
    %1101 = vsyncpa %s1100, 1
    %1102 = vsyncpa [#allocation4], 1
    %s1103 = scalar_lea.sflag [#allocation4], 1
    %1104 = vsyncpa %s1103, 1

// kernel: _pyramid_pooling_core.2
$region0: #{_pyramid_pooling_core.2}
  #allocation0 [shape = 'u32[]', space=smem, size = 0x4, offset = 0x4, fixed_abs, tag = 'smem constant byte address 0x4 - core index']
  #allocation1 [shape = 'u32[144,128]{1,0:T(1,128)}', space=vmem, size = 0x12000, scoped, tag = 'internal scratch']
  %s0 = inlined_call_operand.hbm [shape: f32[1024,128], index: 0, kind: input, shape index: {}]
  %s1 = inlined_call_operand.hbm [shape: f32[2,1024,128], index: 1, kind: input, shape index: {}]
  %s2 = inlined_call_operand.vmem [shape: f32[2,2,128,128], index: 2, kind: output, shape index: {}]
  %s3 = sld [smem:[#allocation0]]
  $region53: #{_pyramid_pooling_core.2} parent=0
    _
  %s5 = ssub.s32 1, %s3
  %s6 = scalar_select 0, %s5, %s3
  $region1: #{_pyramid_pooling_core.2} parent=0
    #allocation2 [shape = 'u8[524288]{0}', space=vmem, size = 0x80000, scoped, tag = 'input window, operand 0']
    #allocation3 [shape = 's32[2]{0}', space=sflag, size = 0x8, scoped, tag = 'scoped memory for _pyramid_pooling_core.2']
    #allocation4 [shape = 'u8[524288]{0}', space=vmem, size = 0x80000, scoped, tag = 'input window, operand 1']
    #allocation5 [shape = 's32[2]{0}', space=sflag, size = 0x8, scoped, tag = 'scoped memory for _pyramid_pooling_core.2']
    %7 = vsyncpa [#allocation3], 0
    %s8 = scalar_lea.sflag [#allocation3], 1
    %9 = vsyncpa %s8, 0
    %10 = vsyncpa [#allocation5], 0
    %s11 = scalar_lea.sflag [#allocation5], 1
    %12 = vsyncpa %s11, 0
    loop: start=0, step=1, limit=6
    $region2: #{_pyramid_pooling_core.2} parent=1 // loop_pre_header
      _
    $region3: #{_pyramid_pooling_core.2} parent=1 // loop_header
      %s14 = sphi 0, %s18
      %p15 = scmp.ge.s32.totalorder %s14, 6
      %s21 = sphi 0, %s40
      %s22 = sphi 0, %s36
      %s23 = sphi 0, %s32
      %s24 = sphi 0, %s21
      %s25 = sphi 0, %s22
      %s26 = sphi 0, %s23
      %s27 = sphi 0, %s24
      %s28 = sphi 0, %s25
      %s29 = sphi 0, %s26
      %s45 = sphi 0, %s47
      %s48 = sphi 0, %s45
      %s49 = sphi 0, %s48
      %s65 = sphi 0, %s49
      %s75 = sphi 0, %s77
      %s78 = sphi 0, %s75
      %s79 = sphi 0, %s78
      %s95 = sphi 0, %s79
      %s103 = sphi 0, %s105
      %s106 = sphi 0, %s103
      %s107 = sphi 0, %s106
      %s123 = sphi 0, %s107
    $region4: #{_pyramid_pooling_core.2} parent=1 // loop_header_branch
      %17 = sbr.rel (%p15) target = $region8
    $region5: #{_pyramid_pooling_core.2} parent=1 // loop_body
      %s19 = ssub.s32 %s14, 1
      %s20 = ssub.s32 %s14, 2
      %s30 = sadd.s32 1, %s23
      %p31 = scmp.ge.s32.totalorder %s30, 1
      %s32 = scalar_select %p31, 0, %s30
      %s33 = sadd.s32 1, %s22
      %s34 = scalar_select %p31, %s33, %s22
      %p35 = scmp.ge.s32.totalorder %s34, 2
      %s36 = scalar_select %p35, 0, %s34
      %s37 = sadd.s32 1, %s21
      %s38 = scalar_select %p35, %s37, %s21
      %p39 = scmp.ge.s32.totalorder %s38, 2
      %s40 = scalar_select %p39, 0, %s38
      %s41 = sadd.s32 %s21, %s23
      %s42 = sadd.s32 %s40, %s32
      %s43 = ssub.s32 %s41, %s42
      %p44 = scmp.eq.s32.totalorder %s43, 0
      %s46 = sadd.s32 %s45, 1
      %s47 = scalar_select %p44, %s45, %s46
      %p50 = pneg %p44
      %p51 = scmp.eq.s32.totalorder %s14, 3
      %p52 = por %p50, %p51
      %p53 = scmp.ne.s32.totalorder %s45, %s48
      %p54 = scmp.eq.s32.totalorder %s14, 0
      %p55 = por %p53, %p54
      %p56 = scmp.ne.s32.totalorder %s45, %s48
      %p57 = scmp.eq.s32.totalorder %s19, 3
      %p58 = por %p56, %p57
      %p59 = scmp.ne.s32.totalorder %s48, %s49
      %p60 = scmp.eq.s32.totalorder %s19, 0
      %p61 = por %p59, %p60
      %p62 = scmp.ne.s32.totalorder %s48, %s49
      %p63 = scmp.eq.s32.totalorder %s20, 3
      %p64 = por %p62, %p63
      %p66 = scmp.ne.s32.totalorder %s49, %s65
      %p67 = scmp.eq.s32.totalorder %s20, 0
      %p68 = por %p66, %p67
      %s69 = sadd.s32 %s21, %s23
      %s70 = sadd.s32 %s40, %s32
      %s71 = ssub.s32 %s22, %s36
      %s72 = ssub.s32 %s69, %s70
      %s73 = sor.u32 %s71, %s72
      %p74 = scmp.eq.s32.totalorder %s73, 0
      %s76 = sadd.s32 %s75, 1
      %s77 = scalar_select %p74, %s75, %s76
      %p80 = pneg %p74
      %p81 = scmp.eq.s32.totalorder %s14, 3
      %p82 = por %p80, %p81
      %p83 = scmp.ne.s32.totalorder %s75, %s78
      %p84 = scmp.eq.s32.totalorder %s14, 0
      %p85 = por %p83, %p84
      %p86 = scmp.ne.s32.totalorder %s75, %s78
      %p87 = scmp.eq.s32.totalorder %s19, 3
      %p88 = por %p86, %p87
      %p89 = scmp.ne.s32.totalorder %s78, %s79
      %p90 = scmp.eq.s32.totalorder %s19, 0
      %p91 = por %p89, %p90
      %p92 = scmp.ne.s32.totalorder %s78, %s79
      %p93 = scmp.eq.s32.totalorder %s20, 3
      %p94 = por %p92, %p93
      %p96 = scmp.ne.s32.totalorder %s79, %s95
      %p97 = scmp.eq.s32.totalorder %s20, 0
      %p98 = por %p96, %p97
      %s99 = ssub.s32 %s22, %s36
      %s100 = ssub.s32 %s21, %s40
      %s101 = sor.u32 %s99, %s100
      %p102 = scmp.eq.s32.totalorder %s101, 0
      %s104 = sadd.s32 %s103, 1
      %s105 = scalar_select %p102, %s103, %s104
      %p108 = pneg %p102
      %p109 = scmp.eq.s32.totalorder %s14, 3
      %p110 = por %p108, %p109
      %p111 = scmp.ne.s32.totalorder %s103, %s106
      %p112 = scmp.eq.s32.totalorder %s14, 0
      %p113 = por %p111, %p112
      %p114 = scmp.ne.s32.totalorder %s103, %s106
      %p115 = scmp.eq.s32.totalorder %s19, 3
      %p116 = por %p114, %p115
      %p117 = scmp.ne.s32.totalorder %s106, %s107
      %p118 = scmp.eq.s32.totalorder %s19, 0
      %p119 = por %p117, %p118
      %p120 = scmp.ne.s32.totalorder %s106, %s107
      %p121 = scmp.eq.s32.totalorder %s20, 3
      %p122 = por %p120, %p121
      %p124 = scmp.ne.s32.totalorder %s107, %s123
      %p125 = scmp.eq.s32.totalorder %s20, 0
      %p126 = por %p124, %p125
      %p127 = scmp.le.s32.totalorder 1, %s14
      %p128 = scmp.lt.s32.totalorder %s14, 5
      %p129 = pnand %p127, %p128
      %p130 = pneg %p129
      // Predicated region
      $region9: #{_pyramid_pooling_core.2} parent=5 // pred_check
        _
      $region10: #{_pyramid_pooling_core.2} parent=5 // pred_check_branch
        %132 = sbr.rel (%p129) target = $region12
      $region11: #{_pyramid_pooling_core.2} parent=5 // pred_region
        %s133 = ssub.s32 %s14, 1
      $region12: #{_pyramid_pooling_core.2} parent=5 // pred_fallthru
        _
      %p134 = scmp.lt.s32.totalorder %s14, 4
      // Predicated region
      $region13: #{_pyramid_pooling_core.2} parent=5 // pred_check
        %p135 = pneg %p134
      $region14: #{_pyramid_pooling_core.2} parent=5 // pred_check_branch
        %137 = sbr.rel (%p135) target = $region16
      $region15: #{_pyramid_pooling_core.2} parent=5 // pred_region
        // Predicated region
        $region17: #{_pyramid_pooling_core.2} parent=15 // pred_check
          %p138 = pneg %p55
        $region18: #{_pyramid_pooling_core.2} parent=15 // pred_check_branch
          %140 = sbr.rel (%p138) target = $region20
        $region19: #{_pyramid_pooling_core.2} parent=15 // pred_region
          %s141 = sand.u32 %s45, 1
          %s142 = scalar_lea.sflag [#allocation3], %s141
          %s143 = sand.u32 %s45, 1
          %s144 = smul.addr %s143, 512
          %s145 = scalar_lea.vmem [#allocation2], %s144
          %s146 = sadd.s32 %s21, %s23
          %s147 = smul.u32 64, %s146
          %s149 = ssub.s32 8192, 8192
          %150 = vsyncadd %s142, %s149
          %s151 = smul.addr %s147, 128
          %s152 = scalar_lea.hbm %s0, %s151
          %s153 = sshll.u32 %s145, 4
          %s154 = int_to_ptr.vmem [resolvable:$true] %s153
          %159 = dma.hbm_to_vmem [thread:$0]  %s152, 8192, %s154, %s142, 128, 128, 8
        $region20: #{_pyramid_pooling_core.2} parent=15 // pred_fallthru
          _
        // Predicated region
        $region21: #{_pyramid_pooling_core.2} parent=15 // pred_check
          %p160 = pneg %p85
        $region22: #{_pyramid_pooling_core.2} parent=15 // pred_check_branch
          %162 = sbr.rel (%p160) target = $region24
        $region23: #{_pyramid_pooling_core.2} parent=15 // pred_region
          %s163 = sand.u32 %s75, 1
          %s164 = scalar_lea.sflag [#allocation5], %s163
          %s165 = sand.u32 %s75, 1
          %s166 = smul.addr %s165, 512
          %s167 = scalar_lea.vmem [#allocation4], %s166
          %s168 = sadd.s32 %s21, %s23
          %s169 = smul.u32 64, %s168
          %s171 = ssub.s32 8192, 8192
          %172 = vsyncadd %s164, %s171
          %s173 = smul.addr %s22, 128
          %s174 = sadd.s32 %s169, %s173
          %s175 = smul.addr %s174, 128
          %s176 = scalar_lea.hbm %s1, %s175
          %s177 = sshll.u32 %s167, 4
          %s178 = int_to_ptr.vmem [resolvable:$true] %s177
          %183 = dma.hbm_to_vmem [thread:$0]  %s176, 8192, %s178, %s164, 128, 128, 8
        $region24: #{_pyramid_pooling_core.2} parent=15 // pred_fallthru
          _
      $region16: #{_pyramid_pooling_core.2} parent=5 // pred_fallthru
        _
      %p184 = scmp.le.s32.totalorder 1, %s14
      %p185 = scmp.lt.s32.totalorder %s14, 5
      %p186 = pnand %p184, %p185
      %p187 = pneg %p186
      // Predicated region
      $region25: #{_pyramid_pooling_core.2} parent=5 // pred_check
        _
      $region26: #{_pyramid_pooling_core.2} parent=5 // pred_check_branch
        %189 = sbr.rel (%p186) target = $region28
      $region27: #{_pyramid_pooling_core.2} parent=5 // pred_region
        %s190 = ssub.s32 %s14, 1
        %s191 = sand.u32 %s48, 1
        %s192 = scalar_lea.sflag [#allocation3], %s191
        %s193 = sand.u32 %s48, 1
        %s194 = smul.addr %s193, 512
        %s195 = scalar_lea.vmem [#allocation2], %s194
        // Predicated region
        $region29: #{_pyramid_pooling_core.2} parent=27 // pred_check
          %p196 = pneg %p61
        $region30: #{_pyramid_pooling_core.2} parent=27 // pred_check_branch
          %198 = sbr.rel (%p196) target = $region32
        $region31: #{_pyramid_pooling_core.2} parent=27 // pred_region
          %199 = dma.done %s192, 8192
        $region32: #{_pyramid_pooling_core.2} parent=27 // pred_fallthru
          _
        %s200 = sand.u32 %s78, 1
        %s201 = scalar_lea.sflag [#allocation5], %s200
        %s202 = sand.u32 %s78, 1
        %s203 = smul.addr %s202, 512
        %s204 = scalar_lea.vmem [#allocation4], %s203
        // Predicated region
        $region33: #{_pyramid_pooling_core.2} parent=27 // pred_check
          %p205 = pneg %p91
        $region34: #{_pyramid_pooling_core.2} parent=27 // pred_check_branch
          %207 = sbr.rel (%p205) target = $region36
        $region35: #{_pyramid_pooling_core.2} parent=27 // pred_region
          %208 = dma.done %s201, 8192
        $region36: #{_pyramid_pooling_core.2} parent=27 // pred_fallthru
          _
        %s209 = sand.u32 %s48, 1
        %s210 = scalar_lea.sflag [#allocation3], %s209
        %s211 = sand.u32 %s48, 1
        %s212 = smul.addr %s211, 512
        %s213 = scalar_lea.vmem [#allocation2], %s212
        %p214 = pneg %p61
        %p215 = pneg %p58
        %s216 = sand.u32 %s78, 1
        %s217 = scalar_lea.sflag [#allocation5], %s216
        %s218 = sand.u32 %s78, 1
        %s219 = smul.addr %s218, 512
        %s220 = scalar_lea.vmem [#allocation4], %s219
        %p221 = pneg %p91
        %p222 = pneg %p88
        %p223 = pneg %p119
        %p224 = pneg %p116
        %p225 = scmp.lt.s32.totalorder %s25, 1
        %s226 = scalar_select %p225, %s25, 1
        %p227 = scmp.lt.s32.totalorder %s24, 1
        %s228 = scalar_select %p227, %s24, 1
        %s229 = smul.addr %s228, 16
        %s230 = smul.addr %s226, 32
        %s231 = sadd.s32 %s229, %s230
        %s232 = smul.addr %s231, 8
        %s233 = scalar_lea.vmem %s2, %s232
        %s234 = sadd.s32 %s24, %s26
        %s235 = smul.u32 64, %s234
        %s236 = sadd.s32 %s24, %s26
        %s237 = smul.u32 64, %s236
        %p238 = scmp.lt.s32.totalorder %s25, 1
        %s239 = scalar_select %p238, %s25, 1
        %p240 = scmp.lt.s32.totalorder %s24, 1
        %s241 = scalar_select %p240, %s24, 1
        %s242 = smul.addr %s241, 16
        %s243 = smul.addr %s239, 32
        %s244 = sadd.s32 %s242, %s243
        %s245 = smul.addr %s244, 8
        %s246 = scalar_lea.vmem %s2, %s245
        %p247 = scmp.eq.s32.totalorder %s26, 0
        // Predicated region
        $region37: #{_pyramid_pooling_core.2} parent=27 // pred_check
          %p248 = pneg %p247
        $region38: #{_pyramid_pooling_core.2} parent=27 // pred_check_branch
          %250 = sbr.rel (%p248) target = $region40
        $region39: #{_pyramid_pooling_core.2} parent=27 // pred_region
          %251 = vst [vmem:[%s246] sm:$0xff] 0.0
          %252 = vst [vmem:[%s246 + $0x8] sm:$0xff] 0.0
          %253 = vst [vmem:[%s246 + $0x10] sm:$0xff] 0.0
          %254 = vst [vmem:[%s246 + $0x18] sm:$0xff] 0.0
          %255 = vst [vmem:[%s246 + $0x20] sm:$0xff] 0.0
          %256 = vst [vmem:[%s246 + $0x28] sm:$0xff] 0.0
          %257 = vst [vmem:[%s246 + $0x30] sm:$0xff] 0.0
          %258 = vst [vmem:[%s246 + $0x38] sm:$0xff] 0.0
          %259 = vst [vmem:[%s246 + $0x40] sm:$0xff] 0.0
          %260 = vst [vmem:[%s246 + $0x48] sm:$0xff] 0.0
          %261 = vst [vmem:[%s246 + $0x50] sm:$0xff] 0.0
          %262 = vst [vmem:[%s246 + $0x58] sm:$0xff] 0.0
          %263 = vst [vmem:[%s246 + $0x60] sm:$0xff] 0.0
          %264 = vst [vmem:[%s246 + $0x68] sm:$0xff] 0.0
          %265 = vst [vmem:[%s246 + $0x70] sm:$0xff] 0.0
          %266 = vst [vmem:[%s246 + $0x78] sm:$0xff] 0.0
        $region40: #{_pyramid_pooling_core.2} parent=27 // pred_fallthru
          _
        %v267 = vld [vmem:[%s246] sm:$0xff]
        %v268 = vld [vmem:[%s246 + $0x8] sm:$0xff]
        %v269 = vld [vmem:[%s246 + $0x10] sm:$0xff]
        %v270 = vld [vmem:[%s246 + $0x18] sm:$0xff]
        %v271 = vld [vmem:[%s246 + $0x20] sm:$0xff]
        %v272 = vld [vmem:[%s246 + $0x28] sm:$0xff]
        %v273 = vld [vmem:[%s246 + $0x30] sm:$0xff]
        %v274 = vld [vmem:[%s246 + $0x38] sm:$0xff]
        %v275 = vld [vmem:[%s246 + $0x40] sm:$0xff]
        %v276 = vld [vmem:[%s246 + $0x48] sm:$0xff]
        %v277 = vld [vmem:[%s246 + $0x50] sm:$0xff]
        %v278 = vld [vmem:[%s246 + $0x58] sm:$0xff]
        %v279 = vld [vmem:[%s246 + $0x60] sm:$0xff]
        %v280 = vld [vmem:[%s246 + $0x68] sm:$0xff]
        %v281 = vld [vmem:[%s246 + $0x70] sm:$0xff]
        %v282 = vld [vmem:[%s246 + $0x78] sm:$0xff]
        %v283 = vld [vmem:[%s195] sm:$0xff]
        %v284 = vld [vmem:[%s195 + $0x8] sm:$0xff]
        %v285 = vld [vmem:[%s195 + $0x10] sm:$0xff]
        %v286 = vld [vmem:[%s195 + $0x18] sm:$0xff]
        %v287 = vld [vmem:[%s195 + $0x20] sm:$0xff]
        %v288 = vld [vmem:[%s195 + $0x28] sm:$0xff]
        %v289 = vld [vmem:[%s195 + $0x30] sm:$0xff]
        %v290 = vld [vmem:[%s195 + $0x38] sm:$0xff]
        %v291 = vld [vmem:[%s195 + $0x40] sm:$0xff]
        %v292 = vld [vmem:[%s195 + $0x48] sm:$0xff]
        %v293 = vld [vmem:[%s195 + $0x50] sm:$0xff]
        %v294 = vld [vmem:[%s195 + $0x58] sm:$0xff]
        %v295 = vld [vmem:[%s195 + $0x60] sm:$0xff]
        %v296 = vld [vmem:[%s195 + $0x68] sm:$0xff]
        %v297 = vld [vmem:[%s195 + $0x70] sm:$0xff]
        %v298 = vld [vmem:[%s195 + $0x78] sm:$0xff]
        %v299 = vld [vmem:[%s195 + $0x80] sm:$0xff]
        %v300 = vld [vmem:[%s195 + $0x88] sm:$0xff]
        %v301 = vld [vmem:[%s195 + $0x90] sm:$0xff]
        %v302 = vld [vmem:[%s195 + $0x98] sm:$0xff]
        %v303 = vld [vmem:[%s195 + $0xa0] sm:$0xff]
        %v304 = vld [vmem:[%s195 + $0xa8] sm:$0xff]
        %v305 = vld [vmem:[%s195 + $0xb0] sm:$0xff]
        %v306 = vld [vmem:[%s195 + $0xb8] sm:$0xff]
        %v307 = vld [vmem:[%s195 + $0xc0] sm:$0xff]
        %v308 = vld [vmem:[%s195 + $0xc8] sm:$0xff]
        %v309 = vld [vmem:[%s195 + $0xd0] sm:$0xff]
        %v310 = vld [vmem:[%s195 + $0xd8] sm:$0xff]
        %v311 = vld [vmem:[%s195 + $0xe0] sm:$0xff]
        %v312 = vld [vmem:[%s195 + $0xe8] sm:$0xff]
        %v313 = vld [vmem:[%s195 + $0xf0] sm:$0xff]
        %v314 = vld [vmem:[%s195 + $0xf8] sm:$0xff]
        %v315 = vld [vmem:[%s195 + $0x100] sm:$0xff]
        %v316 = vld [vmem:[%s195 + $0x108] sm:$0xff]
        %v317 = vld [vmem:[%s195 + $0x110] sm:$0xff]
        %v318 = vld [vmem:[%s195 + $0x118] sm:$0xff]
        %v319 = vld [vmem:[%s195 + $0x120] sm:$0xff]
        %v320 = vld [vmem:[%s195 + $0x128] sm:$0xff]
        %v321 = vld [vmem:[%s195 + $0x130] sm:$0xff]
        %v322 = vld [vmem:[%s195 + $0x138] sm:$0xff]
        %v323 = vld [vmem:[%s195 + $0x140] sm:$0xff]
        %v324 = vld [vmem:[%s195 + $0x148] sm:$0xff]
        %v325 = vld [vmem:[%s195 + $0x150] sm:$0xff]
        %v326 = vld [vmem:[%s195 + $0x158] sm:$0xff]
        %v327 = vld [vmem:[%s195 + $0x160] sm:$0xff]
        %v328 = vld [vmem:[%s195 + $0x168] sm:$0xff]
        %v329 = vld [vmem:[%s195 + $0x170] sm:$0xff]
        %v330 = vld [vmem:[%s195 + $0x178] sm:$0xff]
        %v331 = vld [vmem:[%s195 + $0x180] sm:$0xff]
        %v332 = vld [vmem:[%s195 + $0x188] sm:$0xff]
        %v333 = vld [vmem:[%s195 + $0x190] sm:$0xff]
        %v334 = vld [vmem:[%s195 + $0x198] sm:$0xff]
        %v335 = vld [vmem:[%s195 + $0x1a0] sm:$0xff]
        %v336 = vld [vmem:[%s195 + $0x1a8] sm:$0xff]
        %v337 = vld [vmem:[%s195 + $0x1b0] sm:$0xff]
        %v338 = vld [vmem:[%s195 + $0x1b8] sm:$0xff]
        %v339 = vld [vmem:[%s195 + $0x1c0] sm:$0xff]
        %v340 = vld [vmem:[%s195 + $0x1c8] sm:$0xff]
        %v341 = vld [vmem:[%s195 + $0x1d0] sm:$0xff]
        %v342 = vld [vmem:[%s195 + $0x1d8] sm:$0xff]
        %v343 = vld [vmem:[%s195 + $0x1e0] sm:$0xff]
        %v344 = vld [vmem:[%s195 + $0x1e8] sm:$0xff]
        %v345 = vld [vmem:[%s195 + $0x1f0] sm:$0xff]
        %v346 = vld [vmem:[%s195 + $0x1f8] sm:$0xff]
        %v347 = vld [vmem:[%s204] sm:$0xff]
        %v348 = vld [vmem:[%s204 + $0x8] sm:$0xff]
        %v349 = vld [vmem:[%s204 + $0x10] sm:$0xff]
        %v350 = vld [vmem:[%s204 + $0x18] sm:$0xff]
        %v351 = vld [vmem:[%s204 + $0x20] sm:$0xff]
        %v352 = vld [vmem:[%s204 + $0x28] sm:$0xff]
        %v353 = vld [vmem:[%s204 + $0x30] sm:$0xff]
        %v354 = vld [vmem:[%s204 + $0x38] sm:$0xff]
        %v355 = vld [vmem:[%s204 + $0x40] sm:$0xff]
        %v356 = vld [vmem:[%s204 + $0x48] sm:$0xff]
        %v357 = vld [vmem:[%s204 + $0x50] sm:$0xff]
        %v358 = vld [vmem:[%s204 + $0x58] sm:$0xff]
        %v359 = vld [vmem:[%s204 + $0x60] sm:$0xff]
        %v360 = vld [vmem:[%s204 + $0x68] sm:$0xff]
        %v361 = vld [vmem:[%s204 + $0x70] sm:$0xff]
        %v362 = vld [vmem:[%s204 + $0x78] sm:$0xff]
        %v363 = vld [vmem:[%s204 + $0x80] sm:$0xff]
        %v364 = vld [vmem:[%s204 + $0x88] sm:$0xff]
        %v365 = vld [vmem:[%s204 + $0x90] sm:$0xff]
        %v366 = vld [vmem:[%s204 + $0x98] sm:$0xff]
        %v367 = vld [vmem:[%s204 + $0xa0] sm:$0xff]
        %v368 = vld [vmem:[%s204 + $0xa8] sm:$0xff]
        %v369 = vld [vmem:[%s204 + $0xb0] sm:$0xff]
        %v370 = vld [vmem:[%s204 + $0xb8] sm:$0xff]
        %v371 = vld [vmem:[%s204 + $0xc0] sm:$0xff]
        %v372 = vld [vmem:[%s204 + $0xc8] sm:$0xff]
        %v373 = vld [vmem:[%s204 + $0xd0] sm:$0xff]
        %v374 = vld [vmem:[%s204 + $0xd8] sm:$0xff]
        %v375 = vld [vmem:[%s204 + $0xe0] sm:$0xff]
        %v376 = vld [vmem:[%s204 + $0xe8] sm:$0xff]
        %v377 = vld [vmem:[%s204 + $0xf0] sm:$0xff]
        %v378 = vld [vmem:[%s204 + $0xf8] sm:$0xff]
        %v379 = vld [vmem:[%s204 + $0x100] sm:$0xff]
        %v380 = vld [vmem:[%s204 + $0x108] sm:$0xff]
        %v381 = vld [vmem:[%s204 + $0x110] sm:$0xff]
        %v382 = vld [vmem:[%s204 + $0x118] sm:$0xff]
        %v383 = vld [vmem:[%s204 + $0x120] sm:$0xff]
        %v384 = vld [vmem:[%s204 + $0x128] sm:$0xff]
        %v385 = vld [vmem:[%s204 + $0x130] sm:$0xff]
        %v386 = vld [vmem:[%s204 + $0x138] sm:$0xff]
        %v387 = vld [vmem:[%s204 + $0x140] sm:$0xff]
        %v388 = vld [vmem:[%s204 + $0x148] sm:$0xff]
        %v389 = vld [vmem:[%s204 + $0x150] sm:$0xff]
        %v390 = vld [vmem:[%s204 + $0x158] sm:$0xff]
        %v391 = vld [vmem:[%s204 + $0x160] sm:$0xff]
        %v392 = vld [vmem:[%s204 + $0x168] sm:$0xff]
        %v393 = vld [vmem:[%s204 + $0x170] sm:$0xff]
        %v394 = vld [vmem:[%s204 + $0x178] sm:$0xff]
        %v395 = vld [vmem:[%s204 + $0x180] sm:$0xff]
        %v396 = vld [vmem:[%s204 + $0x188] sm:$0xff]
        %v397 = vld [vmem:[%s204 + $0x190] sm:$0xff]
        %v398 = vld [vmem:[%s204 + $0x198] sm:$0xff]
        %v399 = vld [vmem:[%s204 + $0x1a0] sm:$0xff]
        %v400 = vld [vmem:[%s204 + $0x1a8] sm:$0xff]
        %v401 = vld [vmem:[%s204 + $0x1b0] sm:$0xff]
        %v402 = vld [vmem:[%s204 + $0x1b8] sm:$0xff]
        %v403 = vld [vmem:[%s204 + $0x1c0] sm:$0xff]
        %v404 = vld [vmem:[%s204 + $0x1c8] sm:$0xff]
        %v405 = vld [vmem:[%s204 + $0x1d0] sm:$0xff]
        %v406 = vld [vmem:[%s204 + $0x1d8] sm:$0xff]
        %v407 = vld [vmem:[%s204 + $0x1e0] sm:$0xff]
        %v408 = vld [vmem:[%s204 + $0x1e8] sm:$0xff]
        %v409 = vld [vmem:[%s204 + $0x1f0] sm:$0xff]
        %v410 = vld [vmem:[%s204 + $0x1f8] sm:$0xff]
        %411 = vxpose.xlu0.b32.start [1/16] %v283, 128
        %412 = vxpose.xlu0.b32.cont [2/16] %v284, 128
        %413 = vxpose.xlu0.b32.cont [3/16] %v285, 128
        %414 = vxpose.xlu0.b32.cont [4/16] %v286, 128
        %415 = vxpose.xlu0.b32.cont [5/16] %v287, 128
        %416 = vxpose.xlu0.b32.cont [6/16] %v288, 128
        %417 = vxpose.xlu0.b32.cont [7/16] %v289, 128
        %418 = vxpose.xlu0.b32.cont [8/16] %v290, 128
        %419 = vxpose.xlu0.b32.cont [9/16] %v291, 128
        %420 = vxpose.xlu0.b32.cont [10/16] %v292, 128
        %421 = vxpose.xlu0.b32.cont [11/16] %v293, 128
        %422 = vxpose.xlu0.b32.cont [12/16] %v294, 128
        %423 = vxpose.xlu0.b32.cont [13/16] %v295, 128
        %424 = vxpose.xlu0.b32.cont [14/16] %v296, 128
        %425 = vxpose.xlu0.b32.cont [15/16] %v297, 128
        %426 = vxpose.xlu0.b32.end [16/16] %v298, 128
        %v427 = vpop.trf.xlu0
        %v428 = vpop.trf.xlu0
        %v429 = vpop.trf.xlu0
        %v430 = vpop.trf.xlu0
        %v431 = vpop.trf.xlu0
        %v432 = vpop.trf.xlu0
        %v433 = vpop.trf.xlu0
        %v434 = vpop.trf.xlu0
        %v435 = vpop.trf.xlu0
        %v436 = vpop.trf.xlu0
        %v437 = vpop.trf.xlu0
        %v438 = vpop.trf.xlu0
        %v439 = vpop.trf.xlu0
        %v440 = vpop.trf.xlu0
        %v441 = vpop.trf.xlu0
        %v442 = vpop.trf.xlu0
        %443 = vxpose.xlu0.b32.start [1/16] %v299, 128
        %444 = vxpose.xlu0.b32.cont [2/16] %v300, 128
        %445 = vxpose.xlu0.b32.cont [3/16] %v301, 128
        %446 = vxpose.xlu0.b32.cont [4/16] %v302, 128
        %447 = vxpose.xlu0.b32.cont [5/16] %v303, 128
        %448 = vxpose.xlu0.b32.cont [6/16] %v304, 128
        %449 = vxpose.xlu0.b32.cont [7/16] %v305, 128
        %450 = vxpose.xlu0.b32.cont [8/16] %v306, 128
        %451 = vxpose.xlu0.b32.cont [9/16] %v307, 128
        %452 = vxpose.xlu0.b32.cont [10/16] %v308, 128
        %453 = vxpose.xlu0.b32.cont [11/16] %v309, 128
        %454 = vxpose.xlu0.b32.cont [12/16] %v310, 128
        %455 = vxpose.xlu0.b32.cont [13/16] %v311, 128
        %456 = vxpose.xlu0.b32.cont [14/16] %v312, 128
        %457 = vxpose.xlu0.b32.cont [15/16] %v313, 128
        %458 = vxpose.xlu0.b32.end [16/16] %v314, 128
        %v459 = vpop.trf.xlu0
        %v460 = vpop.trf.xlu0
        %v461 = vpop.trf.xlu0
        %v462 = vpop.trf.xlu0
        %v463 = vpop.trf.xlu0
        %v464 = vpop.trf.xlu0
        %v465 = vpop.trf.xlu0
        %v466 = vpop.trf.xlu0
        %v467 = vpop.trf.xlu0
        %v468 = vpop.trf.xlu0
        %v469 = vpop.trf.xlu0
        %v470 = vpop.trf.xlu0
        %v471 = vpop.trf.xlu0
        %v472 = vpop.trf.xlu0
        %v473 = vpop.trf.xlu0
        %v474 = vpop.trf.xlu0
        %475 = vxpose.xlu0.b32.start [1/16] %v315, 128
        %476 = vxpose.xlu0.b32.cont [2/16] %v316, 128
        %477 = vxpose.xlu0.b32.cont [3/16] %v317, 128
        %478 = vxpose.xlu0.b32.cont [4/16] %v318, 128
        %479 = vxpose.xlu0.b32.cont [5/16] %v319, 128
        %480 = vxpose.xlu0.b32.cont [6/16] %v320, 128
        %481 = vxpose.xlu0.b32.cont [7/16] %v321, 128
        %482 = vxpose.xlu0.b32.cont [8/16] %v322, 128
        %483 = vxpose.xlu0.b32.cont [9/16] %v323, 128
        %484 = vxpose.xlu0.b32.cont [10/16] %v324, 128
        %485 = vxpose.xlu0.b32.cont [11/16] %v325, 128
        %486 = vxpose.xlu0.b32.cont [12/16] %v326, 128
        %487 = vxpose.xlu0.b32.cont [13/16] %v327, 128
        %488 = vxpose.xlu0.b32.cont [14/16] %v328, 128
        %489 = vxpose.xlu0.b32.cont [15/16] %v329, 128
        %490 = vxpose.xlu0.b32.end [16/16] %v330, 128
        %v491 = vpop.trf.xlu0
        %v492 = vpop.trf.xlu0
        %v493 = vpop.trf.xlu0
        %v494 = vpop.trf.xlu0
        %v495 = vpop.trf.xlu0
        %v496 = vpop.trf.xlu0
        %v497 = vpop.trf.xlu0
        %v498 = vpop.trf.xlu0
        %v499 = vpop.trf.xlu0
        %v500 = vpop.trf.xlu0
        %v501 = vpop.trf.xlu0
        %v502 = vpop.trf.xlu0
        %v503 = vpop.trf.xlu0
        %v504 = vpop.trf.xlu0
        %v505 = vpop.trf.xlu0
        %v506 = vpop.trf.xlu0
        %507 = vxpose.xlu0.b32.start [1/16] %v331, 128
        %508 = vxpose.xlu0.b32.cont [2/16] %v332, 128
        %509 = vxpose.xlu0.b32.cont [3/16] %v333, 128
        %510 = vxpose.xlu0.b32.cont [4/16] %v334, 128
        %511 = vxpose.xlu0.b32.cont [5/16] %v335, 128
        %512 = vxpose.xlu0.b32.cont [6/16] %v336, 128
        %513 = vxpose.xlu0.b32.cont [7/16] %v337, 128
        %514 = vxpose.xlu0.b32.cont [8/16] %v338, 128
        %515 = vxpose.xlu0.b32.cont [9/16] %v339, 128
        %516 = vxpose.xlu0.b32.cont [10/16] %v340, 128
        %517 = vxpose.xlu0.b32.cont [11/16] %v341, 128
        %518 = vxpose.xlu0.b32.cont [12/16] %v342, 128
        %519 = vxpose.xlu0.b32.cont [13/16] %v343, 128
        %520 = vxpose.xlu0.b32.cont [14/16] %v344, 128
        %521 = vxpose.xlu0.b32.cont [15/16] %v345, 128
        %522 = vxpose.xlu0.b32.end [16/16] %v346, 128
        %v523 = vpop.trf.xlu0
        %v524 = vpop.trf.xlu0
        %v525 = vpop.trf.xlu0
        %v526 = vpop.trf.xlu0
        %v527 = vpop.trf.xlu0
        %v528 = vpop.trf.xlu0
        %v529 = vpop.trf.xlu0
        %v530 = vpop.trf.xlu0
        %v531 = vpop.trf.xlu0
        %v532 = vpop.trf.xlu0
        %v533 = vpop.trf.xlu0
        %v534 = vpop.trf.xlu0
        %v535 = vpop.trf.xlu0
        %v536 = vpop.trf.xlu0
        %v537 = vpop.trf.xlu0
        %v538 = vpop.trf.xlu0
        %539 = vmatprep.subr.mxu0 0.0
        %540 = vmatpush1.msra.mxu0 %v362
        %541 = vmatprep.subr.mxu0 0.0
        %542 = vmatpush1.msra.mxu0 %v361
        %543 = vmatprep.subr.mxu0 0.0
        %544 = vmatpush1.msra.mxu0 %v360
        %545 = vmatprep.subr.mxu0 0.0
        %546 = vmatpush1.msra.mxu0 %v359
        %547 = vmatprep.subr.mxu0 0.0
        %548 = vmatpush1.msra.mxu0 %v358
        %549 = vmatprep.subr.mxu0 0.0
        %550 = vmatpush1.msra.mxu0 %v357
        %551 = vmatprep.subr.mxu0 0.0
        %552 = vmatpush1.msra.mxu0 %v356
        %553 = vmatprep.subr.mxu0 0.0
        %554 = vmatpush1.msra.mxu0 %v355
        %555 = vmatprep.subr.mxu0 0.0
        %556 = vmatpush1.msra.mxu0 %v354
        %557 = vmatprep.subr.mxu0 0.0
        %558 = vmatpush1.msra.mxu0 %v353
        %559 = vmatprep.subr.mxu0 0.0
        %560 = vmatpush1.msra.mxu0 %v352
        %561 = vmatprep.subr.mxu0 0.0
        %562 = vmatpush1.msra.mxu0 %v351
        %563 = vmatprep.subr.mxu0 0.0
        %564 = vmatpush1.msra.mxu0 %v350
        %565 = vmatprep.subr.mxu0 0.0
        %566 = vmatpush1.msra.mxu0 %v349
        %567 = vmatprep.subr.mxu0 0.0
        %568 = vmatpush1.msra.mxu0 %v348
        %569 = vmatprep.subr.mxu0 0.0
        %570 = vmatpush1.msra.mxu0 %v347
        %571 = vmatprep.subr.mxu0 0.0
        %572 = vmatpush2.msra.mxu0 %v378
        %573 = vmatprep.subr.mxu0 0.0
        %574 = vmatpush2.msra.mxu0 %v377
        %575 = vmatprep.subr.mxu0 0.0
        %576 = vmatpush2.msra.mxu0 %v376
        %577 = vmatprep.subr.mxu0 0.0
        %578 = vmatpush2.msra.mxu0 %v375
        %579 = vmatprep.subr.mxu0 0.0
        %580 = vmatpush2.msra.mxu0 %v374
        %581 = vmatprep.subr.mxu0 0.0
        %582 = vmatpush2.msra.mxu0 %v373
        %583 = vmatprep.subr.mxu0 0.0
        %584 = vmatpush2.msra.mxu0 %v372
        %585 = vmatprep.subr.mxu0 0.0
        %586 = vmatpush2.msra.mxu0 %v371
        %587 = vmatprep.subr.mxu0 0.0
        %588 = vmatpush2.msra.mxu0 %v370
        %589 = vmatprep.subr.mxu0 0.0
        %590 = vmatpush2.msra.mxu0 %v369
        %591 = vmatprep.subr.mxu0 0.0
        %592 = vmatpush2.msra.mxu0 %v368
        %593 = vmatprep.subr.mxu0 0.0
        %594 = vmatpush2.msra.mxu0 %v367
        %595 = vmatprep.subr.mxu0 0.0
        %596 = vmatpush2.msra.mxu0 %v366
        %597 = vmatprep.subr.mxu0 0.0
        %598 = vmatpush2.msra.mxu0 %v365
        %599 = vmatprep.subr.mxu0 0.0
        %600 = vmatpush2.msra.mxu0 %v364
        %601 = vmatprep.subr.mxu0 0.0
        %602 = vmatpush2.msra.mxu0 %v363
        %603 = vmatprep.mubr.f32.mxu0 %v459
        %604 = vmatmul.mubr.f32.gmra.mxu0 %v427
        %v605 = vpop.f32.mrf.mxu0
        %v606 = vadd.f32 0.0, %v605
        %v607 = vpop.f32.mrf.mxu0
        %608 = vmatprep.mubr.f32.mxu0 %v460
        %609 = vmatmul.mubr.f32.gmra.mxu0 %v428
        %v610 = vpop.f32.mrf.mxu0
        %v611 = vadd.f32 0.0, %v610
        %v612 = vpop.f32.mrf.mxu0
        %613 = vmatprep.mubr.f32.mxu0 %v461
        %614 = vmatmul.mubr.f32.gmra.mxu0 %v429
        %v615 = vpop.f32.mrf.mxu0
        %v616 = vadd.f32 0.0, %v615
        %v617 = vpop.f32.mrf.mxu0
        %618 = vmatprep.mubr.f32.mxu0 %v462
        %619 = vmatmul.mubr.f32.gmra.mxu0 %v430
        %v620 = vpop.f32.mrf.mxu0
        %v621 = vadd.f32 0.0, %v620
        %v622 = vpop.f32.mrf.mxu0
        %623 = vmatprep.mubr.f32.mxu0 %v463
        %624 = vmatmul.mubr.f32.gmra.mxu0 %v431
        %v625 = vpop.f32.mrf.mxu0
        %v626 = vadd.f32 0.0, %v625
        %v627 = vpop.f32.mrf.mxu0
        %628 = vmatprep.mubr.f32.mxu0 %v464
        %629 = vmatmul.mubr.f32.gmra.mxu0 %v432
        %v630 = vpop.f32.mrf.mxu0
        %v631 = vadd.f32 0.0, %v630
        %v632 = vpop.f32.mrf.mxu0
        %633 = vmatprep.mubr.f32.mxu0 %v465
        %634 = vmatmul.mubr.f32.gmra.mxu0 %v433
        %v635 = vpop.f32.mrf.mxu0
        %v636 = vadd.f32 0.0, %v635
        %v637 = vpop.f32.mrf.mxu0
        %638 = vmatprep.mubr.f32.mxu0 %v466
        %639 = vmatmul.mubr.f32.gmra.mxu0 %v434
        %v640 = vpop.f32.mrf.mxu0
        %v641 = vadd.f32 0.0, %v640
        %v642 = vpop.f32.mrf.mxu0
        %643 = vmatprep.mubr.f32.mxu0 %v467
        %644 = vmatmul.mubr.f32.gmra.mxu0 %v435
        %v645 = vpop.f32.mrf.mxu0
        %v646 = vadd.f32 0.0, %v645
        %v647 = vpop.f32.mrf.mxu0
        %648 = vmatprep.mubr.f32.mxu0 %v468
        %649 = vmatmul.mubr.f32.gmra.mxu0 %v436
        %v650 = vpop.f32.mrf.mxu0
        %v651 = vadd.f32 0.0, %v650
        %v652 = vpop.f32.mrf.mxu0
        %653 = vmatprep.mubr.f32.mxu0 %v469
        %654 = vmatmul.mubr.f32.gmra.mxu0 %v437
        %v655 = vpop.f32.mrf.mxu0
        %v656 = vadd.f32 0.0, %v655
        %v657 = vpop.f32.mrf.mxu0
        %658 = vmatprep.mubr.f32.mxu0 %v470
        %659 = vmatmul.mubr.f32.gmra.mxu0 %v438
        %v660 = vpop.f32.mrf.mxu0
        %v661 = vadd.f32 0.0, %v660
        %v662 = vpop.f32.mrf.mxu0
        %663 = vmatprep.mubr.f32.mxu0 %v471
        %664 = vmatmul.mubr.f32.gmra.mxu0 %v439
        %v665 = vpop.f32.mrf.mxu0
        %v666 = vadd.f32 0.0, %v665
        %v667 = vpop.f32.mrf.mxu0
        %668 = vmatprep.mubr.f32.mxu0 %v472
        %669 = vmatmul.mubr.f32.gmra.mxu0 %v440
        %v670 = vpop.f32.mrf.mxu0
        %v671 = vadd.f32 0.0, %v670
        %v672 = vpop.f32.mrf.mxu0
        %673 = vmatprep.mubr.f32.mxu0 %v473
        %674 = vmatmul.mubr.f32.gmra.mxu0 %v441
        %v675 = vpop.f32.mrf.mxu0
        %v676 = vadd.f32 0.0, %v675
        %v677 = vpop.f32.mrf.mxu0
        %678 = vmatprep.mubr.f32.mxu0 %v474
        %679 = vmatmul.mubr.f32.gmra.mxu0 %v442
        %v680 = vpop.f32.mrf.mxu0
        %v681 = vadd.f32 0.0, %v680
        %v682 = vpop.f32.mrf.mxu0
        %683 = vdwg.mxu0
        %684 = vmatprep.subr.mxu0 0.0
        %685 = vmatpush1.msra.mxu0 %v394
        %686 = vmatprep.subr.mxu0 0.0
        %687 = vmatpush1.msra.mxu0 %v393
        %688 = vmatprep.subr.mxu0 0.0
        %689 = vmatpush1.msra.mxu0 %v392
        %690 = vmatprep.subr.mxu0 0.0
        %691 = vmatpush1.msra.mxu0 %v391
        %692 = vmatprep.subr.mxu0 0.0
        %693 = vmatpush1.msra.mxu0 %v390
        %694 = vmatprep.subr.mxu0 0.0
        %695 = vmatpush1.msra.mxu0 %v389
        %696 = vmatprep.subr.mxu0 0.0
        %697 = vmatpush1.msra.mxu0 %v388
        %698 = vmatprep.subr.mxu0 0.0
        %699 = vmatpush1.msra.mxu0 %v387
        %700 = vmatprep.subr.mxu0 0.0
        %701 = vmatpush1.msra.mxu0 %v386
        %702 = vmatprep.subr.mxu0 0.0
        %703 = vmatpush1.msra.mxu0 %v385
        %704 = vmatprep.subr.mxu0 0.0
        %705 = vmatpush1.msra.mxu0 %v384
        %706 = vmatprep.subr.mxu0 0.0
        %707 = vmatpush1.msra.mxu0 %v383
        %708 = vmatprep.subr.mxu0 0.0
        %709 = vmatpush1.msra.mxu0 %v382
        %710 = vmatprep.subr.mxu0 0.0
        %711 = vmatpush1.msra.mxu0 %v381
        %712 = vmatprep.subr.mxu0 0.0
        %713 = vmatpush1.msra.mxu0 %v380
        %714 = vmatprep.subr.mxu0 0.0
        %715 = vmatpush1.msra.mxu0 %v379
        %716 = vmatprep.subr.mxu0 0.0
        %717 = vmatpush2.msra.mxu0 %v410
        %718 = vmatprep.subr.mxu0 0.0
        %719 = vmatpush2.msra.mxu0 %v409
        %720 = vmatprep.subr.mxu0 0.0
        %721 = vmatpush2.msra.mxu0 %v408
        %722 = vmatprep.subr.mxu0 0.0
        %723 = vmatpush2.msra.mxu0 %v407
        %724 = vmatprep.subr.mxu0 0.0
        %725 = vmatpush2.msra.mxu0 %v406
        %726 = vmatprep.subr.mxu0 0.0
        %727 = vmatpush2.msra.mxu0 %v405
        %728 = vmatprep.subr.mxu0 0.0
        %729 = vmatpush2.msra.mxu0 %v404
        %730 = vmatprep.subr.mxu0 0.0
        %731 = vmatpush2.msra.mxu0 %v403
        %732 = vmatprep.subr.mxu0 0.0
        %733 = vmatpush2.msra.mxu0 %v402
        %734 = vmatprep.subr.mxu0 0.0
        %735 = vmatpush2.msra.mxu0 %v401
        %736 = vmatprep.subr.mxu0 0.0
        %737 = vmatpush2.msra.mxu0 %v400
        %738 = vmatprep.subr.mxu0 0.0
        %739 = vmatpush2.msra.mxu0 %v399
        %740 = vmatprep.subr.mxu0 0.0
        %741 = vmatpush2.msra.mxu0 %v398
        %742 = vmatprep.subr.mxu0 0.0
        %743 = vmatpush2.msra.mxu0 %v397
        %744 = vmatprep.subr.mxu0 0.0
        %745 = vmatpush2.msra.mxu0 %v396
        %746 = vmatprep.subr.mxu0 0.0
        %747 = vmatpush2.msra.mxu0 %v395
        %748 = vmatprep.mubr.f32.mxu0 %v523
        %749 = vmatmul.mubr.f32.gmra.mxu0 %v491
        %v750 = vpop.f32.mrf.mxu0
        %v751 = vadd.f32 %v606, %v750
        %v752 = vpop.f32.mrf.mxu0
        %753 = vmatprep.mubr.f32.mxu0 %v524
        %754 = vmatmul.mubr.f32.gmra.mxu0 %v492
        %v755 = vpop.f32.mrf.mxu0
        %v756 = vadd.f32 %v611, %v755
        %v757 = vpop.f32.mrf.mxu0
        %758 = vmatprep.mubr.f32.mxu0 %v525
        %759 = vmatmul.mubr.f32.gmra.mxu0 %v493
        %v760 = vpop.f32.mrf.mxu0
        %v761 = vadd.f32 %v616, %v760
        %v762 = vpop.f32.mrf.mxu0
        %763 = vmatprep.mubr.f32.mxu0 %v526
        %764 = vmatmul.mubr.f32.gmra.mxu0 %v494
        %v765 = vpop.f32.mrf.mxu0
        %v766 = vadd.f32 %v621, %v765
        %v767 = vpop.f32.mrf.mxu0
        %768 = vmatprep.mubr.f32.mxu0 %v527
        %769 = vmatmul.mubr.f32.gmra.mxu0 %v495
        %v770 = vpop.f32.mrf.mxu0
        %v771 = vadd.f32 %v626, %v770
        %v772 = vpop.f32.mrf.mxu0
        %773 = vmatprep.mubr.f32.mxu0 %v528
        %774 = vmatmul.mubr.f32.gmra.mxu0 %v496
        %v775 = vpop.f32.mrf.mxu0
        %v776 = vadd.f32 %v631, %v775
        %v777 = vpop.f32.mrf.mxu0
        %778 = vmatprep.mubr.f32.mxu0 %v529
        %779 = vmatmul.mubr.f32.gmra.mxu0 %v497
        %v780 = vpop.f32.mrf.mxu0
        %v781 = vadd.f32 %v636, %v780
        %v782 = vpop.f32.mrf.mxu0
        %783 = vmatprep.mubr.f32.mxu0 %v530
        %784 = vmatmul.mubr.f32.gmra.mxu0 %v498
        %v785 = vpop.f32.mrf.mxu0
        %v786 = vadd.f32 %v641, %v785
        %v787 = vpop.f32.mrf.mxu0
        %788 = vmatprep.mubr.f32.mxu0 %v531
        %789 = vmatmul.mubr.f32.gmra.mxu0 %v499
        %v790 = vpop.f32.mrf.mxu0
        %v791 = vadd.f32 %v646, %v790
        %v792 = vpop.f32.mrf.mxu0
        %793 = vmatprep.mubr.f32.mxu0 %v532
        %794 = vmatmul.mubr.f32.gmra.mxu0 %v500
        %v795 = vpop.f32.mrf.mxu0
        %v796 = vadd.f32 %v651, %v795
        %v797 = vpop.f32.mrf.mxu0
        %798 = vmatprep.mubr.f32.mxu0 %v533
        %799 = vmatmul.mubr.f32.gmra.mxu0 %v501
        %v800 = vpop.f32.mrf.mxu0
        %v801 = vadd.f32 %v656, %v800
        %v802 = vpop.f32.mrf.mxu0
        %803 = vmatprep.mubr.f32.mxu0 %v534
        %804 = vmatmul.mubr.f32.gmra.mxu0 %v502
        %v805 = vpop.f32.mrf.mxu0
        %v806 = vadd.f32 %v661, %v805
        %v807 = vpop.f32.mrf.mxu0
        %808 = vmatprep.mubr.f32.mxu0 %v535
        %809 = vmatmul.mubr.f32.gmra.mxu0 %v503
        %v810 = vpop.f32.mrf.mxu0
        %v811 = vadd.f32 %v666, %v810
        %v812 = vpop.f32.mrf.mxu0
        %813 = vmatprep.mubr.f32.mxu0 %v536
        %814 = vmatmul.mubr.f32.gmra.mxu0 %v504
        %v815 = vpop.f32.mrf.mxu0
        %v816 = vadd.f32 %v671, %v815
        %v817 = vpop.f32.mrf.mxu0
        %818 = vmatprep.mubr.f32.mxu0 %v537
        %819 = vmatmul.mubr.f32.gmra.mxu0 %v505
        %v820 = vpop.f32.mrf.mxu0
        %v821 = vadd.f32 %v676, %v820
        %v822 = vpop.f32.mrf.mxu0
        %823 = vmatprep.mubr.f32.mxu0 %v538
        %824 = vmatmul.mubr.f32.gmra.mxu0 %v506
        %v825 = vpop.f32.mrf.mxu0
        %v826 = vadd.f32 %v681, %v825
        %v827 = vpop.f32.mrf.mxu0
        %828 = vdwg.mxu0
        %v829 = vadd.f32 %v267, %v751
        %v830 = vadd.f32 %v268, %v756
        %v831 = vadd.f32 %v269, %v761
        %v832 = vadd.f32 %v270, %v766
        %v833 = vadd.f32 %v271, %v771
        %v834 = vadd.f32 %v272, %v776
        %v835 = vadd.f32 %v273, %v781
        %v836 = vadd.f32 %v274, %v786
        %v837 = vadd.f32 %v275, %v791
        %v838 = vadd.f32 %v276, %v796
        %v839 = vadd.f32 %v277, %v801
        %v840 = vadd.f32 %v278, %v806
        %v841 = vadd.f32 %v279, %v811
        %v842 = vadd.f32 %v280, %v816
        %v843 = vadd.f32 %v281, %v821
        %v844 = vadd.f32 %v282, %v826
        %845 = vst [vmem:[%s246] sm:$0xff] %v829
        %846 = vst [vmem:[%s246 + $0x8] sm:$0xff] %v830
        %847 = vst [vmem:[%s246 + $0x10] sm:$0xff] %v831
        %848 = vst [vmem:[%s246 + $0x18] sm:$0xff] %v832
        %849 = vst [vmem:[%s246 + $0x20] sm:$0xff] %v833
        %850 = vst [vmem:[%s246 + $0x28] sm:$0xff] %v834
        %851 = vst [vmem:[%s246 + $0x30] sm:$0xff] %v835
        %852 = vst [vmem:[%s246 + $0x38] sm:$0xff] %v836
        %853 = vst [vmem:[%s246 + $0x40] sm:$0xff] %v837
        %854 = vst [vmem:[%s246 + $0x48] sm:$0xff] %v838
        %855 = vst [vmem:[%s246 + $0x50] sm:$0xff] %v839
        %856 = vst [vmem:[%s246 + $0x58] sm:$0xff] %v840
        %857 = vst [vmem:[%s246 + $0x60] sm:$0xff] %v841
        %858 = vst [vmem:[%s246 + $0x68] sm:$0xff] %v842
        %859 = vst [vmem:[%s246 + $0x70] sm:$0xff] %v843
        %860 = vst [vmem:[%s246 + $0x78] sm:$0xff] %v844
        %p861 = scmp.lt.s32.totalorder %s25, 1
        %s862 = scalar_select %p861, %s25, 1
        %p863 = scmp.lt.s32.totalorder %s24, 1
        %s864 = scalar_select %p863, %s24, 1
        %s865 = smul.addr %s864, 16
        %s866 = smul.addr %s862, 32
        %s867 = sadd.s32 %s865, %s866
        %s868 = smul.addr %s867, 8
        %s869 = scalar_lea.vmem %s2, %s868
        // Predicated region
        $region41: #{_pyramid_pooling_core.2} parent=27 // pred_check
          %p870 = pneg %p116
        $region42: #{_pyramid_pooling_core.2} parent=27 // pred_check_branch
          %872 = sbr.rel (%p870) target = $region44
        $region43: #{_pyramid_pooling_core.2} parent=27 // pred_region
          _
        $region44: #{_pyramid_pooling_core.2} parent=27 // pred_fallthru
          _
      $region28: #{_pyramid_pooling_core.2} parent=5 // pred_fallthru
        _
      %p873 = scmp.le.s32.totalorder 2, %s14
      // Predicated region
      $region45: #{_pyramid_pooling_core.2} parent=5 // pred_check
        %p874 = pneg %p873
      $region46: #{_pyramid_pooling_core.2} parent=5 // pred_check_branch
        %876 = sbr.rel (%p874) target = $region48
      $region47: #{_pyramid_pooling_core.2} parent=5 // pred_region
        %s877 = ssub.s32 %s14, 2
        // Predicated region
        $region49: #{_pyramid_pooling_core.2} parent=47 // pred_check
          %p878 = pneg %p122
        $region50: #{_pyramid_pooling_core.2} parent=47 // pred_check_branch
          %880 = sbr.rel (%p878) target = $region52
        $region51: #{_pyramid_pooling_core.2} parent=47 // pred_region
          %p881 = scmp.lt.s32.totalorder %s28, 1
          %s882 = scalar_select %p881, %s28, 1
          %p883 = scmp.lt.s32.totalorder %s27, 1
          %s884 = scalar_select %p883, %s27, 1
          %s885 = smul.addr %s884, 16
          %s886 = smul.addr %s882, 32
          %s887 = sadd.s32 %s885, %s886
          %s888 = smul.addr %s887, 8
          %s889 = scalar_lea.vmem %s2, %s888
        $region52: #{_pyramid_pooling_core.2} parent=47 // pred_fallthru
          _
      $region48: #{_pyramid_pooling_core.2} parent=5 // pred_fallthru
        _
    $region6: #{_pyramid_pooling_core.2} parent=1 // loop_footer
      %s18 = sadd.s32 1, %s14
    $region7: #{_pyramid_pooling_core.2} parent=1 // loop_footer_branch
      %13 = sbr.rel target = $region3
    $region8: #{_pyramid_pooling_core.2} parent=1 // loop_exit
      _
    %890 = vsyncpa [#allocation3], 1
    %s891 = scalar_lea.sflag [#allocation3], 1
    %892 = vsyncpa %s891, 1
    %893 = vsyncpa [#allocation5], 1
    %s894 = scalar_lea.sflag [#allocation5], 1
    %895 = vsyncpa %s894, 1

// kernel: _pyramid_pooling_core.3
$region0: #{_pyramid_pooling_core.3}
  #allocation0 [shape = 'u32[]', space=smem, size = 0x4, offset = 0x4, fixed_abs, tag = 'smem constant byte address 0x4 - core index']
  #allocation1 [shape = 'u32[144,128]{1,0:T(1,128)}', space=vmem, size = 0x12000, scoped, tag = 'internal scratch']
  %s0 = inlined_call_operand.vmem [shape: f32[2,128,128], index: 0, kind: input, shape index: {}]
  %s1 = inlined_call_operand.vmem [shape: f32[1024,128], index: 1, kind: input, shape index: {}]
  %s2 = inlined_call_operand.vmem [shape: f32[2,1024,128], index: 2, kind: input, shape index: {}]
  %s3 = inlined_call_operand.hbm [shape: f32[2,1024,256], index: 3, kind: output, shape index: {}]
  %s4 = sld [smem:[#allocation0]]
  $region45: #{_pyramid_pooling_core.3} parent=0
    _
  %s6 = ssub.s32 1, %s4
  %s7 = scalar_select 0, %s6, %s4
  $region1: #{_pyramid_pooling_core.3} parent=0
    #allocation2 [shape = 'u8[1048576]{0}', space=vmem, size = 0x100000, scoped, tag = 'output window, operand 0']
    #allocation3 [shape = 's32[2]{0}', space=sflag, size = 0x8, scoped, tag = 'scoped memory for _pyramid_pooling_core.3']
    %8 = vsyncpa [#allocation3], 0
    %s9 = scalar_lea.sflag [#allocation3], 1
    %10 = vsyncpa %s9, 0
    loop: start=0, step=1, limit=6
    $region2: #{_pyramid_pooling_core.3} parent=1 // loop_pre_header
      _
    $region3: #{_pyramid_pooling_core.3} parent=1 // loop_header
      %s12 = sphi 0, %s16
      %p13 = scmp.ge.s32.totalorder %s12, 6
      %s19 = sphi 0, %s31
      %s20 = sphi 0, %s27
      %s21 = sphi 0, %s19
      %s22 = sphi 0, %s20
      %s23 = sphi 0, %s21
      %s24 = sphi 0, %s22
      %s34 = sphi 0, %s36
      %s37 = sphi 0, %s34
      %s38 = sphi 0, %s37
      %s54 = sphi 0, %s38
      %s58 = sphi 0, %s58
      %s60 = sphi 0, %s58
      %s61 = sphi 0, %s60
      %s75 = sphi 0, %s61
      %s83 = sphi 0, %s85
      %s86 = sphi 0, %s83
      %s87 = sphi 0, %s86
      %s103 = sphi 0, %s87
      %s111 = sphi 0, %s113
      %s114 = sphi 0, %s111
      %s115 = sphi 0, %s114
      %s131 = sphi 0, %s115
    $region4: #{_pyramid_pooling_core.3} parent=1 // loop_header_branch
      %15 = sbr.rel (%p13) target = $region8
    $region5: #{_pyramid_pooling_core.3} parent=1 // loop_body
      %s17 = ssub.s32 %s12, 1
      %s18 = ssub.s32 %s12, 2
      %s25 = sadd.s32 1, %s20
      %p26 = scmp.ge.s32.totalorder %s25, 2
      %s27 = scalar_select %p26, 0, %s25
      %s28 = sadd.s32 1, %s19
      %s29 = scalar_select %p26, %s28, %s19
      %p30 = scmp.ge.s32.totalorder %s29, 2
      %s31 = scalar_select %p30, 0, %s29
      %s32 = ssub.s32 %s19, %s31
      %p33 = scmp.eq.s32.totalorder %s32, 0
      %s35 = sadd.s32 %s34, 1
      %s36 = scalar_select %p33, %s34, %s35
      %p39 = pneg %p33
      %p40 = scmp.eq.s32.totalorder %s12, 3
      %p41 = por %p39, %p40
      %p42 = scmp.ne.s32.totalorder %s34, %s37
      %p43 = scmp.eq.s32.totalorder %s12, 0
      %p44 = por %p42, %p43
      %p45 = scmp.ne.s32.totalorder %s34, %s37
      %p46 = scmp.eq.s32.totalorder %s17, 3
      %p47 = por %p45, %p46
      %p48 = scmp.ne.s32.totalorder %s37, %s38
      %p49 = scmp.eq.s32.totalorder %s17, 0
      %p50 = por %p48, %p49
      %p51 = scmp.ne.s32.totalorder %s37, %s38
      %p52 = scmp.eq.s32.totalorder %s18, 3
      %p53 = por %p51, %p52
      %p55 = scmp.ne.s32.totalorder %s38, %s54
      %p56 = scmp.eq.s32.totalorder %s18, 0
      %p57 = por %p55, %p56
      %s59 = sadd.s32 %s58, 1
      %p62 = scmp.eq.s32.totalorder %s12, 3
      %p63 = scmp.ne.s32.totalorder %s58, %s60
      %p64 = scmp.eq.s32.totalorder %s12, 0
      %p65 = por %p63, %p64
      %p66 = scmp.ne.s32.totalorder %s58, %s60
      %p67 = scmp.eq.s32.totalorder %s17, 3
      %p68 = por %p66, %p67
      %p69 = scmp.ne.s32.totalorder %s60, %s61
      %p70 = scmp.eq.s32.totalorder %s17, 0
      %p71 = por %p69, %p70
      %p72 = scmp.ne.s32.totalorder %s60, %s61
      %p73 = scmp.eq.s32.totalorder %s18, 3
      %p74 = por %p72, %p73
      %p76 = scmp.ne.s32.totalorder %s61, %s75
      %p77 = scmp.eq.s32.totalorder %s18, 0
      %p78 = por %p76, %p77
      %s79 = ssub.s32 %s19, %s31
      %s80 = ssub.s32 %s20, %s27
      %s81 = sor.u32 %s79, %s80
      %p82 = scmp.eq.s32.totalorder %s81, 0
      %s84 = sadd.s32 %s83, 1
      %s85 = scalar_select %p82, %s83, %s84
      %p88 = pneg %p82
      %p89 = scmp.eq.s32.totalorder %s12, 3
      %p90 = por %p88, %p89
      %p91 = scmp.ne.s32.totalorder %s83, %s86
      %p92 = scmp.eq.s32.totalorder %s12, 0
      %p93 = por %p91, %p92
      %p94 = scmp.ne.s32.totalorder %s83, %s86
      %p95 = scmp.eq.s32.totalorder %s17, 3
      %p96 = por %p94, %p95
      %p97 = scmp.ne.s32.totalorder %s86, %s87
      %p98 = scmp.eq.s32.totalorder %s17, 0
      %p99 = por %p97, %p98
      %p100 = scmp.ne.s32.totalorder %s86, %s87
      %p101 = scmp.eq.s32.totalorder %s18, 3
      %p102 = por %p100, %p101
      %p104 = scmp.ne.s32.totalorder %s87, %s103
      %p105 = scmp.eq.s32.totalorder %s18, 0
      %p106 = por %p104, %p105
      %s107 = ssub.s32 %s19, %s31
      %s108 = ssub.s32 %s20, %s27
      %s109 = sor.u32 %s107, %s108
      %p110 = scmp.eq.s32.totalorder %s109, 0
      %s112 = sadd.s32 %s111, 1
      %s113 = scalar_select %p110, %s111, %s112
      %p116 = pneg %p110
      %p117 = scmp.eq.s32.totalorder %s12, 3
      %p118 = por %p116, %p117
      %p119 = scmp.ne.s32.totalorder %s111, %s114
      %p120 = scmp.eq.s32.totalorder %s12, 0
      %p121 = por %p119, %p120
      %p122 = scmp.ne.s32.totalorder %s111, %s114
      %p123 = scmp.eq.s32.totalorder %s17, 3
      %p124 = por %p122, %p123
      %p125 = scmp.ne.s32.totalorder %s114, %s115
      %p126 = scmp.eq.s32.totalorder %s17, 0
      %p127 = por %p125, %p126
      %p128 = scmp.ne.s32.totalorder %s114, %s115
      %p129 = scmp.eq.s32.totalorder %s18, 3
      %p130 = por %p128, %p129
      %p132 = scmp.ne.s32.totalorder %s115, %s131
      %p133 = scmp.eq.s32.totalorder %s18, 0
      %p134 = por %p132, %p133
      %p135 = scmp.le.s32.totalorder 1, %s12
      %p136 = scmp.lt.s32.totalorder %s12, 5
      %p137 = pnand %p135, %p136
      %p138 = pneg %p137
      // Predicated region
      $region9: #{_pyramid_pooling_core.3} parent=5 // pred_check
        _
      $region10: #{_pyramid_pooling_core.3} parent=5 // pred_check_branch
        %140 = sbr.rel (%p137) target = $region12
      $region11: #{_pyramid_pooling_core.3} parent=5 // pred_region
        %s141 = ssub.s32 %s12, 1
        // Predicated region
        $region13: #{_pyramid_pooling_core.3} parent=11 // pred_check
          %p142 = pneg %p71
        $region14: #{_pyramid_pooling_core.3} parent=11 // pred_check_branch
          %144 = sbr.rel (%p142) target = $region16
        $region15: #{_pyramid_pooling_core.3} parent=11 // pred_region
          _
        $region16: #{_pyramid_pooling_core.3} parent=11 // pred_fallthru
          _
      $region12: #{_pyramid_pooling_core.3} parent=5 // pred_fallthru
        _
      %p145 = scmp.lt.s32.totalorder %s12, 4
      // Predicated region
      $region17: #{_pyramid_pooling_core.3} parent=5 // pred_check
        %p146 = pneg %p145
      $region18: #{_pyramid_pooling_core.3} parent=5 // pred_check_branch
        %148 = sbr.rel (%p146) target = $region20
      $region19: #{_pyramid_pooling_core.3} parent=5 // pred_region
        // Predicated region
        $region21: #{_pyramid_pooling_core.3} parent=19 // pred_check
          %p149 = pneg %p44
        $region22: #{_pyramid_pooling_core.3} parent=19 // pred_check_branch
          %151 = sbr.rel (%p149) target = $region24
        $region23: #{_pyramid_pooling_core.3} parent=19 // pred_region
          %p152 = scmp.lt.s32.totalorder %s19, 1
          %s153 = scalar_select %p152, %s19, 1
          %s154 = smul.addr %s153, 16
          %s155 = smul.addr %s154, 8
          %s156 = scalar_lea.vmem %s0, %s155
        $region24: #{_pyramid_pooling_core.3} parent=19 // pred_fallthru
          _
        // Predicated region
        $region25: #{_pyramid_pooling_core.3} parent=19 // pred_check
          %p157 = pneg %p93
        $region26: #{_pyramid_pooling_core.3} parent=19 // pred_check_branch
          %159 = sbr.rel (%p157) target = $region28
        $region27: #{_pyramid_pooling_core.3} parent=19 // pred_region
          %s160 = smul.u32 64, %s20
          %p161 = scmp.lt.s32.totalorder %s19, 1
          %s162 = scalar_select %p161, %s19, 1
          %p163 = scmp.lt.s32.totalorder %s160, 127
          %s164 = scalar_select %p163, %s160, 127
          %s165 = smul.addr %s162, 128
          %s166 = sadd.s32 %s164, %s165
          %s167 = smul.addr %s166, 8
          %s168 = scalar_lea.vmem %s2, %s167
          %s169 = smul.u32 64, %s20
        $region28: #{_pyramid_pooling_core.3} parent=19 // pred_fallthru
          _
      $region20: #{_pyramid_pooling_core.3} parent=5 // pred_fallthru
        _
      %p170 = scmp.le.s32.totalorder 1, %s12
      %p171 = scmp.lt.s32.totalorder %s12, 5
      %p172 = pnand %p170, %p171
      %p173 = pneg %p172
      // Predicated region
      $region29: #{_pyramid_pooling_core.3} parent=5 // pred_check
        _
      $region30: #{_pyramid_pooling_core.3} parent=5 // pred_check_branch
        %175 = sbr.rel (%p172) target = $region32
      $region31: #{_pyramid_pooling_core.3} parent=5 // pred_region
        %s176 = ssub.s32 %s12, 1
        %p177 = scmp.lt.s32.totalorder %s21, 1
        %s178 = scalar_select %p177, %s21, 1
        %s179 = smul.addr %s178, 16
        %s180 = smul.addr %s179, 8
        %s181 = scalar_lea.vmem %s0, %s180
        %p182 = pneg %p50
        %p183 = pneg %p47
        %p184 = pneg %p71
        %p185 = pneg %p68
        %s186 = smul.u32 64, %s22
        %p187 = scmp.lt.s32.totalorder %s21, 1
        %s188 = scalar_select %p187, %s21, 1
        %p189 = scmp.lt.s32.totalorder %s186, 127
        %s190 = scalar_select %p189, %s186, 127
        %s191 = smul.addr %s188, 128
        %s192 = sadd.s32 %s190, %s191
        %s193 = smul.addr %s192, 8
        %s194 = scalar_lea.vmem %s2, %s193
        %p195 = pneg %p99
        %p196 = pneg %p96
        %p197 = pneg %p127
        %p198 = pneg %p124
        %s199 = sand.u32 %s114, 1
        %s200 = scalar_lea.sflag [#allocation3], %s199
        %s201 = sand.u32 %s114, 1
        %s202 = smul.addr %s201, 1024
        %s203 = scalar_lea.vmem [#allocation2], %s202
        %p204 = scmp.lt.s32.totalorder %s21, 1
        %s205 = scalar_select %p204, %s21, 1
        %s206 = smul.addr %s205, 16
        %s207 = smul.addr %s206, 8
        %s208 = scalar_lea.vmem %s0, %s207
        %s209 = smul.u32 64, %s22
        %p210 = scmp.lt.s32.totalorder %s21, 1
        %s211 = scalar_select %p210, %s21, 1
        %p212 = scmp.lt.s32.totalorder %s209, 127
        %s213 = scalar_select %p212, %s209, 127
        %s214 = smul.addr %s211, 128
        %s215 = sadd.s32 %s213, %s214
        %s216 = smul.addr %s215, 8
        %s217 = scalar_lea.vmem %s2, %s216
        %s218 = smul.u32 64, %s22
        %s219 = smul.u32 64, %s22
        %s220 = smul.u32 %s22, 512
        %s221 = scalar_lea.vmem %s1, %s220
        %v222 = vld [vmem:[%s221] sm:$0xff]
        %v223 = vld [vmem:[%s221 + $0x8] sm:$0xff]
        %v224 = vld [vmem:[%s221 + $0x10] sm:$0xff]
        %v225 = vld [vmem:[%s221 + $0x18] sm:$0xff]
        %v226 = vld [vmem:[%s221 + $0x20] sm:$0xff]
        %v227 = vld [vmem:[%s221 + $0x28] sm:$0xff]
        %v228 = vld [vmem:[%s221 + $0x30] sm:$0xff]
        %v229 = vld [vmem:[%s221 + $0x38] sm:$0xff]
        %v230 = vld [vmem:[%s221 + $0x40] sm:$0xff]
        %v231 = vld [vmem:[%s221 + $0x48] sm:$0xff]
        %v232 = vld [vmem:[%s221 + $0x50] sm:$0xff]
        %v233 = vld [vmem:[%s221 + $0x58] sm:$0xff]
        %v234 = vld [vmem:[%s221 + $0x60] sm:$0xff]
        %v235 = vld [vmem:[%s221 + $0x68] sm:$0xff]
        %v236 = vld [vmem:[%s221 + $0x70] sm:$0xff]
        %v237 = vld [vmem:[%s221 + $0x78] sm:$0xff]
        %v238 = vld [vmem:[%s221 + $0x80] sm:$0xff]
        %v239 = vld [vmem:[%s221 + $0x88] sm:$0xff]
        %v240 = vld [vmem:[%s221 + $0x90] sm:$0xff]
        %v241 = vld [vmem:[%s221 + $0x98] sm:$0xff]
        %v242 = vld [vmem:[%s221 + $0xa0] sm:$0xff]
        %v243 = vld [vmem:[%s221 + $0xa8] sm:$0xff]
        %v244 = vld [vmem:[%s221 + $0xb0] sm:$0xff]
        %v245 = vld [vmem:[%s221 + $0xb8] sm:$0xff]
        %v246 = vld [vmem:[%s221 + $0xc0] sm:$0xff]
        %v247 = vld [vmem:[%s221 + $0xc8] sm:$0xff]
        %v248 = vld [vmem:[%s221 + $0xd0] sm:$0xff]
        %v249 = vld [vmem:[%s221 + $0xd8] sm:$0xff]
        %v250 = vld [vmem:[%s221 + $0xe0] sm:$0xff]
        %v251 = vld [vmem:[%s221 + $0xe8] sm:$0xff]
        %v252 = vld [vmem:[%s221 + $0xf0] sm:$0xff]
        %v253 = vld [vmem:[%s221 + $0xf8] sm:$0xff]
        %v254 = vld [vmem:[%s221 + $0x100] sm:$0xff]
        %v255 = vld [vmem:[%s221 + $0x108] sm:$0xff]
        %v256 = vld [vmem:[%s221 + $0x110] sm:$0xff]
        %v257 = vld [vmem:[%s221 + $0x118] sm:$0xff]
        %v258 = vld [vmem:[%s221 + $0x120] sm:$0xff]
        %v259 = vld [vmem:[%s221 + $0x128] sm:$0xff]
        %v260 = vld [vmem:[%s221 + $0x130] sm:$0xff]
        %v261 = vld [vmem:[%s221 + $0x138] sm:$0xff]
        %v262 = vld [vmem:[%s221 + $0x140] sm:$0xff]
        %v263 = vld [vmem:[%s221 + $0x148] sm:$0xff]
        %v264 = vld [vmem:[%s221 + $0x150] sm:$0xff]
        %v265 = vld [vmem:[%s221 + $0x158] sm:$0xff]
        %v266 = vld [vmem:[%s221 + $0x160] sm:$0xff]
        %v267 = vld [vmem:[%s221 + $0x168] sm:$0xff]
        %v268 = vld [vmem:[%s221 + $0x170] sm:$0xff]
        %v269 = vld [vmem:[%s221 + $0x178] sm:$0xff]
        %v270 = vld [vmem:[%s221 + $0x180] sm:$0xff]
        %v271 = vld [vmem:[%s221 + $0x188] sm:$0xff]
        %v272 = vld [vmem:[%s221 + $0x190] sm:$0xff]
        %v273 = vld [vmem:[%s221 + $0x198] sm:$0xff]
        %v274 = vld [vmem:[%s221 + $0x1a0] sm:$0xff]
        %v275 = vld [vmem:[%s221 + $0x1a8] sm:$0xff]
        %v276 = vld [vmem:[%s221 + $0x1b0] sm:$0xff]
        %v277 = vld [vmem:[%s221 + $0x1b8] sm:$0xff]
        %v278 = vld [vmem:[%s221 + $0x1c0] sm:$0xff]
        %v279 = vld [vmem:[%s221 + $0x1c8] sm:$0xff]
        %v280 = vld [vmem:[%s221 + $0x1d0] sm:$0xff]
        %v281 = vld [vmem:[%s221 + $0x1d8] sm:$0xff]
        %v282 = vld [vmem:[%s221 + $0x1e0] sm:$0xff]
        %v283 = vld [vmem:[%s221 + $0x1e8] sm:$0xff]
        %v284 = vld [vmem:[%s221 + $0x1f0] sm:$0xff]
        %v285 = vld [vmem:[%s221 + $0x1f8] sm:$0xff]
        %v286 = vld [vmem:[%s217] sm:$0xff]
        %v287 = vld [vmem:[%s217 + $0x8] sm:$0xff]
        %v288 = vld [vmem:[%s217 + $0x10] sm:$0xff]
        %v289 = vld [vmem:[%s217 + $0x18] sm:$0xff]
        %v290 = vld [vmem:[%s217 + $0x20] sm:$0xff]
        %v291 = vld [vmem:[%s217 + $0x28] sm:$0xff]
        %v292 = vld [vmem:[%s217 + $0x30] sm:$0xff]
        %v293 = vld [vmem:[%s217 + $0x38] sm:$0xff]
        %v294 = vld [vmem:[%s217 + $0x40] sm:$0xff]
        %v295 = vld [vmem:[%s217 + $0x48] sm:$0xff]
        %v296 = vld [vmem:[%s217 + $0x50] sm:$0xff]
        %v297 = vld [vmem:[%s217 + $0x58] sm:$0xff]
        %v298 = vld [vmem:[%s217 + $0x60] sm:$0xff]
        %v299 = vld [vmem:[%s217 + $0x68] sm:$0xff]
        %v300 = vld [vmem:[%s217 + $0x70] sm:$0xff]
        %v301 = vld [vmem:[%s217 + $0x78] sm:$0xff]
        %v302 = vld [vmem:[%s217 + $0x80] sm:$0xff]
        %v303 = vld [vmem:[%s217 + $0x88] sm:$0xff]
        %v304 = vld [vmem:[%s217 + $0x90] sm:$0xff]
        %v305 = vld [vmem:[%s217 + $0x98] sm:$0xff]
        %v306 = vld [vmem:[%s217 + $0xa0] sm:$0xff]
        %v307 = vld [vmem:[%s217 + $0xa8] sm:$0xff]
        %v308 = vld [vmem:[%s217 + $0xb0] sm:$0xff]
        %v309 = vld [vmem:[%s217 + $0xb8] sm:$0xff]
        %v310 = vld [vmem:[%s217 + $0xc0] sm:$0xff]
        %v311 = vld [vmem:[%s217 + $0xc8] sm:$0xff]
        %v312 = vld [vmem:[%s217 + $0xd0] sm:$0xff]
        %v313 = vld [vmem:[%s217 + $0xd8] sm:$0xff]
        %v314 = vld [vmem:[%s217 + $0xe0] sm:$0xff]
        %v315 = vld [vmem:[%s217 + $0xe8] sm:$0xff]
        %v316 = vld [vmem:[%s217 + $0xf0] sm:$0xff]
        %v317 = vld [vmem:[%s217 + $0xf8] sm:$0xff]
        %v318 = vld [vmem:[%s217 + $0x100] sm:$0xff]
        %v319 = vld [vmem:[%s217 + $0x108] sm:$0xff]
        %v320 = vld [vmem:[%s217 + $0x110] sm:$0xff]
        %v321 = vld [vmem:[%s217 + $0x118] sm:$0xff]
        %v322 = vld [vmem:[%s217 + $0x120] sm:$0xff]
        %v323 = vld [vmem:[%s217 + $0x128] sm:$0xff]
        %v324 = vld [vmem:[%s217 + $0x130] sm:$0xff]
        %v325 = vld [vmem:[%s217 + $0x138] sm:$0xff]
        %v326 = vld [vmem:[%s217 + $0x140] sm:$0xff]
        %v327 = vld [vmem:[%s217 + $0x148] sm:$0xff]
        %v328 = vld [vmem:[%s217 + $0x150] sm:$0xff]
        %v329 = vld [vmem:[%s217 + $0x158] sm:$0xff]
        %v330 = vld [vmem:[%s217 + $0x160] sm:$0xff]
        %v331 = vld [vmem:[%s217 + $0x168] sm:$0xff]
        %v332 = vld [vmem:[%s217 + $0x170] sm:$0xff]
        %v333 = vld [vmem:[%s217 + $0x178] sm:$0xff]
        %v334 = vld [vmem:[%s217 + $0x180] sm:$0xff]
        %v335 = vld [vmem:[%s217 + $0x188] sm:$0xff]
        %v336 = vld [vmem:[%s217 + $0x190] sm:$0xff]
        %v337 = vld [vmem:[%s217 + $0x198] sm:$0xff]
        %v338 = vld [vmem:[%s217 + $0x1a0] sm:$0xff]
        %v339 = vld [vmem:[%s217 + $0x1a8] sm:$0xff]
        %v340 = vld [vmem:[%s217 + $0x1b0] sm:$0xff]
        %v341 = vld [vmem:[%s217 + $0x1b8] sm:$0xff]
        %v342 = vld [vmem:[%s217 + $0x1c0] sm:$0xff]
        %v343 = vld [vmem:[%s217 + $0x1c8] sm:$0xff]
        %v344 = vld [vmem:[%s217 + $0x1d0] sm:$0xff]
        %v345 = vld [vmem:[%s217 + $0x1d8] sm:$0xff]
        %v346 = vld [vmem:[%s217 + $0x1e0] sm:$0xff]
        %v347 = vld [vmem:[%s217 + $0x1e8] sm:$0xff]
        %v348 = vld [vmem:[%s217 + $0x1f0] sm:$0xff]
        %v349 = vld [vmem:[%s217 + $0x1f8] sm:$0xff]
        %350 = vst [vmem:[%s203] sm:$0xff] %v286
        %351 = vst [vmem:[%s203 + $0x10] sm:$0xff] %v287
        %352 = vst [vmem:[%s203 + $0x20] sm:$0xff] %v288
        %353 = vst [vmem:[%s203 + $0x30] sm:$0xff] %v289
        %354 = vst [vmem:[%s203 + $0x40] sm:$0xff] %v290
        %355 = vst [vmem:[%s203 + $0x50] sm:$0xff] %v291
        %356 = vst [vmem:[%s203 + $0x60] sm:$0xff] %v292
        %357 = vst [vmem:[%s203 + $0x70] sm:$0xff] %v293
        %358 = vst [vmem:[%s203 + $0x80] sm:$0xff] %v294
        %359 = vst [vmem:[%s203 + $0x90] sm:$0xff] %v295
        %360 = vst [vmem:[%s203 + $0xa0] sm:$0xff] %v296
        %361 = vst [vmem:[%s203 + $0xb0] sm:$0xff] %v297
        %362 = vst [vmem:[%s203 + $0xc0] sm:$0xff] %v298
        %363 = vst [vmem:[%s203 + $0xd0] sm:$0xff] %v299
        %364 = vst [vmem:[%s203 + $0xe0] sm:$0xff] %v300
        %365 = vst [vmem:[%s203 + $0xf0] sm:$0xff] %v301
        %366 = vst [vmem:[%s203 + $0x100] sm:$0xff] %v302
        %367 = vst [vmem:[%s203 + $0x110] sm:$0xff] %v303
        %368 = vst [vmem:[%s203 + $0x120] sm:$0xff] %v304
        %369 = vst [vmem:[%s203 + $0x130] sm:$0xff] %v305
        %370 = vst [vmem:[%s203 + $0x140] sm:$0xff] %v306
        %371 = vst [vmem:[%s203 + $0x150] sm:$0xff] %v307
        %372 = vst [vmem:[%s203 + $0x160] sm:$0xff] %v308
        %373 = vst [vmem:[%s203 + $0x170] sm:$0xff] %v309
        %374 = vst [vmem:[%s203 + $0x180] sm:$0xff] %v310
        %375 = vst [vmem:[%s203 + $0x190] sm:$0xff] %v311
        %376 = vst [vmem:[%s203 + $0x1a0] sm:$0xff] %v312
        %377 = vst [vmem:[%s203 + $0x1b0] sm:$0xff] %v313
        %378 = vst [vmem:[%s203 + $0x1c0] sm:$0xff] %v314
        %379 = vst [vmem:[%s203 + $0x1d0] sm:$0xff] %v315
        %380 = vst [vmem:[%s203 + $0x1e0] sm:$0xff] %v316
        %381 = vst [vmem:[%s203 + $0x1f0] sm:$0xff] %v317
        %382 = vst [vmem:[%s203 + $0x200] sm:$0xff] %v318
        %383 = vst [vmem:[%s203 + $0x210] sm:$0xff] %v319
        %384 = vst [vmem:[%s203 + $0x220] sm:$0xff] %v320
        %385 = vst [vmem:[%s203 + $0x230] sm:$0xff] %v321
        %386 = vst [vmem:[%s203 + $0x240] sm:$0xff] %v322
        %387 = vst [vmem:[%s203 + $0x250] sm:$0xff] %v323
        %388 = vst [vmem:[%s203 + $0x260] sm:$0xff] %v324
        %389 = vst [vmem:[%s203 + $0x270] sm:$0xff] %v325
        %390 = vst [vmem:[%s203 + $0x280] sm:$0xff] %v326
        %391 = vst [vmem:[%s203 + $0x290] sm:$0xff] %v327
        %392 = vst [vmem:[%s203 + $0x2a0] sm:$0xff] %v328
        %393 = vst [vmem:[%s203 + $0x2b0] sm:$0xff] %v329
        %394 = vst [vmem:[%s203 + $0x2c0] sm:$0xff] %v330
        %395 = vst [vmem:[%s203 + $0x2d0] sm:$0xff] %v331
        %396 = vst [vmem:[%s203 + $0x2e0] sm:$0xff] %v332
        %397 = vst [vmem:[%s203 + $0x2f0] sm:$0xff] %v333
        %398 = vst [vmem:[%s203 + $0x300] sm:$0xff] %v334
        %399 = vst [vmem:[%s203 + $0x310] sm:$0xff] %v335
        %400 = vst [vmem:[%s203 + $0x320] sm:$0xff] %v336
        %401 = vst [vmem:[%s203 + $0x330] sm:$0xff] %v337
        %402 = vst [vmem:[%s203 + $0x340] sm:$0xff] %v338
        %403 = vst [vmem:[%s203 + $0x350] sm:$0xff] %v339
        %404 = vst [vmem:[%s203 + $0x360] sm:$0xff] %v340
        %405 = vst [vmem:[%s203 + $0x370] sm:$0xff] %v341
        %406 = vst [vmem:[%s203 + $0x380] sm:$0xff] %v342
        %407 = vst [vmem:[%s203 + $0x390] sm:$0xff] %v343
        %408 = vst [vmem:[%s203 + $0x3a0] sm:$0xff] %v344
        %409 = vst [vmem:[%s203 + $0x3b0] sm:$0xff] %v345
        %410 = vst [vmem:[%s203 + $0x3c0] sm:$0xff] %v346
        %411 = vst [vmem:[%s203 + $0x3d0] sm:$0xff] %v347
        %412 = vst [vmem:[%s203 + $0x3e0] sm:$0xff] %v348
        %413 = vst [vmem:[%s203 + $0x3f0] sm:$0xff] %v349
        %v414 = vld [vmem:[%s208] sm:$0xff]
        %v415 = vld [vmem:[%s208 + $0x8] sm:$0xff]
        %v416 = vld [vmem:[%s208 + $0x10] sm:$0xff]
        %v417 = vld [vmem:[%s208 + $0x18] sm:$0xff]
        %v418 = vld [vmem:[%s208 + $0x20] sm:$0xff]
        %v419 = vld [vmem:[%s208 + $0x28] sm:$0xff]
        %v420 = vld [vmem:[%s208 + $0x30] sm:$0xff]
        %v421 = vld [vmem:[%s208 + $0x38] sm:$0xff]
        %v422 = vld [vmem:[%s208 + $0x40] sm:$0xff]
        %v423 = vld [vmem:[%s208 + $0x48] sm:$0xff]
        %v424 = vld [vmem:[%s208 + $0x50] sm:$0xff]
        %v425 = vld [vmem:[%s208 + $0x58] sm:$0xff]
        %v426 = vld [vmem:[%s208 + $0x60] sm:$0xff]
        %v427 = vld [vmem:[%s208 + $0x68] sm:$0xff]
        %v428 = vld [vmem:[%s208 + $0x70] sm:$0xff]
        %v429 = vld [vmem:[%s208 + $0x78] sm:$0xff]
        %430 = vmatprep.subr.mxu0 0.0
        %431 = vmatpush1.msra.mxu0 %v429
        %432 = vmatprep.subr.mxu0 0.0
        %433 = vmatpush1.msra.mxu0 %v428
        %434 = vmatprep.subr.mxu0 0.0
        %435 = vmatpush1.msra.mxu0 %v427
        %436 = vmatprep.subr.mxu0 0.0
        %437 = vmatpush1.msra.mxu0 %v426
        %438 = vmatprep.subr.mxu0 0.0
        %439 = vmatpush1.msra.mxu0 %v425
        %440 = vmatprep.subr.mxu0 0.0
        %441 = vmatpush1.msra.mxu0 %v424
        %442 = vmatprep.subr.mxu0 0.0
        %443 = vmatpush1.msra.mxu0 %v423
        %444 = vmatprep.subr.mxu0 0.0
        %445 = vmatpush1.msra.mxu0 %v422
        %446 = vmatprep.subr.mxu0 0.0
        %447 = vmatpush1.msra.mxu0 %v421
        %448 = vmatprep.subr.mxu0 0.0
        %449 = vmatpush1.msra.mxu0 %v420
        %450 = vmatprep.subr.mxu0 0.0
        %451 = vmatpush1.msra.mxu0 %v419
        %452 = vmatprep.subr.mxu0 0.0
        %453 = vmatpush1.msra.mxu0 %v418
        %454 = vmatprep.subr.mxu0 0.0
        %455 = vmatpush1.msra.mxu0 %v417
        %456 = vmatprep.subr.mxu0 0.0
        %457 = vmatpush1.msra.mxu0 %v416
        %458 = vmatprep.subr.mxu0 0.0
        %459 = vmatpush1.msra.mxu0 %v415
        %460 = vmatprep.subr.mxu0 0.0
        %461 = vmatpush1.msra.mxu0 %v414
        %462 = vmatprep.subr.mxu0 0.0
        %463 = vmatpush2.msra.mxu0 0.0
        %464 = vmatprep.subr.mxu0 0.0
        %465 = vmatpush2.msra.mxu0 0.0
        %466 = vmatprep.subr.mxu0 0.0
        %467 = vmatpush2.msra.mxu0 0.0
        %468 = vmatprep.subr.mxu0 0.0
        %469 = vmatpush2.msra.mxu0 0.0
        %470 = vmatprep.subr.mxu0 0.0
        %471 = vmatpush2.msra.mxu0 0.0
        %472 = vmatprep.subr.mxu0 0.0
        %473 = vmatpush2.msra.mxu0 0.0
        %474 = vmatprep.subr.mxu0 0.0
        %475 = vmatpush2.msra.mxu0 0.0
        %476 = vmatprep.subr.mxu0 0.0
        %477 = vmatpush2.msra.mxu0 0.0
        %478 = vmatprep.subr.mxu0 0.0
        %479 = vmatpush2.msra.mxu0 0.0
        %480 = vmatprep.subr.mxu0 0.0
        %481 = vmatpush2.msra.mxu0 0.0
        %482 = vmatprep.subr.mxu0 0.0
        %483 = vmatpush2.msra.mxu0 0.0
        %484 = vmatprep.subr.mxu0 0.0
        %485 = vmatpush2.msra.mxu0 0.0
        %486 = vmatprep.subr.mxu0 0.0
        %487 = vmatpush2.msra.mxu0 0.0
        %488 = vmatprep.subr.mxu0 0.0
        %489 = vmatpush2.msra.mxu0 0.0
        %490 = vmatprep.subr.mxu0 0.0
        %491 = vmatpush2.msra.mxu0 0.0
        %492 = vmatprep.subr.mxu0 0.0
        %493 = vmatpush2.msra.mxu0 0.0
        %494 = vmatprep.mubr.f32.mxu0 0.0
        %495 = vmatmul.mubr.f32.gmra.mxu0 %v222
        %v496 = vpop.f32.mrf.mxu0
        %v497 = vadd.f32 0.0, %v496
        %v498 = vpop.f32.mrf.mxu0
        %499 = vmatprep.mubr.f32.mxu0 0.0
        %500 = vmatmul.mubr.f32.gmra.mxu0 %v223
        %v501 = vpop.f32.mrf.mxu0
        %v502 = vadd.f32 0.0, %v501
        %v503 = vpop.f32.mrf.mxu0
        %504 = vmatprep.mubr.f32.mxu0 0.0
        %505 = vmatmul.mubr.f32.gmra.mxu0 %v224
        %v506 = vpop.f32.mrf.mxu0
        %v507 = vadd.f32 0.0, %v506
        %v508 = vpop.f32.mrf.mxu0
        %509 = vmatprep.mubr.f32.mxu0 0.0
        %510 = vmatmul.mubr.f32.gmra.mxu0 %v225
        %v511 = vpop.f32.mrf.mxu0
        %v512 = vadd.f32 0.0, %v511
        %v513 = vpop.f32.mrf.mxu0
        %514 = vmatprep.mubr.f32.mxu0 0.0
        %515 = vmatmul.mubr.f32.gmra.mxu0 %v226
        %v516 = vpop.f32.mrf.mxu0
        %v517 = vadd.f32 0.0, %v516
        %v518 = vpop.f32.mrf.mxu0
        %519 = vmatprep.mubr.f32.mxu0 0.0
        %520 = vmatmul.mubr.f32.gmra.mxu0 %v227
        %v521 = vpop.f32.mrf.mxu0
        %v522 = vadd.f32 0.0, %v521
        %v523 = vpop.f32.mrf.mxu0
        %524 = vmatprep.mubr.f32.mxu0 0.0
        %525 = vmatmul.mubr.f32.gmra.mxu0 %v228
        %v526 = vpop.f32.mrf.mxu0
        %v527 = vadd.f32 0.0, %v526
        %v528 = vpop.f32.mrf.mxu0
        %529 = vmatprep.mubr.f32.mxu0 0.0
        %530 = vmatmul.mubr.f32.gmra.mxu0 %v229
        %v531 = vpop.f32.mrf.mxu0
        %v532 = vadd.f32 0.0, %v531
        %v533 = vpop.f32.mrf.mxu0
        %534 = vmatprep.mubr.f32.mxu0 0.0
        %535 = vmatmul.mubr.f32.gmra.mxu0 %v230
        %v536 = vpop.f32.mrf.mxu0
        %v537 = vadd.f32 0.0, %v536
        %v538 = vpop.f32.mrf.mxu0
        %539 = vmatprep.mubr.f32.mxu0 0.0
        %540 = vmatmul.mubr.f32.gmra.mxu0 %v231
        %v541 = vpop.f32.mrf.mxu0
        %v542 = vadd.f32 0.0, %v541
        %v543 = vpop.f32.mrf.mxu0
        %544 = vmatprep.mubr.f32.mxu0 0.0
        %545 = vmatmul.mubr.f32.gmra.mxu0 %v232
        %v546 = vpop.f32.mrf.mxu0
        %v547 = vadd.f32 0.0, %v546
        %v548 = vpop.f32.mrf.mxu0
        %549 = vmatprep.mubr.f32.mxu0 0.0
        %550 = vmatmul.mubr.f32.gmra.mxu0 %v233
        %v551 = vpop.f32.mrf.mxu0
        %v552 = vadd.f32 0.0, %v551
        %v553 = vpop.f32.mrf.mxu0
        %554 = vmatprep.mubr.f32.mxu0 0.0
        %555 = vmatmul.mubr.f32.gmra.mxu0 %v234
        %v556 = vpop.f32.mrf.mxu0
        %v557 = vadd.f32 0.0, %v556
        %v558 = vpop.f32.mrf.mxu0
        %559 = vmatprep.mubr.f32.mxu0 0.0
        %560 = vmatmul.mubr.f32.gmra.mxu0 %v235
        %v561 = vpop.f32.mrf.mxu0
        %v562 = vadd.f32 0.0, %v561
        %v563 = vpop.f32.mrf.mxu0
        %564 = vmatprep.mubr.f32.mxu0 0.0
        %565 = vmatmul.mubr.f32.gmra.mxu0 %v236
        %v566 = vpop.f32.mrf.mxu0
        %v567 = vadd.f32 0.0, %v566
        %v568 = vpop.f32.mrf.mxu0
        %569 = vmatprep.mubr.f32.mxu0 0.0
        %570 = vmatmul.mubr.f32.gmra.mxu0 %v237
        %v571 = vpop.f32.mrf.mxu0
        %v572 = vadd.f32 0.0, %v571
        %v573 = vpop.f32.mrf.mxu0
        %574 = vmatprep.mubr.f32.mxu0 0.0
        %575 = vmatmul.mubr.f32.gmra.mxu0 %v238
        %v576 = vpop.f32.mrf.mxu0
        %v577 = vadd.f32 0.0, %v576
        %v578 = vpop.f32.mrf.mxu0
        %579 = vmatprep.mubr.f32.mxu0 0.0
        %580 = vmatmul.mubr.f32.gmra.mxu0 %v239
        %v581 = vpop.f32.mrf.mxu0
        %v582 = vadd.f32 0.0, %v581
        %v583 = vpop.f32.mrf.mxu0
        %584 = vmatprep.mubr.f32.mxu0 0.0
        %585 = vmatmul.mubr.f32.gmra.mxu0 %v240
        %v586 = vpop.f32.mrf.mxu0
        %v587 = vadd.f32 0.0, %v586
        %v588 = vpop.f32.mrf.mxu0
        %589 = vmatprep.mubr.f32.mxu0 0.0
        %590 = vmatmul.mubr.f32.gmra.mxu0 %v241
        %v591 = vpop.f32.mrf.mxu0
        %v592 = vadd.f32 0.0, %v591
        %v593 = vpop.f32.mrf.mxu0
        %594 = vmatprep.mubr.f32.mxu0 0.0
        %595 = vmatmul.mubr.f32.gmra.mxu0 %v242
        %v596 = vpop.f32.mrf.mxu0
        %v597 = vadd.f32 0.0, %v596
        %v598 = vpop.f32.mrf.mxu0
        %599 = vmatprep.mubr.f32.mxu0 0.0
        %600 = vmatmul.mubr.f32.gmra.mxu0 %v243
        %v601 = vpop.f32.mrf.mxu0
        %v602 = vadd.f32 0.0, %v601
        %v603 = vpop.f32.mrf.mxu0
        %604 = vmatprep.mubr.f32.mxu0 0.0
        %605 = vmatmul.mubr.f32.gmra.mxu0 %v244
        %v606 = vpop.f32.mrf.mxu0
        %v607 = vadd.f32 0.0, %v606
        %v608 = vpop.f32.mrf.mxu0
        %609 = vmatprep.mubr.f32.mxu0 0.0
        %610 = vmatmul.mubr.f32.gmra.mxu0 %v245
        %v611 = vpop.f32.mrf.mxu0
        %v612 = vadd.f32 0.0, %v611
        %v613 = vpop.f32.mrf.mxu0
        %614 = vmatprep.mubr.f32.mxu0 0.0
        %615 = vmatmul.mubr.f32.gmra.mxu0 %v246
        %v616 = vpop.f32.mrf.mxu0
        %v617 = vadd.f32 0.0, %v616
        %v618 = vpop.f32.mrf.mxu0
        %619 = vmatprep.mubr.f32.mxu0 0.0
        %620 = vmatmul.mubr.f32.gmra.mxu0 %v247
        %v621 = vpop.f32.mrf.mxu0
        %v622 = vadd.f32 0.0, %v621
        %v623 = vpop.f32.mrf.mxu0
        %624 = vmatprep.mubr.f32.mxu0 0.0
        %625 = vmatmul.mubr.f32.gmra.mxu0 %v248
        %v626 = vpop.f32.mrf.mxu0
        %v627 = vadd.f32 0.0, %v626
        %v628 = vpop.f32.mrf.mxu0
        %629 = vmatprep.mubr.f32.mxu0 0.0
        %630 = vmatmul.mubr.f32.gmra.mxu0 %v249
        %v631 = vpop.f32.mrf.mxu0
        %v632 = vadd.f32 0.0, %v631
        %v633 = vpop.f32.mrf.mxu0
        %634 = vmatprep.mubr.f32.mxu0 0.0
        %635 = vmatmul.mubr.f32.gmra.mxu0 %v250
        %v636 = vpop.f32.mrf.mxu0
        %v637 = vadd.f32 0.0, %v636
        %v638 = vpop.f32.mrf.mxu0
        %639 = vmatprep.mubr.f32.mxu0 0.0
        %640 = vmatmul.mubr.f32.gmra.mxu0 %v251
        %v641 = vpop.f32.mrf.mxu0
        %v642 = vadd.f32 0.0, %v641
        %v643 = vpop.f32.mrf.mxu0
        %644 = vmatprep.mubr.f32.mxu0 0.0
        %645 = vmatmul.mubr.f32.gmra.mxu0 %v252
        %v646 = vpop.f32.mrf.mxu0
        %v647 = vadd.f32 0.0, %v646
        %v648 = vpop.f32.mrf.mxu0
        %649 = vmatprep.mubr.f32.mxu0 0.0
        %650 = vmatmul.mubr.f32.gmra.mxu0 %v253
        %v651 = vpop.f32.mrf.mxu0
        %v652 = vadd.f32 0.0, %v651
        %v653 = vpop.f32.mrf.mxu0
        %654 = vmatprep.mubr.f32.mxu0 0.0
        %655 = vmatmul.mubr.f32.gmra.mxu0 %v254
        %v656 = vpop.f32.mrf.mxu0
        %v657 = vadd.f32 0.0, %v656
        %v658 = vpop.f32.mrf.mxu0
        %659 = vmatprep.mubr.f32.mxu0 0.0
        %660 = vmatmul.mubr.f32.gmra.mxu0 %v255
        %v661 = vpop.f32.mrf.mxu0
        %v662 = vadd.f32 0.0, %v661
        %v663 = vpop.f32.mrf.mxu0
        %664 = vmatprep.mubr.f32.mxu0 0.0
        %665 = vmatmul.mubr.f32.gmra.mxu0 %v256
        %v666 = vpop.f32.mrf.mxu0
        %v667 = vadd.f32 0.0, %v666
        %v668 = vpop.f32.mrf.mxu0
        %669 = vmatprep.mubr.f32.mxu0 0.0
        %670 = vmatmul.mubr.f32.gmra.mxu0 %v257
        %v671 = vpop.f32.mrf.mxu0
        %v672 = vadd.f32 0.0, %v671
        %v673 = vpop.f32.mrf.mxu0
        %674 = vmatprep.mubr.f32.mxu0 0.0
        %675 = vmatmul.mubr.f32.gmra.mxu0 %v258
        %v676 = vpop.f32.mrf.mxu0
        %v677 = vadd.f32 0.0, %v676
        %v678 = vpop.f32.mrf.mxu0
        %679 = vmatprep.mubr.f32.mxu0 0.0
        %680 = vmatmul.mubr.f32.gmra.mxu0 %v259
        %v681 = vpop.f32.mrf.mxu0
        %v682 = vadd.f32 0.0, %v681
        %v683 = vpop.f32.mrf.mxu0
        %684 = vmatprep.mubr.f32.mxu0 0.0
        %685 = vmatmul.mubr.f32.gmra.mxu0 %v260
        %v686 = vpop.f32.mrf.mxu0
        %v687 = vadd.f32 0.0, %v686
        %v688 = vpop.f32.mrf.mxu0
        %689 = vmatprep.mubr.f32.mxu0 0.0
        %690 = vmatmul.mubr.f32.gmra.mxu0 %v261
        %v691 = vpop.f32.mrf.mxu0
        %v692 = vadd.f32 0.0, %v691
        %v693 = vpop.f32.mrf.mxu0
        %694 = vmatprep.mubr.f32.mxu0 0.0
        %695 = vmatmul.mubr.f32.gmra.mxu0 %v262
        %v696 = vpop.f32.mrf.mxu0
        %v697 = vadd.f32 0.0, %v696
        %v698 = vpop.f32.mrf.mxu0
        %699 = vmatprep.mubr.f32.mxu0 0.0
        %700 = vmatmul.mubr.f32.gmra.mxu0 %v263
        %v701 = vpop.f32.mrf.mxu0
        %v702 = vadd.f32 0.0, %v701
        %v703 = vpop.f32.mrf.mxu0
        %704 = vmatprep.mubr.f32.mxu0 0.0
        %705 = vmatmul.mubr.f32.gmra.mxu0 %v264
        %v706 = vpop.f32.mrf.mxu0
        %v707 = vadd.f32 0.0, %v706
        %v708 = vpop.f32.mrf.mxu0
        %709 = vmatprep.mubr.f32.mxu0 0.0
        %710 = vmatmul.mubr.f32.gmra.mxu0 %v265
        %v711 = vpop.f32.mrf.mxu0
        %v712 = vadd.f32 0.0, %v711
        %v713 = vpop.f32.mrf.mxu0
        %714 = vmatprep.mubr.f32.mxu0 0.0
        %715 = vmatmul.mubr.f32.gmra.mxu0 %v266
        %v716 = vpop.f32.mrf.mxu0
        %v717 = vadd.f32 0.0, %v716
        %v718 = vpop.f32.mrf.mxu0
        %719 = vmatprep.mubr.f32.mxu0 0.0
        %720 = vmatmul.mubr.f32.gmra.mxu0 %v267
        %v721 = vpop.f32.mrf.mxu0
        %v722 = vadd.f32 0.0, %v721
        %v723 = vpop.f32.mrf.mxu0
        %724 = vmatprep.mubr.f32.mxu0 0.0
        %725 = vmatmul.mubr.f32.gmra.mxu0 %v268
        %v726 = vpop.f32.mrf.mxu0
        %v727 = vadd.f32 0.0, %v726
        %v728 = vpop.f32.mrf.mxu0
        %729 = vmatprep.mubr.f32.mxu0 0.0
        %730 = vmatmul.mubr.f32.gmra.mxu0 %v269
        %v731 = vpop.f32.mrf.mxu0
        %v732 = vadd.f32 0.0, %v731
        %v733 = vpop.f32.mrf.mxu0
        %734 = vmatprep.mubr.f32.mxu0 0.0
        %735 = vmatmul.mubr.f32.gmra.mxu0 %v270
        %v736 = vpop.f32.mrf.mxu0
        %v737 = vadd.f32 0.0, %v736
        %v738 = vpop.f32.mrf.mxu0
        %739 = vmatprep.mubr.f32.mxu0 0.0
        %740 = vmatmul.mubr.f32.gmra.mxu0 %v271
        %v741 = vpop.f32.mrf.mxu0
        %v742 = vadd.f32 0.0, %v741
        %v743 = vpop.f32.mrf.mxu0
        %744 = vmatprep.mubr.f32.mxu0 0.0
        %745 = vmatmul.mubr.f32.gmra.mxu0 %v272
        %v746 = vpop.f32.mrf.mxu0
        %v747 = vadd.f32 0.0, %v746
        %v748 = vpop.f32.mrf.mxu0
        %749 = vmatprep.mubr.f32.mxu0 0.0
        %750 = vmatmul.mubr.f32.gmra.mxu0 %v273
        %v751 = vpop.f32.mrf.mxu0
        %v752 = vadd.f32 0.0, %v751
        %v753 = vpop.f32.mrf.mxu0
        %754 = vmatprep.mubr.f32.mxu0 0.0
        %755 = vmatmul.mubr.f32.gmra.mxu0 %v274
        %v756 = vpop.f32.mrf.mxu0
        %v757 = vadd.f32 0.0, %v756
        %v758 = vpop.f32.mrf.mxu0
        %759 = vmatprep.mubr.f32.mxu0 0.0
        %760 = vmatmul.mubr.f32.gmra.mxu0 %v275
        %v761 = vpop.f32.mrf.mxu0
        %v762 = vadd.f32 0.0, %v761
        %v763 = vpop.f32.mrf.mxu0
        %764 = vmatprep.mubr.f32.mxu0 0.0
        %765 = vmatmul.mubr.f32.gmra.mxu0 %v276
        %v766 = vpop.f32.mrf.mxu0
        %v767 = vadd.f32 0.0, %v766
        %v768 = vpop.f32.mrf.mxu0
        %769 = vmatprep.mubr.f32.mxu0 0.0
        %770 = vmatmul.mubr.f32.gmra.mxu0 %v277
        %v771 = vpop.f32.mrf.mxu0
        %v772 = vadd.f32 0.0, %v771
        %v773 = vpop.f32.mrf.mxu0
        %774 = vmatprep.mubr.f32.mxu0 0.0
        %775 = vmatmul.mubr.f32.gmra.mxu0 %v278
        %v776 = vpop.f32.mrf.mxu0
        %v777 = vadd.f32 0.0, %v776
        %v778 = vpop.f32.mrf.mxu0
        %779 = vmatprep.mubr.f32.mxu0 0.0
        %780 = vmatmul.mubr.f32.gmra.mxu0 %v279
        %v781 = vpop.f32.mrf.mxu0
        %v782 = vadd.f32 0.0, %v781
        %v783 = vpop.f32.mrf.mxu0
        %784 = vmatprep.mubr.f32.mxu0 0.0
        %785 = vmatmul.mubr.f32.gmra.mxu0 %v280
        %v786 = vpop.f32.mrf.mxu0
        %v787 = vadd.f32 0.0, %v786
        %v788 = vpop.f32.mrf.mxu0
        %789 = vmatprep.mubr.f32.mxu0 0.0
        %790 = vmatmul.mubr.f32.gmra.mxu0 %v281
        %v791 = vpop.f32.mrf.mxu0
        %v792 = vadd.f32 0.0, %v791
        %v793 = vpop.f32.mrf.mxu0
        %794 = vmatprep.mubr.f32.mxu0 0.0
        %795 = vmatmul.mubr.f32.gmra.mxu0 %v282
        %v796 = vpop.f32.mrf.mxu0
        %v797 = vadd.f32 0.0, %v796
        %v798 = vpop.f32.mrf.mxu0
        %799 = vmatprep.mubr.f32.mxu0 0.0
        %800 = vmatmul.mubr.f32.gmra.mxu0 %v283
        %v801 = vpop.f32.mrf.mxu0
        %v802 = vadd.f32 0.0, %v801
        %v803 = vpop.f32.mrf.mxu0
        %804 = vmatprep.mubr.f32.mxu0 0.0
        %805 = vmatmul.mubr.f32.gmra.mxu0 %v284
        %v806 = vpop.f32.mrf.mxu0
        %v807 = vadd.f32 0.0, %v806
        %v808 = vpop.f32.mrf.mxu0
        %809 = vmatprep.mubr.f32.mxu0 0.0
        %810 = vmatmul.mubr.f32.gmra.mxu0 %v285
        %v811 = vpop.f32.mrf.mxu0
        %v812 = vadd.f32 0.0, %v811
        %v813 = vpop.f32.mrf.mxu0
        %814 = vdwg.mxu0
        %815 = vst [vmem:[%s203 + $0x8] sm:$0xff] %v497
        %816 = vst [vmem:[%s203 + $0x18] sm:$0xff] %v502
        %817 = vst [vmem:[%s203 + $0x28] sm:$0xff] %v507
        %818 = vst [vmem:[%s203 + $0x38] sm:$0xff] %v512
        %819 = vst [vmem:[%s203 + $0x48] sm:$0xff] %v517
        %820 = vst [vmem:[%s203 + $0x58] sm:$0xff] %v522
        %821 = vst [vmem:[%s203 + $0x68] sm:$0xff] %v527
        %822 = vst [vmem:[%s203 + $0x78] sm:$0xff] %v532
        %823 = vst [vmem:[%s203 + $0x88] sm:$0xff] %v537
        %824 = vst [vmem:[%s203 + $0x98] sm:$0xff] %v542
        %825 = vst [vmem:[%s203 + $0xa8] sm:$0xff] %v547
        %826 = vst [vmem:[%s203 + $0xb8] sm:$0xff] %v552
        %827 = vst [vmem:[%s203 + $0xc8] sm:$0xff] %v557
        %828 = vst [vmem:[%s203 + $0xd8] sm:$0xff] %v562
        %829 = vst [vmem:[%s203 + $0xe8] sm:$0xff] %v567
        %830 = vst [vmem:[%s203 + $0xf8] sm:$0xff] %v572
        %831 = vst [vmem:[%s203 + $0x108] sm:$0xff] %v577
        %832 = vst [vmem:[%s203 + $0x118] sm:$0xff] %v582
        %833 = vst [vmem:[%s203 + $0x128] sm:$0xff] %v587
        %834 = vst [vmem:[%s203 + $0x138] sm:$0xff] %v592
        %835 = vst [vmem:[%s203 + $0x148] sm:$0xff] %v597
        %836 = vst [vmem:[%s203 + $0x158] sm:$0xff] %v602
        %837 = vst [vmem:[%s203 + $0x168] sm:$0xff] %v607
        %838 = vst [vmem:[%s203 + $0x178] sm:$0xff] %v612
        %839 = vst [vmem:[%s203 + $0x188] sm:$0xff] %v617
        %840 = vst [vmem:[%s203 + $0x198] sm:$0xff] %v622
        %841 = vst [vmem:[%s203 + $0x1a8] sm:$0xff] %v627
        %842 = vst [vmem:[%s203 + $0x1b8] sm:$0xff] %v632
        %843 = vst [vmem:[%s203 + $0x1c8] sm:$0xff] %v637
        %844 = vst [vmem:[%s203 + $0x1d8] sm:$0xff] %v642
        %845 = vst [vmem:[%s203 + $0x1e8] sm:$0xff] %v647
        %846 = vst [vmem:[%s203 + $0x1f8] sm:$0xff] %v652
        %847 = vst [vmem:[%s203 + $0x208] sm:$0xff] %v657
        %848 = vst [vmem:[%s203 + $0x218] sm:$0xff] %v662
        %849 = vst [vmem:[%s203 + $0x228] sm:$0xff] %v667
        %850 = vst [vmem:[%s203 + $0x238] sm:$0xff] %v672
        %851 = vst [vmem:[%s203 + $0x248] sm:$0xff] %v677
        %852 = vst [vmem:[%s203 + $0x258] sm:$0xff] %v682
        %853 = vst [vmem:[%s203 + $0x268] sm:$0xff] %v687
        %854 = vst [vmem:[%s203 + $0x278] sm:$0xff] %v692
        %855 = vst [vmem:[%s203 + $0x288] sm:$0xff] %v697
        %856 = vst [vmem:[%s203 + $0x298] sm:$0xff] %v702
        %857 = vst [vmem:[%s203 + $0x2a8] sm:$0xff] %v707
        %858 = vst [vmem:[%s203 + $0x2b8] sm:$0xff] %v712
        %859 = vst [vmem:[%s203 + $0x2c8] sm:$0xff] %v717
        %860 = vst [vmem:[%s203 + $0x2d8] sm:$0xff] %v722
        %861 = vst [vmem:[%s203 + $0x2e8] sm:$0xff] %v727
        %862 = vst [vmem:[%s203 + $0x2f8] sm:$0xff] %v732
        %863 = vst [vmem:[%s203 + $0x308] sm:$0xff] %v737
        %864 = vst [vmem:[%s203 + $0x318] sm:$0xff] %v742
        %865 = vst [vmem:[%s203 + $0x328] sm:$0xff] %v747
        %866 = vst [vmem:[%s203 + $0x338] sm:$0xff] %v752
        %867 = vst [vmem:[%s203 + $0x348] sm:$0xff] %v757
        %868 = vst [vmem:[%s203 + $0x358] sm:$0xff] %v762
        %869 = vst [vmem:[%s203 + $0x368] sm:$0xff] %v767
        %870 = vst [vmem:[%s203 + $0x378] sm:$0xff] %v772
        %871 = vst [vmem:[%s203 + $0x388] sm:$0xff] %v777
        %872 = vst [vmem:[%s203 + $0x398] sm:$0xff] %v782
        %873 = vst [vmem:[%s203 + $0x3a8] sm:$0xff] %v787
        %874 = vst [vmem:[%s203 + $0x3b8] sm:$0xff] %v792
        %875 = vst [vmem:[%s203 + $0x3c8] sm:$0xff] %v797
        %876 = vst [vmem:[%s203 + $0x3d8] sm:$0xff] %v802
        %877 = vst [vmem:[%s203 + $0x3e8] sm:$0xff] %v807
        %878 = vst [vmem:[%s203 + $0x3f8] sm:$0xff] %v812
        %s879 = sand.u32 %s114, 1
        %s880 = scalar_lea.sflag [#allocation3], %s879
        %s881 = sand.u32 %s114, 1
        %s882 = smul.addr %s881, 1024
        %s883 = scalar_lea.vmem [#allocation2], %s882
        // Predicated region
        $region33: #{_pyramid_pooling_core.3} parent=31 // pred_check
          %p884 = pneg %p124
        $region34: #{_pyramid_pooling_core.3} parent=31 // pred_check_branch
          %886 = sbr.rel (%p884) target = $region36
        $region35: #{_pyramid_pooling_core.3} parent=31 // pred_region
          %s887 = smul.u32 64, %s22
          %s889 = ssub.s32 16384, 16384
          %890 = vsyncadd %s880, %s889
          %s891 = smul.addr %s887, 2
          %s892 = smul.addr %s21, 256
          %s893 = sadd.s32 %s891, %s892
          %s894 = smul.addr %s893, 128
          %s895 = scalar_lea.hbm %s3, %s894
          %s896 = sshll.u32 %s883, 4
          %s897 = int_to_ptr.vmem [resolvable:$true] %s896
          %902 = dma.vmem_to_hbm [thread:$0]  %s897, 16384, %s895, %s880, 256, 256, 16
        $region36: #{_pyramid_pooling_core.3} parent=31 // pred_fallthru
          _
      $region32: #{_pyramid_pooling_core.3} parent=5 // pred_fallthru
        _
      %p903 = scmp.le.s32.totalorder 2, %s12
      // Predicated region
      $region37: #{_pyramid_pooling_core.3} parent=5 // pred_check
        %p904 = pneg %p903
      $region38: #{_pyramid_pooling_core.3} parent=5 // pred_check_branch
        %906 = sbr.rel (%p904) target = $region40
      $region39: #{_pyramid_pooling_core.3} parent=5 // pred_region
        %s907 = ssub.s32 %s12, 2
        // Predicated region
        $region41: #{_pyramid_pooling_core.3} parent=39 // pred_check
          %p908 = pneg %p130
        $region42: #{_pyramid_pooling_core.3} parent=39 // pred_check_branch
          %910 = sbr.rel (%p908) target = $region44
        $region43: #{_pyramid_pooling_core.3} parent=39 // pred_region
          %s911 = sand.u32 %s115, 1
          %s912 = scalar_lea.sflag [#allocation3], %s911
          %s913 = sand.u32 %s115, 1
          %s914 = smul.addr %s913, 1024
          %s915 = scalar_lea.vmem [#allocation2], %s914
          %916 = dma.done %s912, 16384
        $region44: #{_pyramid_pooling_core.3} parent=39 // pred_fallthru
          _
      $region40: #{_pyramid_pooling_core.3} parent=5 // pred_fallthru
        _
    $region6: #{_pyramid_pooling_core.3} parent=1 // loop_footer
      %s16 = sadd.s32 1, %s12
    $region7: #{_pyramid_pooling_core.3} parent=1 // loop_footer_branch
      %11 = sbr.rel target = $region3
    $region8: #{_pyramid_pooling_core.3} parent=1 // loop_exit
      _
    %917 = vsyncpa [#allocation3], 1
    %s918 = scalar_lea.sflag [#allocation3], 1
    %919 = vsyncpa %s918, 1

</llo_original>
